<compile_context>
chip_gen: v7x
topology: tpu7x:2x2x1
jax: 0.10.0
libtpu: 0.0.40
codegen_flags: <defaults>
</compile_context>

<pallas_src>
import jax
import jax.numpy as jnp
from jax.experimental import pallas as pl
from jax.experimental.pallas import tpu as pltpu


def _round_up(x, m):
    return (x + m - 1) // m * m


def _vmem_limit_bytes():
    cap = 64 * 1024 * 1024
    try:
        info = pltpu.get_tpu_info()
        cap = int(getattr(info, "vmem_capacity_bytes", cap))
    except Exception:
        pass
    # leave headroom under the physical capacity (64 MiB on v7x, 128 MiB v5e/v6e)
    return int(min(cap * 3 // 4, 96 * 1024 * 1024))


_VMEM_LIMIT_BYTES = _vmem_limit_bytes()


def _pick_tm(m):
    """Row-tile: >=2 grid blocks when possible (v7x megacore), capped at 512."""
    tm = _round_up(pl.cdiv(m, 2), 16)
    return int(min(512, max(16, tm)))


# ----------------------------------------------------------------------------
# Pallas kernels
# ----------------------------------------------------------------------------
def _matmul_bias_relu_kernel(p_ref, w_ref, b_ref, o_ref):
    """Fused (im2col-matmul) conv + folded BN + ReLU, one row tile per grid step.

    p_ref: (TM, K)    bf16 im2col patches for this row tile
    w_ref: (K, Cout)  bf16 conv weights with BN scale pre-folded, resident
    b_ref: (1, Cout)  f32  folded BN bias, resident
    o_ref: (TM, Cout) bf16
    """
    acc = jnp.dot(p_ref[...], w_ref[...], preferred_element_type=jnp.float32)
    o_ref[...] = jnp.maximum(acc + b_ref[...], 0.0).astype(o_ref.dtype)


def _maxpool3x3s2_kernel(pln_ref, o_ref):
    """3x3 stride-2 max pool from 4 parity planes, one batch element per step.

    pln_ref: (4, Ho+1, Wo+1, C)  parity planes of this batch element
    o_ref:   (1, Ho, Wo, C)
    """
    ho, wo = o_ref.shape[1], o_ref.shape[2]
    p = pln_ref[...]
    result = None
    for r in range(3):
        for c in range(3):
            pidx = 2 * (r % 2) + (c % 2)
            term = p[pidx, r // 2:r // 2 + ho, c // 2:c // 2 + wo, :]
            result = term if result is None else jnp.maximum(result, term)
    o_ref[0] = result


# ----------------------------------------------------------------------------
# Pallas wrappers
# ----------------------------------------------------------------------------
def _conv_bias_relu_pallas(patches, w2d, bias2d, out_dtype=jnp.bfloat16):
    """patches: (M, K) bf16; w2d: (K, Cout) bf16; bias2d: (1, Cout) f32."""
    m, k = patches.shape
    cout = w2d.shape[1]
    tm = _pick_tm(m)
    return pl.pallas_call(
        _matmul_bias_relu_kernel,
        out_shape=jax.ShapeDtypeStruct((m, cout), out_dtype),
        grid=(pl.cdiv(m, tm),),
        in_specs=[
            pl.BlockSpec((tm, k), lambda i: (i, 0)),      # row tile of patches
            pl.BlockSpec((k, cout), lambda i: (0, 0)),    # weights, resident
            pl.BlockSpec((1, cout), lambda i: (0, 0)),    # bias,    resident
        ],
        out_specs=pl.BlockSpec((tm, cout), lambda i: (i, 0)),
        compiler_params=pltpu.CompilerParams(
            dimension_semantics=("parallel",),
            vmem_limit_bytes=_VMEM_LIMIT_BYTES),
    )(patches, w2d, bias2d)


def _max_pool2d_3x3_s2(x_nhwc):
    n, h, w, c = x_nhwc.shape
    ho = (h - 3) // 2 + 1
    wo = (w - 3) // 2 + 1
    # Crop to the exact receptive field, pad +1 row/col so H/W are even, then
    # split into the 4 (row,col) parity planes.  Every 3x3/s2 window tap then
    # becomes a unit-stride slice of one plane inside the kernel -> no 9x
    # window duplication in HBM.  (Padded entries are never selected.)
    xc = x_nhwc[:, :2 * ho + 1, :2 * wo + 1, :]
    xp = jnp.pad(xc, ((0, 0), (0, 1), (0, 1), (0, 0)))
    planes = (xp.reshape(n, ho + 1, 2, wo + 1, 2, c)
              .transpose(0, 2, 4, 1, 3, 5)
              .reshape(n * 4, ho + 1, wo + 1, c))
    out = pl.pallas_call(
        _maxpool3x3s2_kernel,
        out_shape=jax.ShapeDtypeStruct((n, ho, wo, c), x_nhwc.dtype),
        grid=(n,),
        in_specs=[pl.BlockSpec((4, ho + 1, wo + 1, c),
                               lambda i: (i, 0, 0, 0))],
        out_specs=pl.BlockSpec((1, ho, wo, c), lambda i: (i, 0, 0, 0)),
        compiler_params=pltpu.CompilerParams(
            dimension_semantics=("parallel",),
            vmem_limit_bytes=_VMEM_LIMIT_BYTES),
    )(planes)
    return out


# ----------------------------------------------------------------------------
# Glue: im2col patch extraction (pure data movement, in JAX, bf16)
# ----------------------------------------------------------------------------
def _extract_patches(x_nhwc, kh, kw, stride, pad_h, pad_w):
    x = jnp.pad(x_nhwc, ((0, 0), (pad_h, pad_h), (pad_w, pad_w), (0, 0)))
    n, h, w, c = x.shape
    ho = (h - kh) // stride + 1
    wo = (w - kw) // stride + 1
    taps = []
    for i in range(kh):
        for j in range(kw):
            taps.append(
                x[:, i:i + (ho - 1) * stride + 1:stride,
                  j:j + (wo - 1) * stride + 1:stride, :])
    # (N, Ho, Wo, kh*kw, C) -> (N*Ho*Wo, kh*kw*C)   (tap-major, channel-minor)
    p = jnp.stack(taps, axis=3).reshape(n * ho * wo, kh * kw * c)
    return p, (n, ho, wo)


def _basic_conv2d(x_nhwc, params, stride=1, padding=(0, 0)):
    """Equivalent of BasicConv2d (conv -> BN(eval) -> ReLU) in NHWC, bf16 in/out."""
    w, scale, bias = params["w"], params["scale"], params["bias"]
    cout, cin, kh, kw = w.shape
    if kh == 1 and kw == 1 and stride == 1 and padding == (0, 0):
        n, h, wd, _ = x_nhwc.shape
        patches = x_nhwc.reshape(n * h * wd, cin)      # no tap expansion for 1x1
        ho, wo = h, wd
    else:
        patches, (n, ho, wo) = _extract_patches(
            x_nhwc, kh, kw, stride, padding[0], padding[1])
    # Fold the BN scale into the conv weights (f32), then cast operands to bf16.
    w2d = (jnp.transpose(w, (2, 3, 1, 0)).reshape(kh * kw * cin, cout)
           * scale[None, :]).astype(jnp.bfloat16)
    bias2d = bias.reshape(1, cout).astype(jnp.float32)
    out = _conv_bias_relu_pallas(patches.astype(jnp.bfloat16), w2d, bias2d)
    return out.reshape(n, ho, wo, cout)


def _fused_1x1_pair(x_nhwc, params_a, params_b):
    """Two 1x1 BasicConv2d on the same input fused into one matmul (concat Cout)."""
    ca = params_a["w"].shape[0]
    fused = {
        "w": jnp.concatenate([params_a["w"], params_b["w"]], axis=0),
        "scale": jnp.concatenate([params_a["scale"], params_b["scale"]]),
        "bias": jnp.concatenate([params_a["bias"], params_b["bias"]]),
    }
    out = _basic_conv2d(x_nhwc, fused, stride=1, padding=(0, 0))
    return out[..., :ca], out[..., ca:]


# ----------------------------------------------------------------------------
# Parameter construction (deterministic, mirrors the module's __init__ shapes)
# ----------------------------------------------------------------------------
def _make_basic_conv_params(key, in_ch, out_ch, kh, kw, eps=1e-3):
    k_w, k_g, k_b, k_m, k_v = jax.random.split(key, 5)
    w = 0.05 * jax.random.normal(k_w, (out_ch, in_ch, kh, kw), jnp.float32)
    gamma = 1.0 + 0.1 * jax.random.normal(k_g, (out_ch,), jnp.float32)
    beta = 0.1 * jax.random.normal(k_b, (out_ch,), jnp.float32)
    r_mean = 0.1 * jax.random.normal(k_m, (out_ch,), jnp.float32)
    r_var = 0.5 + jax.random.uniform(k_v, (out_ch,), jnp.float32)
    scale = gamma / jnp.sqrt(r_var + eps)
    bias = beta - r_mean * scale
    return {"w": w, "scale": scale, "bias": bias}


def init_inception_d_params(key, in_channels):
    keys = jax.random.split(key, 6)
    return {
        "branch3x3_1":   _make_basic_conv_params(keys[0], in_channels, 32, 1, 1),
        "branch3x3_2":   _make_basic_conv_params(keys[1], 32, 64, 3, 3),
        "branch7x7x3_1": _make_basic_conv_params(keys[2], in_channels, 32, 1, 1),
        "branch7x7x3_2": _make_basic_conv_params(keys[3], 32, 64, 1, 7),
        "branch7x7x3_3": _make_basic_conv_params(keys[4], 64, 128, 7, 1),
        "branch7x7x3_4": _make_basic_conv_params(keys[5], 128, 192, 3, 3),
    }


# ----------------------------------------------------------------------------
# InceptionD forward
# ----------------------------------------------------------------------------
@jax.jit
def inception_d_forward(x_nchw, params):
    # NCHW (PyTorch) -> NHWC (kernel layout), bf16 activation path.
    x = jnp.transpose(x_nchw, (0, 2, 3, 1)).astype(jnp.bfloat16)

    # The two 1x1 convs share the same input -> fuse into one matmul.
    b3, b7 = _fused_1x1_pair(x, params["branch3x3_1"], params["branch7x7x3_1"])

    # branch 3x3
    b3 = _basic_conv2d(b3, params["branch3x3_2"], stride=2, padding=(0, 0))

    # branch 7x7x3
    b7 = _basic_conv2d(b7, params["branch7x7x3_2"], stride=1, padding=(0, 3))
    b7 = _basic_conv2d(b7, params["branch7x7x3_3"], stride=1, padding=(3, 0))
    b7 = _basic_conv2d(b7, params["branch7x7x3_4"], stride=2, padding=(0, 0))

    # branch pool
    bp = _max_pool2d_3x3_s2(x)

    # concat on channel axis (NHWC last), back to NCHW, f32 at the interface
    out = jnp.concatenate([b3, b7, bp], axis=-1)
    return jnp.transpose(out, (0, 3, 1, 2)).astype(jnp.float32)


# ----------------------------------------------------------------------------
if __name__ == "__main__":
    N, C_IN, H, W = 2, 4, 16, 16
    key = jax.random.PRNGKey(0)
    k_x, k_p = jax.random.split(key)
    x = jax.random.normal(k_x, (N, C_IN, H, W), jnp.float32)
    params = init_inception_d_params(k_p, C_IN)

    out = inception_d_forward(x, params)
    out = jax.block_until_ready(out)

    # expected: (N, 64 + 192 + C_IN, 7, 7)
    assert out.shape == (N, 64 + 192 + C_IN,
                         (H - 3) // 2 + 1, (W - 3) // 2 + 1), out.shape
    assert jnp.all(jnp.isfinite(out))
    print("KERNEL_OK")
</pallas_src>

<mosaic_0001>
module attributes {stable_mosaic.version = 11 : i64} {
  func.func @_maxpool3x3s2_kernel(%arg0: i32, %arg1: memref<4x8x8x4xbf16, #tpu.memory_space<vmem>>, %arg2: memref<1x7x7x4xbf16, #tpu.memory_space<vmem>>) attributes {dimension_semantics = [#tpu.dimension_semantics<parallel>], iteration_bounds = array<i64: 2>, scalar_prefetch = 0 : i64, scratch_operands = 0 : i64, tpu.core_type = #tpu.core_type<tc>, window_params = [{transform_indices = @transform_0, window_bounds = array<i64: 4, 8, 8, 4>}, {transform_indices = @transform_1, window_bounds = array<i64: 1, 7, 7, 4>}]} {
    %c0 = arith.constant 0 : index
    %c0_0 = arith.constant 0 : index
    %c0_1 = arith.constant 0 : index
    %c0_2 = arith.constant 0 : index
    %0 = vector.load %arg1[%c0, %c0_0, %c0_1, %c0_2] : memref<4x8x8x4xbf16, #tpu.memory_space<vmem>>, vector<4x8x8x4xbf16>
    %1 = vector.extract_strided_slice %0 {offsets = [0, 0, 0, 0], sizes = [1, 7, 7, 4], strides = [1, 1, 1, 1]} : vector<4x8x8x4xbf16> to vector<1x7x7x4xbf16>
    %2 = vector.shape_cast %1 : vector<1x7x7x4xbf16> to vector<7x7x4xbf16>
    %3 = vector.extract_strided_slice %0 {offsets = [1, 0, 0, 0], sizes = [1, 7, 7, 4], strides = [1, 1, 1, 1]} : vector<4x8x8x4xbf16> to vector<1x7x7x4xbf16>
    %4 = vector.shape_cast %3 : vector<1x7x7x4xbf16> to vector<7x7x4xbf16>
    %5 = arith.maximumf %2, %4 : vector<7x7x4xbf16>
    %6 = vector.extract_strided_slice %0 {offsets = [0, 0, 1, 0], sizes = [1, 7, 7, 4], strides = [1, 1, 1, 1]} : vector<4x8x8x4xbf16> to vector<1x7x7x4xbf16>
    %7 = vector.shape_cast %6 : vector<1x7x7x4xbf16> to vector<7x7x4xbf16>
    %8 = arith.maximumf %5, %7 : vector<7x7x4xbf16>
    %9 = vector.extract_strided_slice %0 {offsets = [2, 0, 0, 0], sizes = [1, 7, 7, 4], strides = [1, 1, 1, 1]} : vector<4x8x8x4xbf16> to vector<1x7x7x4xbf16>
    %10 = vector.shape_cast %9 : vector<1x7x7x4xbf16> to vector<7x7x4xbf16>
    %11 = arith.maximumf %8, %10 : vector<7x7x4xbf16>
    %12 = vector.extract_strided_slice %0 {offsets = [3, 0, 0, 0], sizes = [1, 7, 7, 4], strides = [1, 1, 1, 1]} : vector<4x8x8x4xbf16> to vector<1x7x7x4xbf16>
    %13 = vector.shape_cast %12 : vector<1x7x7x4xbf16> to vector<7x7x4xbf16>
    %14 = arith.maximumf %11, %13 : vector<7x7x4xbf16>
    %15 = vector.extract_strided_slice %0 {offsets = [2, 0, 1, 0], sizes = [1, 7, 7, 4], strides = [1, 1, 1, 1]} : vector<4x8x8x4xbf16> to vector<1x7x7x4xbf16>
    %16 = vector.shape_cast %15 : vector<1x7x7x4xbf16> to vector<7x7x4xbf16>
    %17 = arith.maximumf %14, %16 : vector<7x7x4xbf16>
    %18 = vector.extract_strided_slice %0 {offsets = [0, 1, 0, 0], sizes = [1, 7, 7, 4], strides = [1, 1, 1, 1]} : vector<4x8x8x4xbf16> to vector<1x7x7x4xbf16>
    %19 = vector.shape_cast %18 : vector<1x7x7x4xbf16> to vector<7x7x4xbf16>
    %20 = arith.maximumf %17, %19 : vector<7x7x4xbf16>
    %21 = vector.extract_strided_slice %0 {offsets = [1, 1, 0, 0], sizes = [1, 7, 7, 4], strides = [1, 1, 1, 1]} : vector<4x8x8x4xbf16> to vector<1x7x7x4xbf16>
    %22 = vector.shape_cast %21 : vector<1x7x7x4xbf16> to vector<7x7x4xbf16>
    %23 = arith.maximumf %20, %22 : vector<7x7x4xbf16>
    %24 = vector.extract_strided_slice %0 {offsets = [0, 1, 1, 0], sizes = [1, 7, 7, 4], strides = [1, 1, 1, 1]} : vector<4x8x8x4xbf16> to vector<1x7x7x4xbf16>
    %25 = vector.shape_cast %24 : vector<1x7x7x4xbf16> to vector<7x7x4xbf16>
    %26 = arith.maximumf %23, %25 : vector<7x7x4xbf16>
    %c0_3 = arith.constant 0 : index
    %c0_4 = arith.constant 0 : index
    %c0_5 = arith.constant 0 : index
    %c0_6 = arith.constant 0 : index
    %27 = vector.load %arg2[%c0_3, %c0_4, %c0_5, %c0_6] : memref<1x7x7x4xbf16, #tpu.memory_space<vmem>>, vector<1x7x7x4xbf16>
    %28 = vector.shape_cast %27 : vector<1x7x7x4xbf16> to vector<7x7x4xbf16>
    %29 = vector.shape_cast %26 : vector<7x7x4xbf16> to vector<1x7x7x4xbf16>
    tpu.vector_store %arg2[%c0_3, %c0_4, %c0_5, %c0_6], %29 {strides = array<i32>} : memref<1x7x7x4xbf16, #tpu.memory_space<vmem>>, vector<1x7x7x4xbf16>,
    return
  }
  func.func @transform_0(%arg0: i32) -> (i32, i32, i32, i32) {
    %c0_i32 = arith.constant 0 : i32
    %c0_i32_0 = arith.constant 0 : i32
    %c0_i32_1 = arith.constant 0 : i32
    %c0_i32_2 = arith.constant 0 : i32
    return %arg0, %c0_i32, %c0_i32_0, %c0_i32_1 : i32, i32, i32, i32
  }
  func.func @transform_1(%arg0: i32) -> (i32, i32, i32, i32) {
    %c0_i32 = arith.constant 0 : i32
    %c0_i32_0 = arith.constant 0 : i32
    %c0_i32_1 = arith.constant 0 : i32
    %c0_i32_2 = arith.constant 0 : i32
    return %arg0, %c0_i32, %c0_i32_0, %c0_i32_1 : i32, i32, i32, i32
  }
}

module attributes {stable_mosaic.version = 11 : i64} {
  func.func @_matmul_bias_relu_kernel(%arg0: i32, %arg1: memref<256x4xbf16, #tpu.memory_space<vmem>>, %arg2: memref<4x64xbf16, #tpu.memory_space<vmem>>, %arg3: memref<1x64xf32, #tpu.memory_space<vmem>>, %arg4: memref<256x64xbf16, #tpu.memory_space<vmem>>) attributes {dimension_semantics = [#tpu.dimension_semantics<parallel>], iteration_bounds = array<i64: 2>, scalar_prefetch = 0 : i64, scratch_operands = 0 : i64, tpu.core_type = #tpu.core_type<tc>, window_params = [{transform_indices = @transform_0, window_bounds = array<i64: 256, 4>}, {pipeline_mode = #tpu.pipeline_mode<synchronous>, transform_indices = @transform_1, window_bounds = array<i64: 4, 64>}, {pipeline_mode = #tpu.pipeline_mode<synchronous>, transform_indices = @transform_2, window_bounds = array<i64: 1, 64>}, {transform_indices = @transform_3, window_bounds = array<i64: 256, 64>}]} {
    %c0 = arith.constant 0 : index
    %c0_0 = arith.constant 0 : index
    %0 = vector.load %arg1[%c0, %c0_0] : memref<256x4xbf16, #tpu.memory_space<vmem>>, vector<256x4xbf16>
    %c0_1 = arith.constant 0 : index
    %c0_2 = arith.constant 0 : index
    %1 = vector.load %arg2[%c0_1, %c0_2] : memref<4x64xbf16, #tpu.memory_space<vmem>>, vector<4x64xbf16>
    %cst = arith.constant dense<0.000000e+00> : vector<256x64xf32>
    %2 = tpu.matmul %0, %1, %cst {dimension_numbers = #tpu.dot_dimension_numbers<[1], [0], [0], [1], [0, 0, 1, 1], [], []>} : vector<256x4xbf16>, vector<4x64xbf16>, vector<256x64xf32> -> vector<256x64xf32>
    %c0_3 = arith.constant 0 : index
    %c0_4 = arith.constant 0 : index
    %3 = vector.load %arg3[%c0_3, %c0_4] : memref<1x64xf32, #tpu.memory_space<vmem>>, vector<1x64xf32>
    %4 = vector.broadcast %3 : vector<1x64xf32> to vector<256x64xf32>
    %5 = arith.addf %2, %4 : vector<256x64xf32>
    %cst_5 = arith.constant 0.000000e+00 : f32
    %6 = vector.broadcast %cst_5 : f32 to vector<256x64xf32>
    %7 = arith.maximumf %5, %6 : vector<256x64xf32>
    %8 = arith.truncf %7 : vector<256x64xf32> to vector<256x64xbf16>
    %c0_6 = arith.constant 0 : index
    %c0_7 = arith.constant 0 : index
    %9 = vector.load %arg4[%c0_6, %c0_7] : memref<256x64xbf16, #tpu.memory_space<vmem>>, vector<256x64xbf16>
    tpu.vector_store %arg4[%c0_6, %c0_7], %8 {strides = array<i32>} : memref<256x64xbf16, #tpu.memory_space<vmem>>, vector<256x64xbf16>,
    return
  }
  func.func @transform_0(%arg0: i32) -> (i32, i32) {
    %c0_i32 = arith.constant 0 : i32
    %c0_i32_0 = arith.constant 0 : i32
    return %arg0, %c0_i32 : i32, i32
  }
  func.func @transform_1(%arg0: i32) -> (i32, i32) {
    %c0_i32 = arith.constant 0 : i32
    %c0_i32_0 = arith.constant 0 : i32
    %c0_i32_1 = arith.constant 0 : i32
    return %c0_i32, %c0_i32_0 : i32, i32
  }
  func.func @transform_2(%arg0: i32) -> (i32, i32) {
    %c0_i32 = arith.constant 0 : i32
    %c0_i32_0 = arith.constant 0 : i32
    %c0_i32_1 = arith.constant 0 : i32
    return %c0_i32, %c0_i32_0 : i32, i32
  }
  func.func @transform_3(%arg0: i32) -> (i32, i32) {
    %c0_i32 = arith.constant 0 : i32
    %c0_i32_0 = arith.constant 0 : i32
    return %arg0, %c0_i32 : i32, i32
  }
}

module attributes {stable_mosaic.version = 11 : i64} {
  func.func @_matmul_bias_relu_kernel(%arg0: i32, %arg1: memref<256x224xbf16, #tpu.memory_space<vmem>>, %arg2: memref<224x64xbf16, #tpu.memory_space<vmem>>, %arg3: memref<1x64xf32, #tpu.memory_space<vmem>>, %arg4: memref<256x64xbf16, #tpu.memory_space<vmem>>) attributes {dimension_semantics = [#tpu.dimension_semantics<parallel>], iteration_bounds = array<i64: 2>, scalar_prefetch = 0 : i64, scratch_operands = 0 : i64, tpu.core_type = #tpu.core_type<tc>, window_params = [{transform_indices = @transform_0, window_bounds = array<i64: 256, 224>}, {pipeline_mode = #tpu.pipeline_mode<synchronous>, transform_indices = @transform_1, window_bounds = array<i64: 224, 64>}, {pipeline_mode = #tpu.pipeline_mode<synchronous>, transform_indices = @transform_2, window_bounds = array<i64: 1, 64>}, {transform_indices = @transform_3, window_bounds = array<i64: 256, 64>}]} {
    %c0 = arith.constant 0 : index
    %c0_0 = arith.constant 0 : index
    %0 = vector.load %arg1[%c0, %c0_0] : memref<256x224xbf16, #tpu.memory_space<vmem>>, vector<256x224xbf16>
    %c0_1 = arith.constant 0 : index
    %c0_2 = arith.constant 0 : index
    %1 = vector.load %arg2[%c0_1, %c0_2] : memref<224x64xbf16, #tpu.memory_space<vmem>>, vector<224x64xbf16>
    %cst = arith.constant dense<0.000000e+00> : vector<256x64xf32>
    %2 = tpu.matmul %0, %1, %cst {dimension_numbers = #tpu.dot_dimension_numbers<[1], [0], [0], [1], [0, 0, 1, 1], [], []>} : vector<256x224xbf16>, vector<224x64xbf16>, vector<256x64xf32> -> vector<256x64xf32>
    %c0_3 = arith.constant 0 : index
    %c0_4 = arith.constant 0 : index
    %3 = vector.load %arg3[%c0_3, %c0_4] : memref<1x64xf32, #tpu.memory_space<vmem>>, vector<1x64xf32>
    %4 = vector.broadcast %3 : vector<1x64xf32> to vector<256x64xf32>
    %5 = arith.addf %2, %4 : vector<256x64xf32>
    %cst_5 = arith.constant 0.000000e+00 : f32
    %6 = vector.broadcast %cst_5 : f32 to vector<256x64xf32>
    %7 = arith.maximumf %5, %6 : vector<256x64xf32>
    %8 = arith.truncf %7 : vector<256x64xf32> to vector<256x64xbf16>
    %c0_6 = arith.constant 0 : index
    %c0_7 = arith.constant 0 : index
    %9 = vector.load %arg4[%c0_6, %c0_7] : memref<256x64xbf16, #tpu.memory_space<vmem>>, vector<256x64xbf16>
    tpu.vector_store %arg4[%c0_6, %c0_7], %8 {strides = array<i32>} : memref<256x64xbf16, #tpu.memory_space<vmem>>, vector<256x64xbf16>,
    return
  }
  func.func @transform_0(%arg0: i32) -> (i32, i32) {
    %c0_i32 = arith.constant 0 : i32
    %c0_i32_0 = arith.constant 0 : i32
    return %arg0, %c0_i32 : i32, i32
  }
  func.func @transform_1(%arg0: i32) -> (i32, i32) {
    %c0_i32 = arith.constant 0 : i32
    %c0_i32_0 = arith.constant 0 : i32
    %c0_i32_1 = arith.constant 0 : i32
    return %c0_i32, %c0_i32_0 : i32, i32
  }
  func.func @transform_2(%arg0: i32) -> (i32, i32) {
    %c0_i32 = arith.constant 0 : i32
    %c0_i32_0 = arith.constant 0 : i32
    %c0_i32_1 = arith.constant 0 : i32
    return %c0_i32, %c0_i32_0 : i32, i32
  }
  func.func @transform_3(%arg0: i32) -> (i32, i32) {
    %c0_i32 = arith.constant 0 : i32
    %c0_i32_0 = arith.constant 0 : i32
    return %arg0, %c0_i32 : i32, i32
  }
}

module attributes {stable_mosaic.version = 11 : i64} {
  func.func @_matmul_bias_relu_kernel(%arg0: i32, %arg1: memref<256x448xbf16, #tpu.memory_space<vmem>>, %arg2: memref<448x128xbf16, #tpu.memory_space<vmem>>, %arg3: memref<1x128xf32, #tpu.memory_space<vmem>>, %arg4: memref<256x128xbf16, #tpu.memory_space<vmem>>) attributes {dimension_semantics = [#tpu.dimension_semantics<parallel>], iteration_bounds = array<i64: 2>, scalar_prefetch = 0 : i64, scratch_operands = 0 : i64, tpu.core_type = #tpu.core_type<tc>, window_params = [{transform_indices = @transform_0, window_bounds = array<i64: 256, 448>}, {pipeline_mode = #tpu.pipeline_mode<synchronous>, transform_indices = @transform_1, window_bounds = array<i64: 448, 128>}, {pipeline_mode = #tpu.pipeline_mode<synchronous>, transform_indices = @transform_2, window_bounds = array<i64: 1, 128>}, {transform_indices = @transform_3, window_bounds = array<i64: 256, 128>}]} {
    %c0 = arith.constant 0 : index
    %c0_0 = arith.constant 0 : index
    %0 = vector.load %arg1[%c0, %c0_0] : memref<256x448xbf16, #tpu.memory_space<vmem>>, vector<256x448xbf16>
    %c0_1 = arith.constant 0 : index
    %c0_2 = arith.constant 0 : index
    %1 = vector.load %arg2[%c0_1, %c0_2] : memref<448x128xbf16, #tpu.memory_space<vmem>>, vector<448x128xbf16>
    %cst = arith.constant dense<0.000000e+00> : vector<256x128xf32>
    %2 = tpu.matmul %0, %1, %cst {dimension_numbers = #tpu.dot_dimension_numbers<[1], [0], [0], [1], [0, 0, 1, 1], [], []>} : vector<256x448xbf16>, vector<448x128xbf16>, vector<256x128xf32> -> vector<256x128xf32>
    %c0_3 = arith.constant 0 : index
    %c0_4 = arith.constant 0 : index
    %3 = vector.load %arg3[%c0_3, %c0_4] : memref<1x128xf32, #tpu.memory_space<vmem>>, vector<1x128xf32>
    %4 = vector.broadcast %3 : vector<1x128xf32> to vector<256x128xf32>
    %5 = arith.addf %2, %4 : vector<256x128xf32>
    %cst_5 = arith.constant 0.000000e+00 : f32
    %6 = vector.broadcast %cst_5 : f32 to vector<256x128xf32>
    %7 = arith.maximumf %5, %6 : vector<256x128xf32>
    %8 = arith.truncf %7 : vector<256x128xf32> to vector<256x128xbf16>
    %c0_6 = arith.constant 0 : index
    %c0_7 = arith.constant 0 : index
    %9 = vector.load %arg4[%c0_6, %c0_7] : memref<256x128xbf16, #tpu.memory_space<vmem>>, vector<256x128xbf16>
    tpu.vector_store %arg4[%c0_6, %c0_7], %8 {strides = array<i32>} : memref<256x128xbf16, #tpu.memory_space<vmem>>, vector<256x128xbf16>,
    return
  }
  func.func @transform_0(%arg0: i32) -> (i32, i32) {
    %c0_i32 = arith.constant 0 : i32
    %c0_i32_0 = arith.constant 0 : i32
    return %arg0, %c0_i32 : i32, i32
  }
  func.func @transform_1(%arg0: i32) -> (i32, i32) {
    %c0_i32 = arith.constant 0 : i32
    %c0_i32_0 = arith.constant 0 : i32
    %c0_i32_1 = arith.constant 0 : i32
    return %c0_i32, %c0_i32_0 : i32, i32
  }
  func.func @transform_2(%arg0: i32) -> (i32, i32) {
    %c0_i32 = arith.constant 0 : i32
    %c0_i32_0 = arith.constant 0 : i32
    %c0_i32_1 = arith.constant 0 : i32
    return %c0_i32, %c0_i32_0 : i32, i32
  }
  func.func @transform_3(%arg0: i32) -> (i32, i32) {
    %c0_i32 = arith.constant 0 : i32
    %c0_i32_0 = arith.constant 0 : i32
    return %arg0, %c0_i32 : i32, i32
  }
}

module attributes {stable_mosaic.version = 11 : i64} {
  func.func @_matmul_bias_relu_kernel(%arg0: i32, %arg1: memref<64x1152xbf16, #tpu.memory_space<vmem>>, %arg2: memref<1152x192xbf16, #tpu.memory_space<vmem>>, %arg3: memref<1x192xf32, #tpu.memory_space<vmem>>, %arg4: memref<64x192xbf16, #tpu.memory_space<vmem>>) attributes {dimension_semantics = [#tpu.dimension_semantics<parallel>], iteration_bounds = array<i64: 2>, scalar_prefetch = 0 : i64, scratch_operands = 0 : i64, tpu.core_type = #tpu.core_type<tc>, window_params = [{transform_indices = @transform_0, window_bounds = array<i64: 64, 1152>}, {pipeline_mode = #tpu.pipeline_mode<synchronous>, transform_indices = @transform_1, window_bounds = array<i64: 1152, 192>}, {pipeline_mode = #tpu.pipeline_mode<synchronous>, transform_indices = @transform_2, window_bounds = array<i64: 1, 192>}, {transform_indices = @transform_3, window_bounds = array<i64: 64, 192>}]} {
    %c0 = arith.constant 0 : index
    %c0_0 = arith.constant 0 : index
    %0 = vector.load %arg1[%c0, %c0_0] : memref<64x1152xbf16, #tpu.memory_space<vmem>>, vector<64x1152xbf16>
    %c0_1 = arith.constant 0 : index
    %c0_2 = arith.constant 0 : index
    %1 = vector.load %arg2[%c0_1, %c0_2] : memref<1152x192xbf16, #tpu.memory_space<vmem>>, vector<1152x192xbf16>
    %cst = arith.constant dense<0.000000e+00> : vector<64x192xf32>
    %2 = tpu.matmul %0, %1, %cst {dimension_numbers = #tpu.dot_dimension_numbers<[1], [0], [0], [1], [0, 0, 1, 1], [], []>} : vector<64x1152xbf16>, vector<1152x192xbf16>, vector<64x192xf32> -> vector<64x192xf32>
    %c0_3 = arith.constant 0 : index
    %c0_4 = arith.constant 0 : index
    %3 = vector.load %arg3[%c0_3, %c0_4] : memref<1x192xf32, #tpu.memory_space<vmem>>, vector<1x192xf32>
    %4 = vector.broadcast %3 : vector<1x192xf32> to vector<64x192xf32>
    %5 = arith.addf %2, %4 : vector<64x192xf32>
    %cst_5 = arith.constant 0.000000e+00 : f32
    %6 = vector.broadcast %cst_5 : f32 to vector<64x192xf32>
    %7 = arith.maximumf %5, %6 : vector<64x192xf32>
    %8 = arith.truncf %7 : vector<64x192xf32> to vector<64x192xbf16>
    %c0_6 = arith.constant 0 : index
    %c0_7 = arith.constant 0 : index
    %9 = vector.load %arg4[%c0_6, %c0_7] : memref<64x192xbf16, #tpu.memory_space<vmem>>, vector<64x192xbf16>
    tpu.vector_store %arg4[%c0_6, %c0_7], %8 {strides = array<i32>} : memref<64x192xbf16, #tpu.memory_space<vmem>>, vector<64x192xbf16>,
    return
  }
  func.func @transform_0(%arg0: i32) -> (i32, i32) {
    %c0_i32 = arith.constant 0 : i32
    %c0_i32_0 = arith.constant 0 : i32
    return %arg0, %c0_i32 : i32, i32
  }
  func.func @transform_1(%arg0: i32) -> (i32, i32) {
    %c0_i32 = arith.constant 0 : i32
    %c0_i32_0 = arith.constant 0 : i32
    %c0_i32_1 = arith.constant 0 : i32
    return %c0_i32, %c0_i32_0 : i32, i32
  }
  func.func @transform_2(%arg0: i32) -> (i32, i32) {
    %c0_i32 = arith.constant 0 : i32
    %c0_i32_0 = arith.constant 0 : i32
    %c0_i32_1 = arith.constant 0 : i32
    return %c0_i32, %c0_i32_0 : i32, i32
  }
  func.func @transform_3(%arg0: i32) -> (i32, i32) {
    %c0_i32 = arith.constant 0 : i32
    %c0_i32_0 = arith.constant 0 : i32
    return %arg0, %c0_i32 : i32, i32
  }
}

module attributes {stable_mosaic.version = 11 : i64} {
  func.func @_matmul_bias_relu_kernel(%arg0: i32, %arg1: memref<64x288xbf16, #tpu.memory_space<vmem>>, %arg2: memref<288x64xbf16, #tpu.memory_space<vmem>>, %arg3: memref<1x64xf32, #tpu.memory_space<vmem>>, %arg4: memref<64x64xbf16, #tpu.memory_space<vmem>>) attributes {dimension_semantics = [#tpu.dimension_semantics<parallel>], iteration_bounds = array<i64: 2>, scalar_prefetch = 0 : i64, scratch_operands = 0 : i64, tpu.core_type = #tpu.core_type<tc>, window_params = [{transform_indices = @transform_0, window_bounds = array<i64: 64, 288>}, {pipeline_mode = #tpu.pipeline_mode<synchronous>, transform_indices = @transform_1, window_bounds = array<i64: 288, 64>}, {pipeline_mode = #tpu.pipeline_mode<synchronous>, transform_indices = @transform_2, window_bounds = array<i64: 1, 64>}, {transform_indices = @transform_3, window_bounds = array<i64: 64, 64>}]} {
    %c0 = arith.constant 0 : index
    %c0_0 = arith.constant 0 : index
    %0 = vector.load %arg1[%c0, %c0_0] : memref<64x288xbf16, #tpu.memory_space<vmem>>, vector<64x288xbf16>
    %c0_1 = arith.constant 0 : index
    %c0_2 = arith.constant 0 : index
    %1 = vector.load %arg2[%c0_1, %c0_2] : memref<288x64xbf16, #tpu.memory_space<vmem>>, vector<288x64xbf16>
    %cst = arith.constant dense<0.000000e+00> : vector<64x64xf32>
    %2 = tpu.matmul %0, %1, %cst {dimension_numbers = #tpu.dot_dimension_numbers<[1], [0], [0], [1], [0, 0, 1, 1], [], []>} : vector<64x288xbf16>, vector<288x64xbf16>, vector<64x64xf32> -> vector<64x64xf32>
    %c0_3 = arith.constant 0 : index
    %c0_4 = arith.constant 0 : index
    %3 = vector.load %arg3[%c0_3, %c0_4] : memref<1x64xf32, #tpu.memory_space<vmem>>, vector<1x64xf32>
    %4 = vector.broadcast %3 : vector<1x64xf32> to vector<64x64xf32>
    %5 = arith.addf %2, %4 : vector<64x64xf32>
    %cst_5 = arith.constant 0.000000e+00 : f32
    %6 = vector.broadcast %cst_5 : f32 to vector<64x64xf32>
    %7 = arith.maximumf %5, %6 : vector<64x64xf32>
    %8 = arith.truncf %7 : vector<64x64xf32> to vector<64x64xbf16>
    %c0_6 = arith.constant 0 : index
    %c0_7 = arith.constant 0 : index
    %9 = vector.load %arg4[%c0_6, %c0_7] : memref<64x64xbf16, #tpu.memory_space<vmem>>, vector<64x64xbf16>
    tpu.vector_store %arg4[%c0_6, %c0_7], %8 {strides = array<i32>} : memref<64x64xbf16, #tpu.memory_space<vmem>>, vector<64x64xbf16>,
    return
  }
  func.func @transform_0(%arg0: i32) -> (i32, i32) {
    %c0_i32 = arith.constant 0 : i32
    %c0_i32_0 = arith.constant 0 : i32
    return %arg0, %c0_i32 : i32, i32
  }
  func.func @transform_1(%arg0: i32) -> (i32, i32) {
    %c0_i32 = arith.constant 0 : i32
    %c0_i32_0 = arith.constant 0 : i32
    %c0_i32_1 = arith.constant 0 : i32
    return %c0_i32, %c0_i32_0 : i32, i32
  }
  func.func @transform_2(%arg0: i32) -> (i32, i32) {
    %c0_i32 = arith.constant 0 : i32
    %c0_i32_0 = arith.constant 0 : i32
    %c0_i32_1 = arith.constant 0 : i32
    return %c0_i32, %c0_i32_0 : i32, i32
  }
  func.func @transform_3(%arg0: i32) -> (i32, i32) {
    %c0_i32 = arith.constant 0 : i32
    %c0_i32_0 = arith.constant 0 : i32
    return %arg0, %c0_i32 : i32, i32
  }
}

</mosaic_0001>

<llo_original>
// kernel: inception_d_forward.11
$region0: #{inception_d_forward.11}
  #allocation0 [shape = 'u32[]', space=smem, size = 0x4, offset = 0x4, fixed_abs, tag = 'smem constant byte address 0x4 - core index']
  #allocation1 [shape = 'u32[144,128]{1,0:T(1,128)}', space=vmem, size = 0x12000, scoped, tag = 'internal scratch']
  %s0 = inlined_call_operand.vmem [shape: bf16[8,8,8,4], index: 0, kind: input, shape index: {}]
  %s1 = inlined_call_operand.vmem [shape: bf16[2,7,7,4], index: 1, kind: output, shape index: {}]
  %s2 = sld [smem:[#allocation0]]
  $region37: #{inception_d_forward.11} parent=0
    _
  %s4 = ssub.s32 1, %s2
  %s5 = scalar_select 0, %s4, %s2
  loop: start=0, step=1, limit=4
  $region2: #{inception_d_forward.11} parent=0 // loop_pre_header
    _
  $region3: #{inception_d_forward.11} parent=0 // loop_header
    %s7 = sphi 0, %s11
    %p8 = scmp.ge.s32.totalorder %s7, 4
    %s17 = sphi 0, %s19
    %s20 = sphi 0, %s17
    %s21 = sphi 0, %s20
    %s37 = sphi 0, %s21
    %s43 = sphi 0, %s45
    %s46 = sphi 0, %s43
    %s47 = sphi 0, %s46
    %s63 = sphi 0, %s47
  $region4: #{inception_d_forward.11} parent=0 // loop_header_branch
    %10 = sbr.rel (%p8) target = $region8
  $region5: #{inception_d_forward.11} parent=0 // loop_body
    %s12 = ssub.s32 %s7, 1
    %s13 = ssub.s32 %s7, 2
    %s14 = sadd.s32 %s7, 1
    %s15 = ssub.s32 %s7, %s14
    %p16 = scmp.eq.s32.totalorder %s15, 0
    %s18 = sadd.s32 %s17, 1
    %s19 = scalar_select %p16, %s17, %s18
    %p22 = pneg %p16
    %p23 = scmp.eq.s32.totalorder %s7, 1
    %p24 = por %p22, %p23
    %p25 = scmp.ne.s32.totalorder %s17, %s20
    %p26 = scmp.eq.s32.totalorder %s7, 0
    %p27 = por %p25, %p26
    %p28 = scmp.ne.s32.totalorder %s17, %s20
    %p29 = scmp.eq.s32.totalorder %s12, 1
    %p30 = por %p28, %p29
    %p31 = scmp.ne.s32.totalorder %s20, %s21
    %p32 = scmp.eq.s32.totalorder %s12, 0
    %p33 = por %p31, %p32
    %p34 = scmp.ne.s32.totalorder %s20, %s21
    %p35 = scmp.eq.s32.totalorder %s13, 1
    %p36 = por %p34, %p35
    %p38 = scmp.ne.s32.totalorder %s21, %s37
    %p39 = scmp.eq.s32.totalorder %s13, 0
    %p40 = por %p38, %p39
    %s41 = ssub.s32 %s7, %s14
    %p42 = scmp.eq.s32.totalorder %s41, 0
    %s44 = sadd.s32 %s43, 1
    %s45 = scalar_select %p42, %s43, %s44
    %p48 = pneg %p42
    %p49 = scmp.eq.s32.totalorder %s7, 1
    %p50 = por %p48, %p49
    %p51 = scmp.ne.s32.totalorder %s43, %s46
    %p52 = scmp.eq.s32.totalorder %s7, 0
    %p53 = por %p51, %p52
    %p54 = scmp.ne.s32.totalorder %s43, %s46
    %p55 = scmp.eq.s32.totalorder %s12, 1
    %p56 = por %p54, %p55
    %p57 = scmp.ne.s32.totalorder %s46, %s47
    %p58 = scmp.eq.s32.totalorder %s12, 0
    %p59 = por %p57, %p58
    %p60 = scmp.ne.s32.totalorder %s46, %s47
    %p61 = scmp.eq.s32.totalorder %s13, 1
    %p62 = por %p60, %p61
    %p64 = scmp.ne.s32.totalorder %s47, %s63
    %p65 = scmp.eq.s32.totalorder %s13, 0
    %p66 = por %p64, %p65
    %p67 = scmp.le.s32.totalorder 1, %s7
    %p68 = scmp.lt.s32.totalorder %s7, 3
    %p69 = pnand %p67, %p68
    %p70 = pneg %p69
    // Predicated region
    $region9: #{inception_d_forward.11} parent=5 // pred_check
      _
    $region10: #{inception_d_forward.11} parent=5 // pred_check_branch
      %72 = sbr.rel (%p69) target = $region12
    $region11: #{inception_d_forward.11} parent=5 // pred_region
      %s73 = ssub.s32 %s7, 1
    $region12: #{inception_d_forward.11} parent=5 // pred_fallthru
      _
    %p74 = scmp.lt.s32.totalorder %s7, 2
    // Predicated region
    $region13: #{inception_d_forward.11} parent=5 // pred_check
      %p75 = pneg %p74
    $region14: #{inception_d_forward.11} parent=5 // pred_check_branch
      %77 = sbr.rel (%p75) target = $region16
    $region15: #{inception_d_forward.11} parent=5 // pred_region
      // Predicated region
      $region17: #{inception_d_forward.11} parent=15 // pred_check
        %p78 = pneg %p27
      $region18: #{inception_d_forward.11} parent=15 // pred_check_branch
        %80 = sbr.rel (%p78) target = $region20
      $region19: #{inception_d_forward.11} parent=15 // pred_region
        %s81 = smul.u32 4, %s7
        %p82 = scmp.lt.s32.totalorder %s81, 7
        %s83 = scalar_select %p82, %s81, 7
        %s84 = smul.addr %s83, 8
        %s85 = smul.addr %s84, 4
        %s86 = scalar_lea.vmem %s0, %s85
        %s87 = smul.u32 4, %s7
      $region20: #{inception_d_forward.11} parent=15 // pred_fallthru
        _
    $region16: #{inception_d_forward.11} parent=5 // pred_fallthru
      _
    %p88 = scmp.le.s32.totalorder 1, %s7
    %p89 = scmp.lt.s32.totalorder %s7, 3
    %p90 = pnand %p88, %p89
    %p91 = pneg %p90
    // Predicated region
    $region21: #{inception_d_forward.11} parent=5 // pred_check
      _
    $region22: #{inception_d_forward.11} parent=5 // pred_check_branch
      %93 = sbr.rel (%p90) target = $region24
    $region23: #{inception_d_forward.11} parent=5 // pred_region
      %s94 = ssub.s32 %s7, 1
      %s95 = smul.u32 4, %s12
      %p96 = scmp.lt.s32.totalorder %s95, 7
      %s97 = scalar_select %p96, %s95, 7
      %s98 = smul.addr %s97, 8
      %s99 = smul.addr %s98, 4
      %s100 = scalar_lea.vmem %s0, %s99
      %p101 = pneg %p33
      %p102 = pneg %p30
      %p103 = pneg %p59
      %p104 = pneg %p56
      %p105 = scmp.lt.s32.totalorder %s12, 1
      %s106 = scalar_select %p105, %s12, 1
      %s107 = smul.addr %s106, 7
      %s108 = smul.addr %s107, 4
      %s109 = scalar_lea.vmem %s1, %s108
      %s110 = smul.u32 4, %s12
      %p111 = scmp.lt.s32.totalorder %s110, 7
      %s112 = scalar_select %p111, %s110, 7
      %s113 = smul.addr %s112, 8
      %s114 = smul.addr %s113, 4
      %s115 = scalar_lea.vmem %s0, %s114
      %s116 = smul.u32 4, %s12
      %p117 = scmp.lt.s32.totalorder %s12, 1
      %s118 = scalar_select %p117, %s12, 1
      %s119 = smul.addr %s118, 7
      %s120 = smul.addr %s119, 4
      %s121 = scalar_lea.vmem %s1, %s120
      %v122 = vld [vmem:[%s115] sm:$0xf]
      %v123 = vld [vmem:[%s115 + $0x4] sm:$0xf]
      %v124 = vld [vmem:[%s115 + $0x8] sm:$0xf]
      %v125 = vld [vmem:[%s115 + $0xc] sm:$0xf]
      %v126 = vld [vmem:[%s115 + $0x10] sm:$0xf]
      %v127 = vld [vmem:[%s115 + $0x14] sm:$0xf]
      %v128 = vld [vmem:[%s115 + $0x18] sm:$0xf]
      %v129 = vld [vmem:[%s115 + $0x1c] sm:$0xf]
      %v130 = vld [vmem:[%s115 + $0x20] sm:$0xf]
      %v131 = vld [vmem:[%s115 + $0x24] sm:$0xf]
      %v132 = vld [vmem:[%s115 + $0x28] sm:$0xf]
      %v133 = vld [vmem:[%s115 + $0x2c] sm:$0xf]
      %v134 = vld [vmem:[%s115 + $0x30] sm:$0xf]
      %v135 = vld [vmem:[%s115 + $0x34] sm:$0xf]
      %v136 = vld [vmem:[%s115 + $0x38] sm:$0xf]
      %v137 = vld [vmem:[%s115 + $0x3c] sm:$0xf]
      %v138 = vld [vmem:[%s115 + $0x40] sm:$0xf]
      %v139 = vld [vmem:[%s115 + $0x44] sm:$0xf]
      %v140 = vld [vmem:[%s115 + $0x48] sm:$0xf]
      %v141 = vld [vmem:[%s115 + $0x4c] sm:$0xf]
      %v142 = vld [vmem:[%s115 + $0x50] sm:$0xf]
      %v143 = vld [vmem:[%s115 + $0x54] sm:$0xf]
      %v144 = vld [vmem:[%s115 + $0x58] sm:$0xf]
      %v145 = vld [vmem:[%s115 + $0x60] sm:$0xf]
      %v146 = vld [vmem:[%s115 + $0x64] sm:$0xf]
      %v147 = vld [vmem:[%s115 + $0x68] sm:$0xf]
      %v148 = vld [vmem:[%s115 + $0x6c] sm:$0xf]
      %v149 = vld [vmem:[%s115 + $0x70] sm:$0xf]
      %v150 = vld [vmem:[%s115 + $0x74] sm:$0xf]
      %v151 = vld [vmem:[%s115 + $0x78] sm:$0xf]
      %v152 = vmax.bf16 %v122, %v130
      %v153 = vmax.bf16 %v123, %v131
      %v154 = vmax.bf16 %v124, %v132
      %v155 = vmax.bf16 %v125, %v133
      %v156 = vmax.bf16 %v126, %v134
      %v157 = vmax.bf16 %v127, %v135
      %v158 = vmax.bf16 %v128, %v136
      %v160 = vshrl.u32 %v122, 16
      %v162 = vrot.slane %v160, 4
      %v163 = vshll.u32 %v122, 16
      %v165 = vrot.slane %v163, 5
      %v166 = vor.u32 %v162, %v165
      %v167 = vrot.slane %v166, 4
      %v169 = vshrl.u32 %v123, 16
      %v171 = vrot.slane %v169, 4
      %v172 = vshll.u32 %v123, 16
      %v174 = vrot.slane %v172, 5
      %v175 = vor.u32 %v171, %v174
      %v176 = vrot.slane %v175, 4
      %v178 = vshrl.u32 %v124, 16
      %v180 = vrot.slane %v178, 4
      %v181 = vshll.u32 %v124, 16
      %v183 = vrot.slane %v181, 5
      %v184 = vor.u32 %v180, %v183
      %v185 = vrot.slane %v184, 4
      %v187 = vshrl.u32 %v125, 16
      %v189 = vrot.slane %v187, 4
      %v190 = vshll.u32 %v125, 16
      %v192 = vrot.slane %v190, 5
      %v193 = vor.u32 %v189, %v192
      %v194 = vrot.slane %v193, 4
      %v196 = vshrl.u32 %v126, 16
      %v198 = vrot.slane %v196, 4
      %v199 = vshll.u32 %v126, 16
      %v201 = vrot.slane %v199, 5
      %v202 = vor.u32 %v198, %v201
      %v203 = vrot.slane %v202, 4
      %v205 = vshrl.u32 %v127, 16
      %v207 = vrot.slane %v205, 4
      %v208 = vshll.u32 %v127, 16
      %v210 = vrot.slane %v208, 5
      %v211 = vor.u32 %v207, %v210
      %v212 = vrot.slane %v211, 4
      %v214 = vshrl.u32 %v128, 16
      %v216 = vrot.slane %v214, 4
      %v217 = vshll.u32 %v128, 16
      %v219 = vrot.slane %v217, 5
      %v220 = vor.u32 %v216, %v219
      %v221 = vrot.slane %v220, 4
      %v229 = vmax.bf16 %v152, %v167
      %v230 = vmax.bf16 %v153, %v176
      %v231 = vmax.bf16 %v154, %v185
      %v232 = vmax.bf16 %v155, %v194
      %v233 = vmax.bf16 %v156, %v203
      %v234 = vmax.bf16 %v157, %v212
      %v235 = vmax.bf16 %v158, %v221
      %v236 = vmax.bf16 %v229, %v138
      %v237 = vmax.bf16 %v230, %v139
      %v238 = vmax.bf16 %v231, %v140
      %v239 = vmax.bf16 %v232, %v141
      %v240 = vmax.bf16 %v233, %v142
      %v241 = vmax.bf16 %v234, %v143
      %v242 = vmax.bf16 %v235, %v144
      %v243 = vmax.bf16 %v236, %v145
      %v244 = vmax.bf16 %v237, %v146
      %v245 = vmax.bf16 %v238, %v147
      %v246 = vmax.bf16 %v239, %v148
      %v247 = vmax.bf16 %v240, %v149
      %v248 = vmax.bf16 %v241, %v150
      %v249 = vmax.bf16 %v242, %v151
      %v251 = vshrl.u32 %v138, 16
      %v253 = vrot.slane %v251, 4
      %v254 = vshll.u32 %v138, 16
      %v256 = vrot.slane %v254, 5
      %v257 = vor.u32 %v253, %v256
      %v258 = vrot.slane %v257, 4
      %v260 = vshrl.u32 %v139, 16
      %v262 = vrot.slane %v260, 4
      %v263 = vshll.u32 %v139, 16
      %v265 = vrot.slane %v263, 5
      %v266 = vor.u32 %v262, %v265
      %v267 = vrot.slane %v266, 4
      %v269 = vshrl.u32 %v140, 16
      %v271 = vrot.slane %v269, 4
      %v272 = vshll.u32 %v140, 16
      %v274 = vrot.slane %v272, 5
      %v275 = vor.u32 %v271, %v274
      %v276 = vrot.slane %v275, 4
      %v278 = vshrl.u32 %v141, 16
      %v280 = vrot.slane %v278, 4
      %v281 = vshll.u32 %v141, 16
      %v283 = vrot.slane %v281, 5
      %v284 = vor.u32 %v280, %v283
      %v285 = vrot.slane %v284, 4
      %v287 = vshrl.u32 %v142, 16
      %v289 = vrot.slane %v287, 4
      %v290 = vshll.u32 %v142, 16
      %v292 = vrot.slane %v290, 5
      %v293 = vor.u32 %v289, %v292
      %v294 = vrot.slane %v293, 4
      %v296 = vshrl.u32 %v143, 16
      %v298 = vrot.slane %v296, 4
      %v299 = vshll.u32 %v143, 16
      %v301 = vrot.slane %v299, 5
      %v302 = vor.u32 %v298, %v301
      %v303 = vrot.slane %v302, 4
      %v305 = vshrl.u32 %v144, 16
      %v307 = vrot.slane %v305, 4
      %v308 = vshll.u32 %v144, 16
      %v310 = vrot.slane %v308, 5
      %v311 = vor.u32 %v307, %v310
      %v312 = vrot.slane %v311, 4
      %v320 = vmax.bf16 %v243, %v258
      %v321 = vmax.bf16 %v244, %v267
      %v322 = vmax.bf16 %v245, %v276
      %v323 = vmax.bf16 %v246, %v285
      %v324 = vmax.bf16 %v247, %v294
      %v325 = vmax.bf16 %v248, %v303
      %v326 = vmax.bf16 %v249, %v312
      %v327 = vmax.bf16 %v320, %v123
      %v328 = vmax.bf16 %v321, %v124
      %v329 = vmax.bf16 %v322, %v125
      %v330 = vmax.bf16 %v323, %v126
      %v331 = vmax.bf16 %v324, %v127
      %v332 = vmax.bf16 %v325, %v128
      %v333 = vmax.bf16 %v326, %v129
      %v334 = vmax.bf16 %v327, %v131
      %v335 = vmax.bf16 %v328, %v132
      %v336 = vmax.bf16 %v329, %v133
      %v337 = vmax.bf16 %v330, %v134
      %v338 = vmax.bf16 %v331, %v135
      %v339 = vmax.bf16 %v332, %v136
      %v340 = vmax.bf16 %v333, %v137
      %v342 = vshrl.u32 %v129, 16
      %v344 = vrot.slane %v342, 4
      %v345 = vshll.u32 %v129, 16
      %v347 = vrot.slane %v345, 5
      %v348 = vor.u32 %v344, %v347
      %v349 = vrot.slane %v348, 4
      %v351 = vmax.bf16 %v334, %v176
      %v352 = vmax.bf16 %v335, %v185
      %v353 = vmax.bf16 %v336, %v194
      %v354 = vmax.bf16 %v337, %v203
      %v355 = vmax.bf16 %v338, %v212
      %v356 = vmax.bf16 %v339, %v221
      %v357 = vmax.bf16 %v340, %v349
      %vm358 = vcmask 27648
      %vm359 = vsmask.f32 3328
      %vm360 = vmand %vm358, %vm359
      %v361 = vld [vmem:[%s121] sm:$0xf]
      %v362 = vsel %vm360, %v351, %v361
      %363 = vst [vmem:[%s121] sm:$0xf] %v362
      %v364 = vld [vmem:[%s121 + $0x4] sm:$0xf]
      %v365 = vsel %vm360, %v352, %v364
      %366 = vst [vmem:[%s121 + $0x4] sm:$0xf] %v365
      %v367 = vld [vmem:[%s121 + $0x8] sm:$0xf]
      %v368 = vsel %vm360, %v353, %v367
      %369 = vst [vmem:[%s121 + $0x8] sm:$0xf] %v368
      %v370 = vld [vmem:[%s121 + $0xc] sm:$0xf]
      %v371 = vsel %vm360, %v354, %v370
      %372 = vst [vmem:[%s121 + $0xc] sm:$0xf] %v371
      %v373 = vld [vmem:[%s121 + $0x10] sm:$0xf]
      %v374 = vsel %vm360, %v355, %v373
      %375 = vst [vmem:[%s121 + $0x10] sm:$0xf] %v374
      %v376 = vld [vmem:[%s121 + $0x14] sm:$0xf]
      %v377 = vsel %vm360, %v356, %v376
      %378 = vst [vmem:[%s121 + $0x14] sm:$0xf] %v377
      %v379 = vld [vmem:[%s121 + $0x18] sm:$0xf]
      %v380 = vsel %vm360, %v357, %v379
      %381 = vst [vmem:[%s121 + $0x18] sm:$0xf] %v380
      %p382 = scmp.lt.s32.totalorder %s12, 1
      %s383 = scalar_select %p382, %s12, 1
      %s384 = smul.addr %s383, 7
      %s385 = smul.addr %s384, 4
      %s386 = scalar_lea.vmem %s1, %s385
      // Predicated region
      $region25: #{inception_d_forward.11} parent=23 // pred_check
        %p387 = pneg %p56
      $region26: #{inception_d_forward.11} parent=23 // pred_check_branch
        %389 = sbr.rel (%p387) target = $region28
      $region27: #{inception_d_forward.11} parent=23 // pred_region
        _
      $region28: #{inception_d_forward.11} parent=23 // pred_fallthru
        _
    $region24: #{inception_d_forward.11} parent=5 // pred_fallthru
      _
    %p390 = scmp.le.s32.totalorder 2, %s7
    // Predicated region
    $region29: #{inception_d_forward.11} parent=5 // pred_check
      %p391 = pneg %p390
    $region30: #{inception_d_forward.11} parent=5 // pred_check_branch
      %393 = sbr.rel (%p391) target = $region32
    $region31: #{inception_d_forward.11} parent=5 // pred_region
      %s394 = ssub.s32 %s7, 2
      // Predicated region
      $region33: #{inception_d_forward.11} parent=31 // pred_check
        %p395 = pneg %p62
      $region34: #{inception_d_forward.11} parent=31 // pred_check_branch
        %397 = sbr.rel (%p395) target = $region36
      $region35: #{inception_d_forward.11} parent=31 // pred_region
        %p398 = scmp.lt.s32.totalorder %s13, 1
        %s399 = scalar_select %p398, %s13, 1
        %s400 = smul.addr %s399, 7
        %s401 = smul.addr %s400, 4
        %s402 = scalar_lea.vmem %s1, %s401
      $region36: #{inception_d_forward.11} parent=31 // pred_fallthru
        _
    $region32: #{inception_d_forward.11} parent=5 // pred_fallthru
      _
  $region6: #{inception_d_forward.11} parent=0 // loop_footer
    %s11 = sadd.s32 1, %s7
  $region7: #{inception_d_forward.11} parent=0 // loop_footer_branch
    %6 = sbr.rel target = $region3
  $region8: #{inception_d_forward.11} parent=0 // loop_exit
    _

// kernel: inception_d_forward.6
$region0: #{inception_d_forward.6}
  #allocation0 [shape = 'u32[]', space=smem, size = 0x4, offset = 0x4, fixed_abs, tag = 'smem constant byte address 0x4 - core index']
  #allocation1 [shape = 'u32[144,128]{1,0:T(1,128)}', space=vmem, size = 0x12000, scoped, tag = 'internal scratch']
  %s0 = inlined_call_operand.vmem [shape: bf16[512,4], index: 0, kind: input, shape index: {}]
  %s1 = inlined_call_operand.vmem [shape: bf16[4,64], index: 1, kind: input, shape index: {}]
  %s2 = inlined_call_operand.vmem [shape: f32[1,64], index: 2, kind: input, shape index: {}]
  %s3 = inlined_call_operand.vmem [shape: bf16[512,64], index: 3, kind: output, shape index: {}]
  %s4 = sld [smem:[#allocation0]]
  $region45: #{inception_d_forward.6} parent=0
    _
  %s6 = ssub.s32 1, %s4
  %s7 = scalar_select 0, %s6, %s4
  loop: start=0, step=1, limit=4
  $region2: #{inception_d_forward.6} parent=0 // loop_pre_header
    _
  $region3: #{inception_d_forward.6} parent=0 // loop_header
    %s9 = sphi 0, %s13
    %p10 = scmp.ge.s32.totalorder %s9, 4
    %s19 = sphi 0, %s21
    %s22 = sphi 0, %s19
    %s23 = sphi 0, %s22
    %s39 = sphi 0, %s23
    %s43 = sphi 0, %s43
    %s45 = sphi 0, %s43
    %s46 = sphi 0, %s45
    %s60 = sphi 0, %s46
    %s64 = sphi 0, %s64
    %s66 = sphi 0, %s64
    %s67 = sphi 0, %s66
    %s81 = sphi 0, %s67
    %s87 = sphi 0, %s89
    %s90 = sphi 0, %s87
    %s91 = sphi 0, %s90
    %s107 = sphi 0, %s91
  $region4: #{inception_d_forward.6} parent=0 // loop_header_branch
    %12 = sbr.rel (%p10) target = $region8
  $region5: #{inception_d_forward.6} parent=0 // loop_body
    %s14 = ssub.s32 %s9, 1
    %s15 = ssub.s32 %s9, 2
    %s16 = sadd.s32 %s9, 1
    %s17 = ssub.s32 %s9, %s16
    %p18 = scmp.eq.s32.totalorder %s17, 0
    %s20 = sadd.s32 %s19, 1
    %s21 = scalar_select %p18, %s19, %s20
    %p24 = pneg %p18
    %p25 = scmp.eq.s32.totalorder %s9, 1
    %p26 = por %p24, %p25
    %p27 = scmp.ne.s32.totalorder %s19, %s22
    %p28 = scmp.eq.s32.totalorder %s9, 0
    %p29 = por %p27, %p28
    %p30 = scmp.ne.s32.totalorder %s19, %s22
    %p31 = scmp.eq.s32.totalorder %s14, 1
    %p32 = por %p30, %p31
    %p33 = scmp.ne.s32.totalorder %s22, %s23
    %p34 = scmp.eq.s32.totalorder %s14, 0
    %p35 = por %p33, %p34
    %p36 = scmp.ne.s32.totalorder %s22, %s23
    %p37 = scmp.eq.s32.totalorder %s15, 1
    %p38 = por %p36, %p37
    %p40 = scmp.ne.s32.totalorder %s23, %s39
    %p41 = scmp.eq.s32.totalorder %s15, 0
    %p42 = por %p40, %p41
    %s44 = sadd.s32 %s43, 1
    %p47 = scmp.eq.s32.totalorder %s9, 1
    %p48 = scmp.ne.s32.totalorder %s43, %s45
    %p49 = scmp.eq.s32.totalorder %s9, 0
    %p50 = por %p48, %p49
    %p51 = scmp.ne.s32.totalorder %s43, %s45
    %p52 = scmp.eq.s32.totalorder %s14, 1
    %p53 = por %p51, %p52
    %p54 = scmp.ne.s32.totalorder %s45, %s46
    %p55 = scmp.eq.s32.totalorder %s14, 0
    %p56 = por %p54, %p55
    %p57 = scmp.ne.s32.totalorder %s45, %s46
    %p58 = scmp.eq.s32.totalorder %s15, 1
    %p59 = por %p57, %p58
    %p61 = scmp.ne.s32.totalorder %s46, %s60
    %p62 = scmp.eq.s32.totalorder %s15, 0
    %p63 = por %p61, %p62
    %s65 = sadd.s32 %s64, 1
    %p68 = scmp.eq.s32.totalorder %s9, 1
    %p69 = scmp.ne.s32.totalorder %s64, %s66
    %p70 = scmp.eq.s32.totalorder %s9, 0
    %p71 = por %p69, %p70
    %p72 = scmp.ne.s32.totalorder %s64, %s66
    %p73 = scmp.eq.s32.totalorder %s14, 1
    %p74 = por %p72, %p73
    %p75 = scmp.ne.s32.totalorder %s66, %s67
    %p76 = scmp.eq.s32.totalorder %s14, 0
    %p77 = por %p75, %p76
    %p78 = scmp.ne.s32.totalorder %s66, %s67
    %p79 = scmp.eq.s32.totalorder %s15, 1
    %p80 = por %p78, %p79
    %p82 = scmp.ne.s32.totalorder %s67, %s81
    %p83 = scmp.eq.s32.totalorder %s15, 0
    %p84 = por %p82, %p83
    %s85 = ssub.s32 %s9, %s16
    %p86 = scmp.eq.s32.totalorder %s85, 0
    %s88 = sadd.s32 %s87, 1
    %s89 = scalar_select %p86, %s87, %s88
    %p92 = pneg %p86
    %p93 = scmp.eq.s32.totalorder %s9, 1
    %p94 = por %p92, %p93
    %p95 = scmp.ne.s32.totalorder %s87, %s90
    %p96 = scmp.eq.s32.totalorder %s9, 0
    %p97 = por %p95, %p96
    %p98 = scmp.ne.s32.totalorder %s87, %s90
    %p99 = scmp.eq.s32.totalorder %s14, 1
    %p100 = por %p98, %p99
    %p101 = scmp.ne.s32.totalorder %s90, %s91
    %p102 = scmp.eq.s32.totalorder %s14, 0
    %p103 = por %p101, %p102
    %p104 = scmp.ne.s32.totalorder %s90, %s91
    %p105 = scmp.eq.s32.totalorder %s15, 1
    %p106 = por %p104, %p105
    %p108 = scmp.ne.s32.totalorder %s91, %s107
    %p109 = scmp.eq.s32.totalorder %s15, 0
    %p110 = por %p108, %p109
    %p111 = scmp.le.s32.totalorder 1, %s9
    %p112 = scmp.lt.s32.totalorder %s9, 3
    %p113 = pnand %p111, %p112
    %p114 = pneg %p113
    // Predicated region
    $region9: #{inception_d_forward.6} parent=5 // pred_check
      _
    $region10: #{inception_d_forward.6} parent=5 // pred_check_branch
      %116 = sbr.rel (%p113) target = $region12
    $region11: #{inception_d_forward.6} parent=5 // pred_region
      %s117 = ssub.s32 %s9, 1
      // Predicated region
      $region13: #{inception_d_forward.6} parent=11 // pred_check
        %p118 = pneg %p56
      $region14: #{inception_d_forward.6} parent=11 // pred_check_branch
        %120 = sbr.rel (%p118) target = $region16
      $region15: #{inception_d_forward.6} parent=11 // pred_region
        _
      $region16: #{inception_d_forward.6} parent=11 // pred_fallthru
        _
      // Predicated region
      $region17: #{inception_d_forward.6} parent=11 // pred_check
        %p121 = pneg %p77
      $region18: #{inception_d_forward.6} parent=11 // pred_check_branch
        %123 = sbr.rel (%p121) target = $region20
      $region19: #{inception_d_forward.6} parent=11 // pred_region
        _
      $region20: #{inception_d_forward.6} parent=11 // pred_fallthru
        _
    $region12: #{inception_d_forward.6} parent=5 // pred_fallthru
      _
    %p124 = scmp.lt.s32.totalorder %s9, 2
    // Predicated region
    $region21: #{inception_d_forward.6} parent=5 // pred_check
      %p125 = pneg %p124
    $region22: #{inception_d_forward.6} parent=5 // pred_check_branch
      %127 = sbr.rel (%p125) target = $region24
    $region23: #{inception_d_forward.6} parent=5 // pred_region
      // Predicated region
      $region25: #{inception_d_forward.6} parent=23 // pred_check
        %p128 = pneg %p29
      $region26: #{inception_d_forward.6} parent=23 // pred_check_branch
        %130 = sbr.rel (%p128) target = $region28
      $region27: #{inception_d_forward.6} parent=23 // pred_region
        %s131 = smul.u32 32, %s9
        %p132 = scmp.lt.s32.totalorder %s131, 63
        %s133 = scalar_select %p132, %s131, 63
        %s134 = smul.addr %s133, 4
        %s135 = scalar_lea.vmem %s0, %s134
        %s136 = smul.u32 32, %s9
      $region28: #{inception_d_forward.6} parent=23 // pred_fallthru
        _
    $region24: #{inception_d_forward.6} parent=5 // pred_fallthru
      _
    %p137 = scmp.le.s32.totalorder 1, %s9
    %p138 = scmp.lt.s32.totalorder %s9, 3
    %p139 = pnand %p137, %p138
    %p140 = pneg %p139
    // Predicated region
    $region29: #{inception_d_forward.6} parent=5 // pred_check
      _
    $region30: #{inception_d_forward.6} parent=5 // pred_check_branch
      %142 = sbr.rel (%p139) target = $region32
    $region31: #{inception_d_forward.6} parent=5 // pred_region
      %s143 = ssub.s32 %s9, 1
      %s144 = smul.u32 32, %s14
      %p145 = scmp.lt.s32.totalorder %s144, 63
      %s146 = scalar_select %p145, %s144, 63
      %s147 = smul.addr %s146, 4
      %s148 = scalar_lea.vmem %s0, %s147
      %p149 = pneg %p35
      %p150 = pneg %p32
      %p151 = pneg %p56
      %p152 = pneg %p53
      %p153 = pneg %p77
      %p154 = pneg %p74
      %p155 = pneg %p103
      %p156 = pneg %p100
      %s157 = smul.u32 32, %s14
      %p158 = scmp.lt.s32.totalorder %s157, 63
      %s159 = scalar_select %p158, %s157, 63
      %s160 = smul.addr %s159, 4
      %s161 = scalar_lea.vmem %s3, %s160
      %s162 = smul.u32 32, %s14
      %p163 = scmp.lt.s32.totalorder %s162, 63
      %s164 = scalar_select %p163, %s162, 63
      %s165 = smul.addr %s164, 4
      %s166 = scalar_lea.vmem %s0, %s165
      %s167 = smul.u32 32, %s14
      %s168 = smul.u32 32, %s14
      %p169 = scmp.lt.s32.totalorder %s168, 63
      %s170 = scalar_select %p169, %s168, 63
      %s171 = smul.addr %s170, 4
      %s172 = scalar_lea.vmem %s3, %s171
      %s173 = smul.u32 32, %s14
      %v175 = vld [vmem:[%s166] sm:$0xf]
      %v176 = vld [vmem:[%s166 + $0x4] sm:$0xf]
      %v177 = vld [vmem:[%s166 + $0x8] sm:$0xf]
      %v178 = vld [vmem:[%s166 + $0xc] sm:$0xf]
      %v179 = vld [vmem:[%s166 + $0x10] sm:$0xf]
      %v180 = vld [vmem:[%s166 + $0x14] sm:$0xf]
      %v181 = vld [vmem:[%s166 + $0x18] sm:$0xf]
      %v182 = vld [vmem:[%s166 + $0x1c] sm:$0xf]
      %v183 = vld [vmem:[%s166 + $0x20] sm:$0xf]
      %v184 = vld [vmem:[%s166 + $0x24] sm:$0xf]
      %v185 = vld [vmem:[%s166 + $0x28] sm:$0xf]
      %v186 = vld [vmem:[%s166 + $0x2c] sm:$0xf]
      %v187 = vld [vmem:[%s166 + $0x30] sm:$0xf]
      %v188 = vld [vmem:[%s166 + $0x34] sm:$0xf]
      %v189 = vld [vmem:[%s166 + $0x38] sm:$0xf]
      %v190 = vld [vmem:[%s166 + $0x3c] sm:$0xf]
      %v191 = vld [vmem:[%s166 + $0x40] sm:$0xf]
      %v192 = vld [vmem:[%s166 + $0x44] sm:$0xf]
      %v193 = vld [vmem:[%s166 + $0x48] sm:$0xf]
      %v194 = vld [vmem:[%s166 + $0x4c] sm:$0xf]
      %v195 = vld [vmem:[%s166 + $0x50] sm:$0xf]
      %v196 = vld [vmem:[%s166 + $0x54] sm:$0xf]
      %v197 = vld [vmem:[%s166 + $0x58] sm:$0xf]
      %v198 = vld [vmem:[%s166 + $0x5c] sm:$0xf]
      %v199 = vld [vmem:[%s166 + $0x60] sm:$0xf]
      %v200 = vld [vmem:[%s166 + $0x64] sm:$0xf]
      %v201 = vld [vmem:[%s166 + $0x68] sm:$0xf]
      %v202 = vld [vmem:[%s166 + $0x6c] sm:$0xf]
      %v203 = vld [vmem:[%s166 + $0x70] sm:$0xf]
      %v204 = vld [vmem:[%s166 + $0x74] sm:$0xf]
      %v205 = vld [vmem:[%s166 + $0x78] sm:$0xf]
      %v206 = vld [vmem:[%s166 + $0x7c] sm:$0xf]
      %v207 = vld [vmem:[%s1] sm:$0x3]
      %v208 = vld [vmem:[%s2] sm:$0x1]
      %v210 = vlaneseq
      %v211 = vshrl.u32 %v210, 7
      %v212 = vsub.s32 0, %v211
      %v213 = vrot.slane %v208, %v212
      %v247 = vunpack.c.l.b16 %v175
      %v248 = vunpack.c.l.b16 %v176
      %v249 = vunpack.c.l.b16 %v177
      %v250 = vunpack.c.l.b16 %v178
      %v251 = vunpack.c.l.b16 %v179
      %v252 = vunpack.c.l.b16 %v180
      %v253 = vunpack.c.l.b16 %v181
      %v254 = vunpack.c.l.b16 %v182
      %v255 = vunpack.c.l.b16 %v183
      %v256 = vunpack.c.l.b16 %v184
      %v257 = vunpack.c.l.b16 %v185
      %v258 = vunpack.c.l.b16 %v186
      %v259 = vunpack.c.l.b16 %v187
      %v260 = vunpack.c.l.b16 %v188
      %v261 = vunpack.c.l.b16 %v189
      %v262 = vunpack.c.l.b16 %v190
      %v263 = vunpack.c.l.b16 %v191
      %v264 = vunpack.c.l.b16 %v192
      %v265 = vunpack.c.l.b16 %v193
      %v266 = vunpack.c.l.b16 %v194
      %v267 = vunpack.c.l.b16 %v195
      %v268 = vunpack.c.l.b16 %v196
      %v269 = vunpack.c.l.b16 %v197
      %v270 = vunpack.c.l.b16 %v198
      %v271 = vunpack.c.l.b16 %v199
      %v272 = vunpack.c.l.b16 %v200
      %v273 = vunpack.c.l.b16 %v201
      %v274 = vunpack.c.l.b16 %v202
      %v275 = vunpack.c.l.b16 %v203
      %v276 = vunpack.c.l.b16 %v204
      %v277 = vunpack.c.l.b16 %v205
      %v278 = vunpack.c.l.b16 %v206
      %v279 = vpack.c.b16 %v248, %v247
      %v280 = vpack.c.b16 %v250, %v249
      %v281 = vpack.c.b16 %v252, %v251
      %v282 = vpack.c.b16 %v254, %v253
      %v283 = vpack.c.b16 %v256, %v255
      %v284 = vpack.c.b16 %v258, %v257
      %v285 = vpack.c.b16 %v260, %v259
      %v286 = vpack.c.b16 %v262, %v261
      %v287 = vpack.c.b16 %v264, %v263
      %v288 = vpack.c.b16 %v266, %v265
      %v289 = vpack.c.b16 %v268, %v267
      %v290 = vpack.c.b16 %v270, %v269
      %v291 = vpack.c.b16 %v272, %v271
      %v292 = vpack.c.b16 %v274, %v273
      %v293 = vpack.c.b16 %v276, %v275
      %v294 = vpack.c.b16 %v278, %v277
      %vm295 = vcmask 31744
      %v297 = vsel %vm295, %v279, 0
      %v300 = vsel %vm295, %v280, 0
      %v303 = vsel %vm295, %v281, 0
      %v306 = vsel %vm295, %v282, 0
      %v309 = vsel %vm295, %v283, 0
      %v312 = vsel %vm295, %v284, 0
      %v315 = vsel %vm295, %v285, 0
      %v318 = vsel %vm295, %v286, 0
      %v321 = vsel %vm295, %v287, 0
      %v324 = vsel %vm295, %v288, 0
      %v327 = vsel %vm295, %v289, 0
      %v330 = vsel %vm295, %v290, 0
      %v333 = vsel %vm295, %v291, 0
      %v336 = vsel %vm295, %v292, 0
      %v339 = vsel %vm295, %v293, 0
      %v342 = vsel %vm295, %v294, 0
      %vm344 = vcmask 1041408
      %v346 = vsel %vm344, %v207, 0
      %348 = vmatprep.subr.bf16.mxu0 0
      %349 = vmatpush1.bf16.msra.mxu0 %v346
      %350 = vmatprep.subr.bf16.mxu0 0
      %351 = vmatpush1.bf16.msra.mxu0 0
      %352 = vmatprep.subr.bf16.mxu0 0
      %353 = vmatpush1.bf16.msra.mxu0 0
      %354 = vmatprep.subr.bf16.mxu0 0
      %355 = vmatpush1.bf16.msra.mxu0 0
      %356 = vmatprep.subr.bf16.mxu0 0
      %357 = vmatpush1.bf16.msra.mxu0 0
      %358 = vmatprep.subr.bf16.mxu0 0
      %359 = vmatpush1.bf16.msra.mxu0 0
      %360 = vmatprep.subr.bf16.mxu0 0
      %361 = vmatpush1.bf16.msra.mxu0 0
      %362 = vmatprep.subr.bf16.mxu0 0
      %363 = vmatpush1.bf16.msra.mxu0 0
      %364 = vmatprep.subr.bf16.mxu0 0
      %365 = vmatpush1.bf16.msra.mxu0 0
      %366 = vmatprep.subr.bf16.mxu0 0
      %367 = vmatpush1.bf16.msra.mxu0 0
      %368 = vmatprep.subr.bf16.mxu0 0
      %369 = vmatpush1.bf16.msra.mxu0 0
      %370 = vmatprep.subr.bf16.mxu0 0
      %371 = vmatpush1.bf16.msra.mxu0 0
      %372 = vmatprep.subr.bf16.mxu0 0
      %373 = vmatpush1.bf16.msra.mxu0 0
      %374 = vmatprep.subr.bf16.mxu0 0
      %375 = vmatpush1.bf16.msra.mxu0 0
      %376 = vmatprep.subr.bf16.mxu0 0
      %377 = vmatpush1.bf16.msra.mxu0 0
      %378 = vmatprep.subr.bf16.mxu0 0
      %379 = vmatpush1.bf16.msra.mxu0 0
      %380 = vmatprep.mubr.bf16.mxu0 0
      %381 = vmatmul.mubr.bf16.gmra.mrb[0].mxu0 %v297
      %v382 = vpop.f32.mrb[0].mxu0
      %v383 = vadd.f32 %v213, %v382
      %v384 = vpop.f32.mrb[0].mxu0
      %v385 = vpop.f32.mrb[0].mxu0
      %v386 = vadd.f32 %v213, %v385
      %v387 = vpop.f32.mrb[0].mxu0
      %388 = vmatprep.mubr.bf16.mxu0 0
      %389 = vmatmul.mubr.bf16.gmra.mrb[0].mxu0 %v300
      %v390 = vpop.f32.mrb[0].mxu0
      %v391 = vadd.f32 %v213, %v390
      %v392 = vpop.f32.mrb[0].mxu0
      %v393 = vpop.f32.mrb[0].mxu0
      %v394 = vadd.f32 %v213, %v393
      %v395 = vpop.f32.mrb[0].mxu0
      %396 = vmatprep.mubr.bf16.mxu0 0
      %397 = vmatmul.mubr.bf16.gmra.mrb[0].mxu0 %v303
      %v398 = vpop.f32.mrb[0].mxu0
      %v399 = vadd.f32 %v213, %v398
      %v400 = vpop.f32.mrb[0].mxu0
      %v401 = vpop.f32.mrb[0].mxu0
      %v402 = vadd.f32 %v213, %v401
      %v403 = vpop.f32.mrb[0].mxu0
      %404 = vmatprep.mubr.bf16.mxu0 0
      %405 = vmatmul.mubr.bf16.gmra.mrb[0].mxu0 %v306
      %v406 = vpop.f32.mrb[0].mxu0
      %v407 = vadd.f32 %v213, %v406
      %v408 = vpop.f32.mrb[0].mxu0
      %v409 = vpop.f32.mrb[0].mxu0
      %v410 = vadd.f32 %v213, %v409
      %v411 = vpop.f32.mrb[0].mxu0
      %412 = vmatprep.mubr.bf16.mxu0 0
      %413 = vmatmul.mubr.bf16.gmra.mrb[0].mxu0 %v309
      %v414 = vpop.f32.mrb[0].mxu0
      %v415 = vadd.f32 %v213, %v414
      %v416 = vpop.f32.mrb[0].mxu0
      %v417 = vpop.f32.mrb[0].mxu0
      %v418 = vadd.f32 %v213, %v417
      %v419 = vpop.f32.mrb[0].mxu0
      %420 = vmatprep.mubr.bf16.mxu0 0
      %421 = vmatmul.mubr.bf16.gmra.mrb[0].mxu0 %v312
      %v422 = vpop.f32.mrb[0].mxu0
      %v423 = vadd.f32 %v213, %v422
      %v424 = vpop.f32.mrb[0].mxu0
      %v425 = vpop.f32.mrb[0].mxu0
      %v426 = vadd.f32 %v213, %v425
      %v427 = vpop.f32.mrb[0].mxu0
      %428 = vmatprep.mubr.bf16.mxu0 0
      %429 = vmatmul.mubr.bf16.gmra.mrb[0].mxu0 %v315
      %v430 = vpop.f32.mrb[0].mxu0
      %v431 = vadd.f32 %v213, %v430
      %v432 = vpop.f32.mrb[0].mxu0
      %v433 = vpop.f32.mrb[0].mxu0
      %v434 = vadd.f32 %v213, %v433
      %v435 = vpop.f32.mrb[0].mxu0
      %436 = vmatprep.mubr.bf16.mxu0 0
      %437 = vmatmul.mubr.bf16.gmra.mrb[0].mxu0 %v318
      %v438 = vpop.f32.mrb[0].mxu0
      %v439 = vadd.f32 %v213, %v438
      %v440 = vpop.f32.mrb[0].mxu0
      %v441 = vpop.f32.mrb[0].mxu0
      %v442 = vadd.f32 %v213, %v441
      %v443 = vpop.f32.mrb[0].mxu0
      %444 = vmatprep.mubr.bf16.mxu0 0
      %445 = vmatmul.mubr.bf16.gmra.mrb[0].mxu0 %v321
      %v446 = vpop.f32.mrb[0].mxu0
      %v447 = vadd.f32 %v213, %v446
      %v448 = vpop.f32.mrb[0].mxu0
      %v449 = vpop.f32.mrb[0].mxu0
      %v450 = vadd.f32 %v213, %v449
      %v451 = vpop.f32.mrb[0].mxu0
      %452 = vmatprep.mubr.bf16.mxu0 0
      %453 = vmatmul.mubr.bf16.gmra.mrb[0].mxu0 %v324
      %v454 = vpop.f32.mrb[0].mxu0
      %v455 = vadd.f32 %v213, %v454
      %v456 = vpop.f32.mrb[0].mxu0
      %v457 = vpop.f32.mrb[0].mxu0
      %v458 = vadd.f32 %v213, %v457
      %v459 = vpop.f32.mrb[0].mxu0
      %460 = vmatprep.mubr.bf16.mxu0 0
      %461 = vmatmul.mubr.bf16.gmra.mrb[0].mxu0 %v327
      %v462 = vpop.f32.mrb[0].mxu0
      %v463 = vadd.f32 %v213, %v462
      %v464 = vpop.f32.mrb[0].mxu0
      %v465 = vpop.f32.mrb[0].mxu0
      %v466 = vadd.f32 %v213, %v465
      %v467 = vpop.f32.mrb[0].mxu0
      %468 = vmatprep.mubr.bf16.mxu0 0
      %469 = vmatmul.mubr.bf16.gmra.mrb[0].mxu0 %v330
      %v470 = vpop.f32.mrb[0].mxu0
      %v471 = vadd.f32 %v213, %v470
      %v472 = vpop.f32.mrb[0].mxu0
      %v473 = vpop.f32.mrb[0].mxu0
      %v474 = vadd.f32 %v213, %v473
      %v475 = vpop.f32.mrb[0].mxu0
      %476 = vmatprep.mubr.bf16.mxu0 0
      %477 = vmatmul.mubr.bf16.gmra.mrb[0].mxu0 %v333
      %v478 = vpop.f32.mrb[0].mxu0
      %v479 = vadd.f32 %v213, %v478
      %v480 = vpop.f32.mrb[0].mxu0
      %v481 = vpop.f32.mrb[0].mxu0
      %v482 = vadd.f32 %v213, %v481
      %v483 = vpop.f32.mrb[0].mxu0
      %484 = vmatprep.mubr.bf16.mxu0 0
      %485 = vmatmul.mubr.bf16.gmra.mrb[0].mxu0 %v336
      %v486 = vpop.f32.mrb[0].mxu0
      %v487 = vadd.f32 %v213, %v486
      %v488 = vpop.f32.mrb[0].mxu0
      %v489 = vpop.f32.mrb[0].mxu0
      %v490 = vadd.f32 %v213, %v489
      %v491 = vpop.f32.mrb[0].mxu0
      %492 = vmatprep.mubr.bf16.mxu0 0
      %493 = vmatmul.mubr.bf16.gmra.mrb[0].mxu0 %v339
      %v494 = vpop.f32.mrb[0].mxu0
      %v495 = vadd.f32 %v213, %v494
      %v496 = vpop.f32.mrb[0].mxu0
      %v497 = vpop.f32.mrb[0].mxu0
      %v498 = vadd.f32 %v213, %v497
      %v499 = vpop.f32.mrb[0].mxu0
      %500 = vmatprep.mubr.bf16.mxu0 0
      %501 = vmatmul.mubr.bf16.gmra.mrb[0].mxu0 %v342
      %v502 = vpop.f32.mrb[0].mxu0
      %v503 = vadd.f32 %v213, %v502
      %v504 = vpop.f32.mrb[0].mxu0
      %v505 = vpop.f32.mrb[0].mxu0
      %v506 = vadd.f32 %v213, %v505
      %v507 = vpop.f32.mrb[0].mxu0
      %508 = vdwg.mxu0
      %v509 = vmax.f32 %v383, 0.0
      %v510 = vmax.f32 %v386, 0.0
      %v511 = vmax.f32 %v391, 0.0
      %v512 = vmax.f32 %v394, 0.0
      %v513 = vmax.f32 %v399, 0.0
      %v514 = vmax.f32 %v402, 0.0
      %v515 = vmax.f32 %v407, 0.0
      %v516 = vmax.f32 %v410, 0.0
      %v517 = vmax.f32 %v415, 0.0
      %v518 = vmax.f32 %v418, 0.0
      %v519 = vmax.f32 %v423, 0.0
      %v520 = vmax.f32 %v426, 0.0
      %v521 = vmax.f32 %v431, 0.0
      %v522 = vmax.f32 %v434, 0.0
      %v523 = vmax.f32 %v439, 0.0
      %v524 = vmax.f32 %v442, 0.0
      %v525 = vmax.f32 %v447, 0.0
      %v526 = vmax.f32 %v450, 0.0
      %v527 = vmax.f32 %v455, 0.0
      %v528 = vmax.f32 %v458, 0.0
      %v529 = vmax.f32 %v463, 0.0
      %v530 = vmax.f32 %v466, 0.0
      %v531 = vmax.f32 %v471, 0.0
      %v532 = vmax.f32 %v474, 0.0
      %v533 = vmax.f32 %v479, 0.0
      %v534 = vmax.f32 %v482, 0.0
      %v535 = vmax.f32 %v487, 0.0
      %v536 = vmax.f32 %v490, 0.0
      %v537 = vmax.f32 %v495, 0.0
      %v538 = vmax.f32 %v498, 0.0
      %v539 = vmax.f32 %v503, 0.0
      %v540 = vmax.f32 %v506, 0.0
      %v541 = vpack.c.bf16 %v510, %v509
      %v542 = vpack.c.bf16 %v512, %v511
      %v543 = vpack.c.bf16 %v514, %v513
      %v544 = vpack.c.bf16 %v516, %v515
      %v545 = vpack.c.bf16 %v518, %v517
      %v546 = vpack.c.bf16 %v520, %v519
      %v547 = vpack.c.bf16 %v522, %v521
      %v548 = vpack.c.bf16 %v524, %v523
      %v549 = vpack.c.bf16 %v526, %v525
      %v550 = vpack.c.bf16 %v528, %v527
      %v551 = vpack.c.bf16 %v530, %v529
      %v552 = vpack.c.bf16 %v532, %v531
      %v553 = vpack.c.bf16 %v534, %v533
      %v554 = vpack.c.bf16 %v536, %v535
      %v555 = vpack.c.bf16 %v538, %v537
      %v556 = vpack.c.bf16 %v540, %v539
      %v573 = vunpack.c.l.b16 %v541
      %v574 = vunpack.c.h.b16 %v541
      %v575 = vunpack.c.l.b16 %v542
      %v576 = vunpack.c.h.b16 %v542
      %v577 = vunpack.c.l.b16 %v543
      %v578 = vunpack.c.h.b16 %v543
      %v579 = vunpack.c.l.b16 %v544
      %v580 = vunpack.c.h.b16 %v544
      %v581 = vunpack.c.l.b16 %v545
      %v582 = vunpack.c.h.b16 %v545
      %v583 = vunpack.c.l.b16 %v546
      %v584 = vunpack.c.h.b16 %v546
      %v585 = vunpack.c.l.b16 %v547
      %v586 = vunpack.c.h.b16 %v547
      %v587 = vunpack.c.l.b16 %v548
      %v588 = vunpack.c.h.b16 %v548
      %v589 = vunpack.c.l.b16 %v549
      %v590 = vunpack.c.h.b16 %v549
      %v591 = vunpack.c.l.b16 %v550
      %v592 = vunpack.c.h.b16 %v550
      %v593 = vunpack.c.l.b16 %v551
      %v594 = vunpack.c.h.b16 %v551
      %v595 = vunpack.c.l.b16 %v552
      %v596 = vunpack.c.h.b16 %v552
      %v597 = vunpack.c.l.b16 %v553
      %v598 = vunpack.c.h.b16 %v553
      %v599 = vunpack.c.l.b16 %v554
      %v600 = vunpack.c.h.b16 %v554
      %v601 = vunpack.c.l.b16 %v555
      %v602 = vunpack.c.h.b16 %v555
      %v603 = vunpack.c.l.b16 %v556
      %v604 = vunpack.c.h.b16 %v556
      %v605 = vpack.c.b16 %v573, %v573
      %v606 = vpack.c.b16 %v574, %v574
      %v607 = vpack.c.b16 %v575, %v575
      %v608 = vpack.c.b16 %v576, %v576
      %v609 = vpack.c.b16 %v577, %v577
      %v610 = vpack.c.b16 %v578, %v578
      %v611 = vpack.c.b16 %v579, %v579
      %v612 = vpack.c.b16 %v580, %v580
      %v613 = vpack.c.b16 %v581, %v581
      %v614 = vpack.c.b16 %v582, %v582
      %v615 = vpack.c.b16 %v583, %v583
      %v616 = vpack.c.b16 %v584, %v584
      %v617 = vpack.c.b16 %v585, %v585
      %v618 = vpack.c.b16 %v586, %v586
      %v619 = vpack.c.b16 %v587, %v587
      %v620 = vpack.c.b16 %v588, %v588
      %v621 = vpack.c.b16 %v589, %v589
      %v622 = vpack.c.b16 %v590, %v590
      %v623 = vpack.c.b16 %v591, %v591
      %v624 = vpack.c.b16 %v592, %v592
      %v625 = vpack.c.b16 %v593, %v593
      %v626 = vpack.c.b16 %v594, %v594
      %v627 = vpack.c.b16 %v595, %v595
      %v628 = vpack.c.b16 %v596, %v596
      %v629 = vpack.c.b16 %v597, %v597
      %v630 = vpack.c.b16 %v598, %v598
      %v631 = vpack.c.b16 %v599, %v599
      %v632 = vpack.c.b16 %v600, %v600
      %v633 = vpack.c.b16 %v601, %v601
      %v634 = vpack.c.b16 %v602, %v602
      %v635 = vpack.c.b16 %v603, %v603
      %v636 = vpack.c.b16 %v604, %v604
      %vm669 = vcmask 519168
      %670 = vst.msk [vmem:[%s172] sm:$0xf] %vm669, %v605
      %671 = vst.msk [vmem:[%s172 + $0x4] sm:$0xf] %vm669, %v606
      %672 = vst.msk [vmem:[%s172 + $0x8] sm:$0xf] %vm669, %v607
      %673 = vst.msk [vmem:[%s172 + $0xc] sm:$0xf] %vm669, %v608
      %674 = vst.msk [vmem:[%s172 + $0x10] sm:$0xf] %vm669, %v609
      %675 = vst.msk [vmem:[%s172 + $0x14] sm:$0xf] %vm669, %v610
      %676 = vst.msk [vmem:[%s172 + $0x18] sm:$0xf] %vm669, %v611
      %677 = vst.msk [vmem:[%s172 + $0x1c] sm:$0xf] %vm669, %v612
      %678 = vst.msk [vmem:[%s172 + $0x20] sm:$0xf] %vm669, %v613
      %679 = vst.msk [vmem:[%s172 + $0x24] sm:$0xf] %vm669, %v614
      %680 = vst.msk [vmem:[%s172 + $0x28] sm:$0xf] %vm669, %v615
      %681 = vst.msk [vmem:[%s172 + $0x2c] sm:$0xf] %vm669, %v616
      %682 = vst.msk [vmem:[%s172 + $0x30] sm:$0xf] %vm669, %v617
      %683 = vst.msk [vmem:[%s172 + $0x34] sm:$0xf] %vm669, %v618
      %684 = vst.msk [vmem:[%s172 + $0x38] sm:$0xf] %vm669, %v619
      %685 = vst.msk [vmem:[%s172 + $0x3c] sm:$0xf] %vm669, %v620
      %686 = vst.msk [vmem:[%s172 + $0x40] sm:$0xf] %vm669, %v621
      %687 = vst.msk [vmem:[%s172 + $0x44] sm:$0xf] %vm669, %v622
      %688 = vst.msk [vmem:[%s172 + $0x48] sm:$0xf] %vm669, %v623
      %689 = vst.msk [vmem:[%s172 + $0x4c] sm:$0xf] %vm669, %v624
      %690 = vst.msk [vmem:[%s172 + $0x50] sm:$0xf] %vm669, %v625
      %691 = vst.msk [vmem:[%s172 + $0x54] sm:$0xf] %vm669, %v626
      %692 = vst.msk [vmem:[%s172 + $0x58] sm:$0xf] %vm669, %v627
      %693 = vst.msk [vmem:[%s172 + $0x5c] sm:$0xf] %vm669, %v628
      %694 = vst.msk [vmem:[%s172 + $0x60] sm:$0xf] %vm669, %v629
      %695 = vst.msk [vmem:[%s172 + $0x64] sm:$0xf] %vm669, %v630
      %696 = vst.msk [vmem:[%s172 + $0x68] sm:$0xf] %vm669, %v631
      %697 = vst.msk [vmem:[%s172 + $0x6c] sm:$0xf] %vm669, %v632
      %698 = vst.msk [vmem:[%s172 + $0x70] sm:$0xf] %vm669, %v633
      %699 = vst.msk [vmem:[%s172 + $0x74] sm:$0xf] %vm669, %v634
      %700 = vst.msk [vmem:[%s172 + $0x78] sm:$0xf] %vm669, %v635
      %701 = vst.msk [vmem:[%s172 + $0x7c] sm:$0xf] %vm669, %v636
      %s702 = smul.u32 32, %s14
      %p703 = scmp.lt.s32.totalorder %s702, 63
      %s704 = scalar_select %p703, %s702, 63
      %s705 = smul.addr %s704, 4
      %s706 = scalar_lea.vmem %s3, %s705
      // Predicated region
      $region33: #{inception_d_forward.6} parent=31 // pred_check
        %p707 = pneg %p100
      $region34: #{inception_d_forward.6} parent=31 // pred_check_branch
        %709 = sbr.rel (%p707) target = $region36
      $region35: #{inception_d_forward.6} parent=31 // pred_region
        %s710 = smul.u32 32, %s14
      $region36: #{inception_d_forward.6} parent=31 // pred_fallthru
        _
    $region32: #{inception_d_forward.6} parent=5 // pred_fallthru
      _
    %p711 = scmp.le.s32.totalorder 2, %s9
    // Predicated region
    $region37: #{inception_d_forward.6} parent=5 // pred_check
      %p712 = pneg %p711
    $region38: #{inception_d_forward.6} parent=5 // pred_check_branch
      %714 = sbr.rel (%p712) target = $region40
    $region39: #{inception_d_forward.6} parent=5 // pred_region
      %s715 = ssub.s32 %s9, 2
      // Predicated region
      $region41: #{inception_d_forward.6} parent=39 // pred_check
        %p716 = pneg %p106
      $region42: #{inception_d_forward.6} parent=39 // pred_check_branch
        %718 = sbr.rel (%p716) target = $region44
      $region43: #{inception_d_forward.6} parent=39 // pred_region
        %s719 = smul.u32 32, %s15
        %p720 = scmp.lt.s32.totalorder %s719, 63
        %s721 = scalar_select %p720, %s719, 63
        %s722 = smul.addr %s721, 4
        %s723 = scalar_lea.vmem %s3, %s722
      $region44: #{inception_d_forward.6} parent=39 // pred_fallthru
        _
    $region40: #{inception_d_forward.6} parent=5 // pred_fallthru
      _
  $region6: #{inception_d_forward.6} parent=0 // loop_footer
    %s13 = sadd.s32 1, %s9
  $region7: #{inception_d_forward.6} parent=0 // loop_footer_branch
    %8 = sbr.rel target = $region3
  $region8: #{inception_d_forward.6} parent=0 // loop_exit
    _

// kernel: inception_d_forward.8
$region0: #{inception_d_forward.8}
  #allocation0 [shape = 'u32[]', space=smem, size = 0x4, offset = 0x4, fixed_abs, tag = 'smem constant byte address 0x4 - core index']
  #allocation1 [shape = 'u32[144,128]{1,0:T(1,128)}', space=vmem, size = 0x12000, scoped, tag = 'internal scratch']
  %s0 = inlined_call_operand.vmem [shape: bf16[512,224], index: 0, kind: input, shape index: {}]
  %s1 = inlined_call_operand.vmem [shape: bf16[224,64], index: 1, kind: input, shape index: {}]
  %s2 = inlined_call_operand.vmem [shape: f32[1,64], index: 2, kind: input, shape index: {}]
  %s3 = inlined_call_operand.vmem [shape: bf16[512,64], index: 3, kind: output, shape index: {}]
  %s4 = sld [smem:[#allocation0]]
  $region45: #{inception_d_forward.8} parent=0
    _
  %s6 = ssub.s32 1, %s4
  %s7 = scalar_select 0, %s6, %s4
  loop: start=0, step=1, limit=4
  $region2: #{inception_d_forward.8} parent=0 // loop_pre_header
    _
  $region3: #{inception_d_forward.8} parent=0 // loop_header
    %s9 = sphi 0, %s13
    %p10 = scmp.ge.s32.totalorder %s9, 4
    %s19 = sphi 0, %s21
    %s22 = sphi 0, %s19
    %s23 = sphi 0, %s22
    %s39 = sphi 0, %s23
    %s43 = sphi 0, %s43
    %s45 = sphi 0, %s43
    %s46 = sphi 0, %s45
    %s60 = sphi 0, %s46
    %s64 = sphi 0, %s64
    %s66 = sphi 0, %s64
    %s67 = sphi 0, %s66
    %s81 = sphi 0, %s67
    %s87 = sphi 0, %s89
    %s90 = sphi 0, %s87
    %s91 = sphi 0, %s90
    %s107 = sphi 0, %s91
  $region4: #{inception_d_forward.8} parent=0 // loop_header_branch
    %12 = sbr.rel (%p10) target = $region8
  $region5: #{inception_d_forward.8} parent=0 // loop_body
    %s14 = ssub.s32 %s9, 1
    %s15 = ssub.s32 %s9, 2
    %s16 = sadd.s32 %s9, 1
    %s17 = ssub.s32 %s9, %s16
    %p18 = scmp.eq.s32.totalorder %s17, 0
    %s20 = sadd.s32 %s19, 1
    %s21 = scalar_select %p18, %s19, %s20
    %p24 = pneg %p18
    %p25 = scmp.eq.s32.totalorder %s9, 1
    %p26 = por %p24, %p25
    %p27 = scmp.ne.s32.totalorder %s19, %s22
    %p28 = scmp.eq.s32.totalorder %s9, 0
    %p29 = por %p27, %p28
    %p30 = scmp.ne.s32.totalorder %s19, %s22
    %p31 = scmp.eq.s32.totalorder %s14, 1
    %p32 = por %p30, %p31
    %p33 = scmp.ne.s32.totalorder %s22, %s23
    %p34 = scmp.eq.s32.totalorder %s14, 0
    %p35 = por %p33, %p34
    %p36 = scmp.ne.s32.totalorder %s22, %s23
    %p37 = scmp.eq.s32.totalorder %s15, 1
    %p38 = por %p36, %p37
    %p40 = scmp.ne.s32.totalorder %s23, %s39
    %p41 = scmp.eq.s32.totalorder %s15, 0
    %p42 = por %p40, %p41
    %s44 = sadd.s32 %s43, 1
    %p47 = scmp.eq.s32.totalorder %s9, 1
    %p48 = scmp.ne.s32.totalorder %s43, %s45
    %p49 = scmp.eq.s32.totalorder %s9, 0
    %p50 = por %p48, %p49
    %p51 = scmp.ne.s32.totalorder %s43, %s45
    %p52 = scmp.eq.s32.totalorder %s14, 1
    %p53 = por %p51, %p52
    %p54 = scmp.ne.s32.totalorder %s45, %s46
    %p55 = scmp.eq.s32.totalorder %s14, 0
    %p56 = por %p54, %p55
    %p57 = scmp.ne.s32.totalorder %s45, %s46
    %p58 = scmp.eq.s32.totalorder %s15, 1
    %p59 = por %p57, %p58
    %p61 = scmp.ne.s32.totalorder %s46, %s60
    %p62 = scmp.eq.s32.totalorder %s15, 0
    %p63 = por %p61, %p62
    %s65 = sadd.s32 %s64, 1
    %p68 = scmp.eq.s32.totalorder %s9, 1
    %p69 = scmp.ne.s32.totalorder %s64, %s66
    %p70 = scmp.eq.s32.totalorder %s9, 0
    %p71 = por %p69, %p70
    %p72 = scmp.ne.s32.totalorder %s64, %s66
    %p73 = scmp.eq.s32.totalorder %s14, 1
    %p74 = por %p72, %p73
    %p75 = scmp.ne.s32.totalorder %s66, %s67
    %p76 = scmp.eq.s32.totalorder %s14, 0
    %p77 = por %p75, %p76
    %p78 = scmp.ne.s32.totalorder %s66, %s67
    %p79 = scmp.eq.s32.totalorder %s15, 1
    %p80 = por %p78, %p79
    %p82 = scmp.ne.s32.totalorder %s67, %s81
    %p83 = scmp.eq.s32.totalorder %s15, 0
    %p84 = por %p82, %p83
    %s85 = ssub.s32 %s9, %s16
    %p86 = scmp.eq.s32.totalorder %s85, 0
    %s88 = sadd.s32 %s87, 1
    %s89 = scalar_select %p86, %s87, %s88
    %p92 = pneg %p86
    %p93 = scmp.eq.s32.totalorder %s9, 1
    %p94 = por %p92, %p93
    %p95 = scmp.ne.s32.totalorder %s87, %s90
    %p96 = scmp.eq.s32.totalorder %s9, 0
    %p97 = por %p95, %p96
    %p98 = scmp.ne.s32.totalorder %s87, %s90
    %p99 = scmp.eq.s32.totalorder %s14, 1
    %p100 = por %p98, %p99
    %p101 = scmp.ne.s32.totalorder %s90, %s91
    %p102 = scmp.eq.s32.totalorder %s14, 0
    %p103 = por %p101, %p102
    %p104 = scmp.ne.s32.totalorder %s90, %s91
    %p105 = scmp.eq.s32.totalorder %s15, 1
    %p106 = por %p104, %p105
    %p108 = scmp.ne.s32.totalorder %s91, %s107
    %p109 = scmp.eq.s32.totalorder %s15, 0
    %p110 = por %p108, %p109
    %p111 = scmp.le.s32.totalorder 1, %s9
    %p112 = scmp.lt.s32.totalorder %s9, 3
    %p113 = pnand %p111, %p112
    %p114 = pneg %p113
    // Predicated region
    $region9: #{inception_d_forward.8} parent=5 // pred_check
      _
    $region10: #{inception_d_forward.8} parent=5 // pred_check_branch
      %116 = sbr.rel (%p113) target = $region12
    $region11: #{inception_d_forward.8} parent=5 // pred_region
      %s117 = ssub.s32 %s9, 1
      // Predicated region
      $region13: #{inception_d_forward.8} parent=11 // pred_check
        %p118 = pneg %p56
      $region14: #{inception_d_forward.8} parent=11 // pred_check_branch
        %120 = sbr.rel (%p118) target = $region16
      $region15: #{inception_d_forward.8} parent=11 // pred_region
        _
      $region16: #{inception_d_forward.8} parent=11 // pred_fallthru
        _
      // Predicated region
      $region17: #{inception_d_forward.8} parent=11 // pred_check
        %p121 = pneg %p77
      $region18: #{inception_d_forward.8} parent=11 // pred_check_branch
        %123 = sbr.rel (%p121) target = $region20
      $region19: #{inception_d_forward.8} parent=11 // pred_region
        _
      $region20: #{inception_d_forward.8} parent=11 // pred_fallthru
        _
    $region12: #{inception_d_forward.8} parent=5 // pred_fallthru
      _
    %p124 = scmp.lt.s32.totalorder %s9, 2
    // Predicated region
    $region21: #{inception_d_forward.8} parent=5 // pred_check
      %p125 = pneg %p124
    $region22: #{inception_d_forward.8} parent=5 // pred_check_branch
      %127 = sbr.rel (%p125) target = $region24
    $region23: #{inception_d_forward.8} parent=5 // pred_region
      // Predicated region
      $region25: #{inception_d_forward.8} parent=23 // pred_check
        %p128 = pneg %p29
      $region26: #{inception_d_forward.8} parent=23 // pred_check_branch
        %130 = sbr.rel (%p128) target = $region28
      $region27: #{inception_d_forward.8} parent=23 // pred_region
        %s131 = smul.u32 32, %s9
        %p132 = scmp.lt.s32.totalorder %s131, 63
        %s133 = scalar_select %p132, %s131, 63
        %s134 = smul.addr %s133, 2
        %s135 = smul.addr %s134, 4
        %s136 = scalar_lea.vmem %s0, %s135
        %s137 = smul.u32 32, %s9
      $region28: #{inception_d_forward.8} parent=23 // pred_fallthru
        _
    $region24: #{inception_d_forward.8} parent=5 // pred_fallthru
      _
    %p138 = scmp.le.s32.totalorder 1, %s9
    %p139 = scmp.lt.s32.totalorder %s9, 3
    %p140 = pnand %p138, %p139
    %p141 = pneg %p140
    // Predicated region
    $region29: #{inception_d_forward.8} parent=5 // pred_check
      _
    $region30: #{inception_d_forward.8} parent=5 // pred_check_branch
      %143 = sbr.rel (%p140) target = $region32
    $region31: #{inception_d_forward.8} parent=5 // pred_region
      %s144 = ssub.s32 %s9, 1
      %s145 = smul.u32 32, %s14
      %p146 = scmp.lt.s32.totalorder %s145, 63
      %s147 = scalar_select %p146, %s145, 63
      %s148 = smul.addr %s147, 2
      %s149 = smul.addr %s148, 4
      %s150 = scalar_lea.vmem %s0, %s149
      %p151 = pneg %p35
      %p152 = pneg %p32
      %p153 = pneg %p56
      %p154 = pneg %p53
      %p155 = pneg %p77
      %p156 = pneg %p74
      %p157 = pneg %p103
      %p158 = pneg %p100
      %s159 = smul.u32 32, %s14
      %p160 = scmp.lt.s32.totalorder %s159, 63
      %s161 = scalar_select %p160, %s159, 63
      %s162 = smul.addr %s161, 4
      %s163 = scalar_lea.vmem %s3, %s162
      %s164 = smul.u32 32, %s14
      %p165 = scmp.lt.s32.totalorder %s164, 63
      %s166 = scalar_select %p165, %s164, 63
      %s167 = smul.addr %s166, 2
      %s168 = smul.addr %s167, 4
      %s169 = scalar_lea.vmem %s0, %s168
      %s170 = smul.u32 32, %s14
      %s171 = smul.u32 32, %s14
      %p172 = scmp.lt.s32.totalorder %s171, 63
      %s173 = scalar_select %p172, %s171, 63
      %s174 = smul.addr %s173, 4
      %s175 = scalar_lea.vmem %s3, %s174
      %s176 = smul.u32 32, %s14
      %v178 = vld [vmem:[%s169] sm:$0xff]
      %v179 = vld [vmem:[%s169 + $0x8] sm:$0xff]
      %v180 = vld [vmem:[%s169 + $0x10] sm:$0xff]
      %v181 = vld [vmem:[%s169 + $0x18] sm:$0xff]
      %v182 = vld [vmem:[%s169 + $0x20] sm:$0xff]
      %v183 = vld [vmem:[%s169 + $0x28] sm:$0xff]
      %v184 = vld [vmem:[%s169 + $0x30] sm:$0xff]
      %v185 = vld [vmem:[%s169 + $0x38] sm:$0xff]
      %v186 = vld [vmem:[%s169 + $0x40] sm:$0xff]
      %v187 = vld [vmem:[%s169 + $0x48] sm:$0xff]
      %v188 = vld [vmem:[%s169 + $0x50] sm:$0xff]
      %v189 = vld [vmem:[%s169 + $0x58] sm:$0xff]
      %v190 = vld [vmem:[%s169 + $0x60] sm:$0xff]
      %v191 = vld [vmem:[%s169 + $0x68] sm:$0xff]
      %v192 = vld [vmem:[%s169 + $0x70] sm:$0xff]
      %v193 = vld [vmem:[%s169 + $0x78] sm:$0xff]
      %v194 = vld [vmem:[%s169 + $0x80] sm:$0xff]
      %v195 = vld [vmem:[%s169 + $0x88] sm:$0xff]
      %v196 = vld [vmem:[%s169 + $0x90] sm:$0xff]
      %v197 = vld [vmem:[%s169 + $0x98] sm:$0xff]
      %v198 = vld [vmem:[%s169 + $0xa0] sm:$0xff]
      %v199 = vld [vmem:[%s169 + $0xa8] sm:$0xff]
      %v200 = vld [vmem:[%s169 + $0xb0] sm:$0xff]
      %v201 = vld [vmem:[%s169 + $0xb8] sm:$0xff]
      %v202 = vld [vmem:[%s169 + $0xc0] sm:$0xff]
      %v203 = vld [vmem:[%s169 + $0xc8] sm:$0xff]
      %v204 = vld [vmem:[%s169 + $0xd0] sm:$0xff]
      %v205 = vld [vmem:[%s169 + $0xd8] sm:$0xff]
      %v206 = vld [vmem:[%s169 + $0xe0] sm:$0xff]
      %v207 = vld [vmem:[%s169 + $0xe8] sm:$0xff]
      %v208 = vld [vmem:[%s169 + $0xf0] sm:$0xff]
      %v209 = vld [vmem:[%s169 + $0xf8] sm:$0xff]
      %v210 = vld [vmem:[%s1] sm:$0xf]
      %v211 = vld [vmem:[%s1 + $0x4] sm:$0xf]
      %v212 = vld [vmem:[%s1 + $0x8] sm:$0xf]
      %v213 = vld [vmem:[%s1 + $0xc] sm:$0xf]
      %v214 = vld [vmem:[%s1 + $0x10] sm:$0xf]
      %v215 = vld [vmem:[%s1 + $0x14] sm:$0xf]
      %v216 = vld [vmem:[%s1 + $0x18] sm:$0xf]
      %v217 = vld [vmem:[%s1 + $0x1c] sm:$0xf]
      %v218 = vld [vmem:[%s1 + $0x20] sm:$0xf]
      %v219 = vld [vmem:[%s1 + $0x24] sm:$0xf]
      %v220 = vld [vmem:[%s1 + $0x28] sm:$0xf]
      %v221 = vld [vmem:[%s1 + $0x2c] sm:$0xf]
      %v222 = vld [vmem:[%s1 + $0x30] sm:$0xf]
      %v223 = vld [vmem:[%s1 + $0x34] sm:$0xf]
      %v224 = vld [vmem:[%s1 + $0x38] sm:$0xf]
      %v225 = vld [vmem:[%s1 + $0x3c] sm:$0xf]
      %v226 = vld [vmem:[%s1 + $0x40] sm:$0xf]
      %v227 = vld [vmem:[%s1 + $0x44] sm:$0xf]
      %v228 = vld [vmem:[%s1 + $0x48] sm:$0xf]
      %v229 = vld [vmem:[%s1 + $0x4c] sm:$0xf]
      %v230 = vld [vmem:[%s1 + $0x50] sm:$0xf]
      %v231 = vld [vmem:[%s1 + $0x54] sm:$0xf]
      %v232 = vld [vmem:[%s1 + $0x58] sm:$0xf]
      %v233 = vld [vmem:[%s1 + $0x5c] sm:$0xf]
      %v234 = vld [vmem:[%s1 + $0x60] sm:$0xf]
      %v235 = vld [vmem:[%s1 + $0x64] sm:$0xf]
      %v236 = vld [vmem:[%s1 + $0x68] sm:$0xf]
      %v237 = vld [vmem:[%s1 + $0x6c] sm:$0xf]
      %v238 = vld [vmem:[%s2] sm:$0x1]
      %v240 = vlaneseq
      %v241 = vshrl.u32 %v240, 7
      %v242 = vsub.s32 0, %v241
      %v243 = vrot.slane %v238, %v242
      %v277 = vunpack.c.l.b16 %v178
      %v278 = vunpack.c.h.b16 %v178
      %v279 = vunpack.c.l.b16 %v179
      %v280 = vunpack.c.h.b16 %v179
      %v281 = vunpack.c.l.b16 %v180
      %v282 = vunpack.c.h.b16 %v180
      %v283 = vunpack.c.l.b16 %v181
      %v284 = vunpack.c.h.b16 %v181
      %v285 = vunpack.c.l.b16 %v182
      %v286 = vunpack.c.h.b16 %v182
      %v287 = vunpack.c.l.b16 %v183
      %v288 = vunpack.c.h.b16 %v183
      %v289 = vunpack.c.l.b16 %v184
      %v290 = vunpack.c.h.b16 %v184
      %v291 = vunpack.c.l.b16 %v185
      %v292 = vunpack.c.h.b16 %v185
      %v293 = vunpack.c.l.b16 %v186
      %v294 = vunpack.c.h.b16 %v186
      %v295 = vunpack.c.l.b16 %v187
      %v296 = vunpack.c.h.b16 %v187
      %v297 = vunpack.c.l.b16 %v188
      %v298 = vunpack.c.h.b16 %v188
      %v299 = vunpack.c.l.b16 %v189
      %v300 = vunpack.c.h.b16 %v189
      %v301 = vunpack.c.l.b16 %v190
      %v302 = vunpack.c.h.b16 %v190
      %v303 = vunpack.c.l.b16 %v191
      %v304 = vunpack.c.h.b16 %v191
      %v305 = vunpack.c.l.b16 %v192
      %v306 = vunpack.c.h.b16 %v192
      %v307 = vunpack.c.l.b16 %v193
      %v308 = vunpack.c.h.b16 %v193
      %v309 = vunpack.c.l.b16 %v194
      %v310 = vunpack.c.h.b16 %v194
      %v311 = vunpack.c.l.b16 %v195
      %v312 = vunpack.c.h.b16 %v195
      %v313 = vunpack.c.l.b16 %v196
      %v314 = vunpack.c.h.b16 %v196
      %v315 = vunpack.c.l.b16 %v197
      %v316 = vunpack.c.h.b16 %v197
      %v317 = vunpack.c.l.b16 %v198
      %v318 = vunpack.c.h.b16 %v198
      %v319 = vunpack.c.l.b16 %v199
      %v320 = vunpack.c.h.b16 %v199
      %v321 = vunpack.c.l.b16 %v200
      %v322 = vunpack.c.h.b16 %v200
      %v323 = vunpack.c.l.b16 %v201
      %v324 = vunpack.c.h.b16 %v201
      %v325 = vunpack.c.l.b16 %v202
      %v326 = vunpack.c.h.b16 %v202
      %v327 = vunpack.c.l.b16 %v203
      %v328 = vunpack.c.h.b16 %v203
      %v329 = vunpack.c.l.b16 %v204
      %v330 = vunpack.c.h.b16 %v204
      %v331 = vunpack.c.l.b16 %v205
      %v332 = vunpack.c.h.b16 %v205
      %v333 = vunpack.c.l.b16 %v206
      %v334 = vunpack.c.h.b16 %v206
      %v335 = vunpack.c.l.b16 %v207
      %v336 = vunpack.c.h.b16 %v207
      %v337 = vunpack.c.l.b16 %v208
      %v338 = vunpack.c.h.b16 %v208
      %v339 = vunpack.c.l.b16 %v209
      %v340 = vunpack.c.h.b16 %v209
      %v341 = vpack.c.b16 %v279, %v277
      %v342 = vpack.c.b16 %v280, %v278
      %v343 = vpack.c.b16 %v283, %v281
      %v344 = vpack.c.b16 %v284, %v282
      %v345 = vpack.c.b16 %v287, %v285
      %v346 = vpack.c.b16 %v288, %v286
      %v347 = vpack.c.b16 %v291, %v289
      %v348 = vpack.c.b16 %v292, %v290
      %v349 = vpack.c.b16 %v295, %v293
      %v350 = vpack.c.b16 %v296, %v294
      %v351 = vpack.c.b16 %v299, %v297
      %v352 = vpack.c.b16 %v300, %v298
      %v353 = vpack.c.b16 %v303, %v301
      %v354 = vpack.c.b16 %v304, %v302
      %v355 = vpack.c.b16 %v307, %v305
      %v356 = vpack.c.b16 %v308, %v306
      %v357 = vpack.c.b16 %v311, %v309
      %v358 = vpack.c.b16 %v312, %v310
      %v359 = vpack.c.b16 %v315, %v313
      %v360 = vpack.c.b16 %v316, %v314
      %v361 = vpack.c.b16 %v319, %v317
      %v362 = vpack.c.b16 %v320, %v318
      %v363 = vpack.c.b16 %v323, %v321
      %v364 = vpack.c.b16 %v324, %v322
      %v365 = vpack.c.b16 %v327, %v325
      %v366 = vpack.c.b16 %v328, %v326
      %v367 = vpack.c.b16 %v331, %v329
      %v368 = vpack.c.b16 %v332, %v330
      %v369 = vpack.c.b16 %v335, %v333
      %v370 = vpack.c.b16 %v336, %v334
      %v371 = vpack.c.b16 %v339, %v337
      %v372 = vpack.c.b16 %v340, %v338
      %v417 = vunpack.c.l.b16 %v210
      %v418 = vunpack.c.l.b16 %v211
      %v419 = vunpack.c.l.b16 %v212
      %v420 = vunpack.c.l.b16 %v213
      %v421 = vunpack.c.l.b16 %v214
      %v422 = vunpack.c.l.b16 %v215
      %v423 = vunpack.c.l.b16 %v216
      %v424 = vunpack.c.l.b16 %v217
      %v425 = vunpack.c.l.b16 %v218
      %v426 = vunpack.c.l.b16 %v219
      %v427 = vunpack.c.l.b16 %v220
      %v428 = vunpack.c.l.b16 %v221
      %v429 = vunpack.c.l.b16 %v222
      %v430 = vunpack.c.l.b16 %v223
      %v431 = vunpack.c.l.b16 %v224
      %v432 = vunpack.c.l.b16 %v225
      %v433 = vunpack.c.l.b16 %v226
      %v434 = vunpack.c.l.b16 %v227
      %v435 = vunpack.c.l.b16 %v228
      %v436 = vunpack.c.l.b16 %v229
      %v437 = vunpack.c.l.b16 %v230
      %v438 = vunpack.c.l.b16 %v231
      %v439 = vunpack.c.l.b16 %v232
      %v440 = vunpack.c.l.b16 %v233
      %v441 = vunpack.c.l.b16 %v234
      %v442 = vunpack.c.l.b16 %v235
      %v443 = vunpack.c.l.b16 %v236
      %v444 = vunpack.c.l.b16 %v237
      %v445 = vpack.c.b16 %v418, %v417
      %v446 = vpack.c.b16 %v420, %v419
      %v447 = vpack.c.b16 %v422, %v421
      %v448 = vpack.c.b16 %v424, %v423
      %v449 = vpack.c.b16 %v426, %v425
      %v450 = vpack.c.b16 %v428, %v427
      %v451 = vpack.c.b16 %v430, %v429
      %v452 = vpack.c.b16 %v432, %v431
      %v453 = vpack.c.b16 %v434, %v433
      %v454 = vpack.c.b16 %v436, %v435
      %v455 = vpack.c.b16 %v438, %v437
      %v456 = vpack.c.b16 %v440, %v439
      %v457 = vpack.c.b16 %v442, %v441
      %v458 = vpack.c.b16 %v444, %v443
      %vm473 = vcmask 785408
      %v475 = vsel %vm473, %v342, 0
      %v478 = vsel %vm473, %v344, 0
      %v481 = vsel %vm473, %v346, 0
      %v484 = vsel %vm473, %v348, 0
      %v487 = vsel %vm473, %v350, 0
      %v490 = vsel %vm473, %v352, 0
      %v493 = vsel %vm473, %v354, 0
      %v496 = vsel %vm473, %v356, 0
      %v499 = vsel %vm473, %v358, 0
      %v502 = vsel %vm473, %v360, 0
      %v505 = vsel %vm473, %v362, 0
      %v508 = vsel %vm473, %v364, 0
      %v511 = vsel %vm473, %v366, 0
      %v514 = vsel %vm473, %v368, 0
      %v517 = vsel %vm473, %v370, 0
      %v520 = vsel %vm473, %v372, 0
      %522 = vmatprep.subr.bf16.mxu0 0
      %523 = vmatpush1.bf16.msra.mxu0 %v445
      %524 = vmatprep.subr.bf16.mxu0 0
      %525 = vmatpush1.bf16.msra.mxu0 %v446
      %526 = vmatprep.subr.bf16.mxu0 0
      %527 = vmatpush1.bf16.msra.mxu0 %v447
      %528 = vmatprep.subr.bf16.mxu0 0
      %529 = vmatpush1.bf16.msra.mxu0 %v448
      %530 = vmatprep.subr.bf16.mxu0 0
      %531 = vmatpush1.bf16.msra.mxu0 %v449
      %532 = vmatprep.subr.bf16.mxu0 0
      %533 = vmatpush1.bf16.msra.mxu0 %v450
      %534 = vmatprep.subr.bf16.mxu0 0
      %535 = vmatpush1.bf16.msra.mxu0 %v451
      %536 = vmatprep.subr.bf16.mxu0 0
      %537 = vmatpush1.bf16.msra.mxu0 %v452
      %538 = vmatprep.subr.bf16.mxu0 0
      %539 = vmatpush1.bf16.msra.mxu0 %v453
      %540 = vmatprep.subr.bf16.mxu0 0
      %541 = vmatpush1.bf16.msra.mxu0 %v454
      %542 = vmatprep.subr.bf16.mxu0 0
      %543 = vmatpush1.bf16.msra.mxu0 %v455
      %544 = vmatprep.subr.bf16.mxu0 0
      %545 = vmatpush1.bf16.msra.mxu0 %v456
      %546 = vmatprep.subr.bf16.mxu0 0
      %547 = vmatpush1.bf16.msra.mxu0 %v457
      %548 = vmatprep.subr.bf16.mxu0 0
      %549 = vmatpush1.bf16.msra.mxu0 %v458
      %550 = vmatprep.subr.bf16.mxu0 0
      %551 = vmatpush1.bf16.msra.mxu0 0
      %552 = vmatprep.subr.bf16.mxu0 0
      %553 = vmatpush1.bf16.msra.mxu0 0
      %554 = vmatprep.mubr.bf16.mxu0 %v475
      %555 = vmatmul.mubr.bf16.gmra.mrb[0].mxu0 %v341
      %v556 = vpop.f32.mrb[0].mxu0
      %v557 = vadd.f32 %v243, %v556
      %v558 = vpop.f32.mrb[0].mxu0
      %v559 = vpop.f32.mrb[0].mxu0
      %v560 = vadd.f32 %v243, %v559
      %v561 = vpop.f32.mrb[0].mxu0
      %562 = vmatprep.mubr.bf16.mxu0 %v478
      %563 = vmatmul.mubr.bf16.gmra.mrb[0].mxu0 %v343
      %v564 = vpop.f32.mrb[0].mxu0
      %v565 = vadd.f32 %v243, %v564
      %v566 = vpop.f32.mrb[0].mxu0
      %v567 = vpop.f32.mrb[0].mxu0
      %v568 = vadd.f32 %v243, %v567
      %v569 = vpop.f32.mrb[0].mxu0
      %570 = vmatprep.mubr.bf16.mxu0 %v481
      %571 = vmatmul.mubr.bf16.gmra.mrb[0].mxu0 %v345
      %v572 = vpop.f32.mrb[0].mxu0
      %v573 = vadd.f32 %v243, %v572
      %v574 = vpop.f32.mrb[0].mxu0
      %v575 = vpop.f32.mrb[0].mxu0
      %v576 = vadd.f32 %v243, %v575
      %v577 = vpop.f32.mrb[0].mxu0
      %578 = vmatprep.mubr.bf16.mxu0 %v484
      %579 = vmatmul.mubr.bf16.gmra.mrb[0].mxu0 %v347
      %v580 = vpop.f32.mrb[0].mxu0
      %v581 = vadd.f32 %v243, %v580
      %v582 = vpop.f32.mrb[0].mxu0
      %v583 = vpop.f32.mrb[0].mxu0
      %v584 = vadd.f32 %v243, %v583
      %v585 = vpop.f32.mrb[0].mxu0
      %586 = vmatprep.mubr.bf16.mxu0 %v487
      %587 = vmatmul.mubr.bf16.gmra.mrb[0].mxu0 %v349
      %v588 = vpop.f32.mrb[0].mxu0
      %v589 = vadd.f32 %v243, %v588
      %v590 = vpop.f32.mrb[0].mxu0
      %v591 = vpop.f32.mrb[0].mxu0
      %v592 = vadd.f32 %v243, %v591
      %v593 = vpop.f32.mrb[0].mxu0
      %594 = vmatprep.mubr.bf16.mxu0 %v490
      %595 = vmatmul.mubr.bf16.gmra.mrb[0].mxu0 %v351
      %v596 = vpop.f32.mrb[0].mxu0
      %v597 = vadd.f32 %v243, %v596
      %v598 = vpop.f32.mrb[0].mxu0
      %v599 = vpop.f32.mrb[0].mxu0
      %v600 = vadd.f32 %v243, %v599
      %v601 = vpop.f32.mrb[0].mxu0
      %602 = vmatprep.mubr.bf16.mxu0 %v493
      %603 = vmatmul.mubr.bf16.gmra.mrb[0].mxu0 %v353
      %v604 = vpop.f32.mrb[0].mxu0
      %v605 = vadd.f32 %v243, %v604
      %v606 = vpop.f32.mrb[0].mxu0
      %v607 = vpop.f32.mrb[0].mxu0
      %v608 = vadd.f32 %v243, %v607
      %v609 = vpop.f32.mrb[0].mxu0
      %610 = vmatprep.mubr.bf16.mxu0 %v496
      %611 = vmatmul.mubr.bf16.gmra.mrb[0].mxu0 %v355
      %v612 = vpop.f32.mrb[0].mxu0
      %v613 = vadd.f32 %v243, %v612
      %v614 = vpop.f32.mrb[0].mxu0
      %v615 = vpop.f32.mrb[0].mxu0
      %v616 = vadd.f32 %v243, %v615
      %v617 = vpop.f32.mrb[0].mxu0
      %618 = vmatprep.mubr.bf16.mxu0 %v499
      %619 = vmatmul.mubr.bf16.gmra.mrb[0].mxu0 %v357
      %v620 = vpop.f32.mrb[0].mxu0
      %v621 = vadd.f32 %v243, %v620
      %v622 = vpop.f32.mrb[0].mxu0
      %v623 = vpop.f32.mrb[0].mxu0
      %v624 = vadd.f32 %v243, %v623
      %v625 = vpop.f32.mrb[0].mxu0
      %626 = vmatprep.mubr.bf16.mxu0 %v502
      %627 = vmatmul.mubr.bf16.gmra.mrb[0].mxu0 %v359
      %v628 = vpop.f32.mrb[0].mxu0
      %v629 = vadd.f32 %v243, %v628
      %v630 = vpop.f32.mrb[0].mxu0
      %v631 = vpop.f32.mrb[0].mxu0
      %v632 = vadd.f32 %v243, %v631
      %v633 = vpop.f32.mrb[0].mxu0
      %634 = vmatprep.mubr.bf16.mxu0 %v505
      %635 = vmatmul.mubr.bf16.gmra.mrb[0].mxu0 %v361
      %v636 = vpop.f32.mrb[0].mxu0
      %v637 = vadd.f32 %v243, %v636
      %v638 = vpop.f32.mrb[0].mxu0
      %v639 = vpop.f32.mrb[0].mxu0
      %v640 = vadd.f32 %v243, %v639
      %v641 = vpop.f32.mrb[0].mxu0
      %642 = vmatprep.mubr.bf16.mxu0 %v508
      %643 = vmatmul.mubr.bf16.gmra.mrb[0].mxu0 %v363
      %v644 = vpop.f32.mrb[0].mxu0
      %v645 = vadd.f32 %v243, %v644
      %v646 = vpop.f32.mrb[0].mxu0
      %v647 = vpop.f32.mrb[0].mxu0
      %v648 = vadd.f32 %v243, %v647
      %v649 = vpop.f32.mrb[0].mxu0
      %650 = vmatprep.mubr.bf16.mxu0 %v511
      %651 = vmatmul.mubr.bf16.gmra.mrb[0].mxu0 %v365
      %v652 = vpop.f32.mrb[0].mxu0
      %v653 = vadd.f32 %v243, %v652
      %v654 = vpop.f32.mrb[0].mxu0
      %v655 = vpop.f32.mrb[0].mxu0
      %v656 = vadd.f32 %v243, %v655
      %v657 = vpop.f32.mrb[0].mxu0
      %658 = vmatprep.mubr.bf16.mxu0 %v514
      %659 = vmatmul.mubr.bf16.gmra.mrb[0].mxu0 %v367
      %v660 = vpop.f32.mrb[0].mxu0
      %v661 = vadd.f32 %v243, %v660
      %v662 = vpop.f32.mrb[0].mxu0
      %v663 = vpop.f32.mrb[0].mxu0
      %v664 = vadd.f32 %v243, %v663
      %v665 = vpop.f32.mrb[0].mxu0
      %666 = vmatprep.mubr.bf16.mxu0 %v517
      %667 = vmatmul.mubr.bf16.gmra.mrb[0].mxu0 %v369
      %v668 = vpop.f32.mrb[0].mxu0
      %v669 = vadd.f32 %v243, %v668
      %v670 = vpop.f32.mrb[0].mxu0
      %v671 = vpop.f32.mrb[0].mxu0
      %v672 = vadd.f32 %v243, %v671
      %v673 = vpop.f32.mrb[0].mxu0
      %674 = vmatprep.mubr.bf16.mxu0 %v520
      %675 = vmatmul.mubr.bf16.gmra.mrb[0].mxu0 %v371
      %v676 = vpop.f32.mrb[0].mxu0
      %v677 = vadd.f32 %v243, %v676
      %v678 = vpop.f32.mrb[0].mxu0
      %v679 = vpop.f32.mrb[0].mxu0
      %v680 = vadd.f32 %v243, %v679
      %v681 = vpop.f32.mrb[0].mxu0
      %682 = vdwg.mxu0
      %v683 = vmax.f32 %v557, 0.0
      %v684 = vmax.f32 %v560, 0.0
      %v685 = vmax.f32 %v565, 0.0
      %v686 = vmax.f32 %v568, 0.0
      %v687 = vmax.f32 %v573, 0.0
      %v688 = vmax.f32 %v576, 0.0
      %v689 = vmax.f32 %v581, 0.0
      %v690 = vmax.f32 %v584, 0.0
      %v691 = vmax.f32 %v589, 0.0
      %v692 = vmax.f32 %v592, 0.0
      %v693 = vmax.f32 %v597, 0.0
      %v694 = vmax.f32 %v600, 0.0
      %v695 = vmax.f32 %v605, 0.0
      %v696 = vmax.f32 %v608, 0.0
      %v697 = vmax.f32 %v613, 0.0
      %v698 = vmax.f32 %v616, 0.0
      %v699 = vmax.f32 %v621, 0.0
      %v700 = vmax.f32 %v624, 0.0
      %v701 = vmax.f32 %v629, 0.0
      %v702 = vmax.f32 %v632, 0.0
      %v703 = vmax.f32 %v637, 0.0
      %v704 = vmax.f32 %v640, 0.0
      %v705 = vmax.f32 %v645, 0.0
      %v706 = vmax.f32 %v648, 0.0
      %v707 = vmax.f32 %v653, 0.0
      %v708 = vmax.f32 %v656, 0.0
      %v709 = vmax.f32 %v661, 0.0
      %v710 = vmax.f32 %v664, 0.0
      %v711 = vmax.f32 %v669, 0.0
      %v712 = vmax.f32 %v672, 0.0
      %v713 = vmax.f32 %v677, 0.0
      %v714 = vmax.f32 %v680, 0.0
      %v715 = vpack.c.bf16 %v684, %v683
      %v716 = vpack.c.bf16 %v686, %v685
      %v717 = vpack.c.bf16 %v688, %v687
      %v718 = vpack.c.bf16 %v690, %v689
      %v719 = vpack.c.bf16 %v692, %v691
      %v720 = vpack.c.bf16 %v694, %v693
      %v721 = vpack.c.bf16 %v696, %v695
      %v722 = vpack.c.bf16 %v698, %v697
      %v723 = vpack.c.bf16 %v700, %v699
      %v724 = vpack.c.bf16 %v702, %v701
      %v725 = vpack.c.bf16 %v704, %v703
      %v726 = vpack.c.bf16 %v706, %v705
      %v727 = vpack.c.bf16 %v708, %v707
      %v728 = vpack.c.bf16 %v710, %v709
      %v729 = vpack.c.bf16 %v712, %v711
      %v730 = vpack.c.bf16 %v714, %v713
      %v747 = vunpack.c.l.b16 %v715
      %v748 = vunpack.c.h.b16 %v715
      %v749 = vunpack.c.l.b16 %v716
      %v750 = vunpack.c.h.b16 %v716
      %v751 = vunpack.c.l.b16 %v717
      %v752 = vunpack.c.h.b16 %v717
      %v753 = vunpack.c.l.b16 %v718
      %v754 = vunpack.c.h.b16 %v718
      %v755 = vunpack.c.l.b16 %v719
      %v756 = vunpack.c.h.b16 %v719
      %v757 = vunpack.c.l.b16 %v720
      %v758 = vunpack.c.h.b16 %v720
      %v759 = vunpack.c.l.b16 %v721
      %v760 = vunpack.c.h.b16 %v721
      %v761 = vunpack.c.l.b16 %v722
      %v762 = vunpack.c.h.b16 %v722
      %v763 = vunpack.c.l.b16 %v723
      %v764 = vunpack.c.h.b16 %v723
      %v765 = vunpack.c.l.b16 %v724
      %v766 = vunpack.c.h.b16 %v724
      %v767 = vunpack.c.l.b16 %v725
      %v768 = vunpack.c.h.b16 %v725
      %v769 = vunpack.c.l.b16 %v726
      %v770 = vunpack.c.h.b16 %v726
      %v771 = vunpack.c.l.b16 %v727
      %v772 = vunpack.c.h.b16 %v727
      %v773 = vunpack.c.l.b16 %v728
      %v774 = vunpack.c.h.b16 %v728
      %v775 = vunpack.c.l.b16 %v729
      %v776 = vunpack.c.h.b16 %v729
      %v777 = vunpack.c.l.b16 %v730
      %v778 = vunpack.c.h.b16 %v730
      %v779 = vpack.c.b16 %v747, %v747
      %v780 = vpack.c.b16 %v748, %v748
      %v781 = vpack.c.b16 %v749, %v749
      %v782 = vpack.c.b16 %v750, %v750
      %v783 = vpack.c.b16 %v751, %v751
      %v784 = vpack.c.b16 %v752, %v752
      %v785 = vpack.c.b16 %v753, %v753
      %v786 = vpack.c.b16 %v754, %v754
      %v787 = vpack.c.b16 %v755, %v755
      %v788 = vpack.c.b16 %v756, %v756
      %v789 = vpack.c.b16 %v757, %v757
      %v790 = vpack.c.b16 %v758, %v758
      %v791 = vpack.c.b16 %v759, %v759
      %v792 = vpack.c.b16 %v760, %v760
      %v793 = vpack.c.b16 %v761, %v761
      %v794 = vpack.c.b16 %v762, %v762
      %v795 = vpack.c.b16 %v763, %v763
      %v796 = vpack.c.b16 %v764, %v764
      %v797 = vpack.c.b16 %v765, %v765
      %v798 = vpack.c.b16 %v766, %v766
      %v799 = vpack.c.b16 %v767, %v767
      %v800 = vpack.c.b16 %v768, %v768
      %v801 = vpack.c.b16 %v769, %v769
      %v802 = vpack.c.b16 %v770, %v770
      %v803 = vpack.c.b16 %v771, %v771
      %v804 = vpack.c.b16 %v772, %v772
      %v805 = vpack.c.b16 %v773, %v773
      %v806 = vpack.c.b16 %v774, %v774
      %v807 = vpack.c.b16 %v775, %v775
      %v808 = vpack.c.b16 %v776, %v776
      %v809 = vpack.c.b16 %v777, %v777
      %v810 = vpack.c.b16 %v778, %v778
      %vm843 = vcmask 519168
      %844 = vst.msk [vmem:[%s175] sm:$0xf] %vm843, %v779
      %845 = vst.msk [vmem:[%s175 + $0x4] sm:$0xf] %vm843, %v780
      %846 = vst.msk [vmem:[%s175 + $0x8] sm:$0xf] %vm843, %v781
      %847 = vst.msk [vmem:[%s175 + $0xc] sm:$0xf] %vm843, %v782
      %848 = vst.msk [vmem:[%s175 + $0x10] sm:$0xf] %vm843, %v783
      %849 = vst.msk [vmem:[%s175 + $0x14] sm:$0xf] %vm843, %v784
      %850 = vst.msk [vmem:[%s175 + $0x18] sm:$0xf] %vm843, %v785
      %851 = vst.msk [vmem:[%s175 + $0x1c] sm:$0xf] %vm843, %v786
      %852 = vst.msk [vmem:[%s175 + $0x20] sm:$0xf] %vm843, %v787
      %853 = vst.msk [vmem:[%s175 + $0x24] sm:$0xf] %vm843, %v788
      %854 = vst.msk [vmem:[%s175 + $0x28] sm:$0xf] %vm843, %v789
      %855 = vst.msk [vmem:[%s175 + $0x2c] sm:$0xf] %vm843, %v790
      %856 = vst.msk [vmem:[%s175 + $0x30] sm:$0xf] %vm843, %v791
      %857 = vst.msk [vmem:[%s175 + $0x34] sm:$0xf] %vm843, %v792
      %858 = vst.msk [vmem:[%s175 + $0x38] sm:$0xf] %vm843, %v793
      %859 = vst.msk [vmem:[%s175 + $0x3c] sm:$0xf] %vm843, %v794
      %860 = vst.msk [vmem:[%s175 + $0x40] sm:$0xf] %vm843, %v795
      %861 = vst.msk [vmem:[%s175 + $0x44] sm:$0xf] %vm843, %v796
      %862 = vst.msk [vmem:[%s175 + $0x48] sm:$0xf] %vm843, %v797
      %863 = vst.msk [vmem:[%s175 + $0x4c] sm:$0xf] %vm843, %v798
      %864 = vst.msk [vmem:[%s175 + $0x50] sm:$0xf] %vm843, %v799
      %865 = vst.msk [vmem:[%s175 + $0x54] sm:$0xf] %vm843, %v800
      %866 = vst.msk [vmem:[%s175 + $0x58] sm:$0xf] %vm843, %v801
      %867 = vst.msk [vmem:[%s175 + $0x5c] sm:$0xf] %vm843, %v802
      %868 = vst.msk [vmem:[%s175 + $0x60] sm:$0xf] %vm843, %v803
      %869 = vst.msk [vmem:[%s175 + $0x64] sm:$0xf] %vm843, %v804
      %870 = vst.msk [vmem:[%s175 + $0x68] sm:$0xf] %vm843, %v805
      %871 = vst.msk [vmem:[%s175 + $0x6c] sm:$0xf] %vm843, %v806
      %872 = vst.msk [vmem:[%s175 + $0x70] sm:$0xf] %vm843, %v807
      %873 = vst.msk [vmem:[%s175 + $0x74] sm:$0xf] %vm843, %v808
      %874 = vst.msk [vmem:[%s175 + $0x78] sm:$0xf] %vm843, %v809
      %875 = vst.msk [vmem:[%s175 + $0x7c] sm:$0xf] %vm843, %v810
      %s876 = smul.u32 32, %s14
      %p877 = scmp.lt.s32.totalorder %s876, 63
      %s878 = scalar_select %p877, %s876, 63
      %s879 = smul.addr %s878, 4
      %s880 = scalar_lea.vmem %s3, %s879
      // Predicated region
      $region33: #{inception_d_forward.8} parent=31 // pred_check
        %p881 = pneg %p100
      $region34: #{inception_d_forward.8} parent=31 // pred_check_branch
        %883 = sbr.rel (%p881) target = $region36
      $region35: #{inception_d_forward.8} parent=31 // pred_region
        %s884 = smul.u32 32, %s14
      $region36: #{inception_d_forward.8} parent=31 // pred_fallthru
        _
    $region32: #{inception_d_forward.8} parent=5 // pred_fallthru
      _
    %p885 = scmp.le.s32.totalorder 2, %s9
    // Predicated region
    $region37: #{inception_d_forward.8} parent=5 // pred_check
      %p886 = pneg %p885
    $region38: #{inception_d_forward.8} parent=5 // pred_check_branch
      %888 = sbr.rel (%p886) target = $region40
    $region39: #{inception_d_forward.8} parent=5 // pred_region
      %s889 = ssub.s32 %s9, 2
      // Predicated region
      $region41: #{inception_d_forward.8} parent=39 // pred_check
        %p890 = pneg %p106
      $region42: #{inception_d_forward.8} parent=39 // pred_check_branch
        %892 = sbr.rel (%p890) target = $region44
      $region43: #{inception_d_forward.8} parent=39 // pred_region
        %s893 = smul.u32 32, %s15
        %p894 = scmp.lt.s32.totalorder %s893, 63
        %s895 = scalar_select %p894, %s893, 63
        %s896 = smul.addr %s895, 4
        %s897 = scalar_lea.vmem %s3, %s896
      $region44: #{inception_d_forward.8} parent=39 // pred_fallthru
        _
    $region40: #{inception_d_forward.8} parent=5 // pred_fallthru
      _
  $region6: #{inception_d_forward.8} parent=0 // loop_footer
    %s13 = sadd.s32 1, %s9
  $region7: #{inception_d_forward.8} parent=0 // loop_footer_branch
    %8 = sbr.rel target = $region3
  $region8: #{inception_d_forward.8} parent=0 // loop_exit
    _

// kernel: inception_d_forward.9
$region0: #{inception_d_forward.9}
  #allocation0 [shape = 'u32[]', space=smem, size = 0x4, offset = 0x4, fixed_abs, tag = 'smem constant byte address 0x4 - core index']
  #allocation1 [shape = 'u32[144,128]{1,0:T(1,128)}', space=vmem, size = 0x12000, scoped, tag = 'internal scratch']
  %s0 = inlined_call_operand.vmem [shape: bf16[512,448], index: 0, kind: input, shape index: {}]
  %s1 = inlined_call_operand.vmem [shape: bf16[448,128], index: 1, kind: input, shape index: {}]
  %s2 = inlined_call_operand.vmem [shape: f32[1,128], index: 2, kind: input, shape index: {}]
  %s3 = inlined_call_operand.vmem [shape: bf16[512,128], index: 3, kind: output, shape index: {}]
  %s4 = sld [smem:[#allocation0]]
  $region45: #{inception_d_forward.9} parent=0
    _
  %s6 = ssub.s32 1, %s4
  %s7 = scalar_select 0, %s6, %s4
  loop: start=0, step=1, limit=4
  $region2: #{inception_d_forward.9} parent=0 // loop_pre_header
    _
  $region3: #{inception_d_forward.9} parent=0 // loop_header
    %s9 = sphi 0, %s13
    %p10 = scmp.ge.s32.totalorder %s9, 4
    %s19 = sphi 0, %s21
    %s22 = sphi 0, %s19
    %s23 = sphi 0, %s22
    %s39 = sphi 0, %s23
    %s43 = sphi 0, %s43
    %s45 = sphi 0, %s43
    %s46 = sphi 0, %s45
    %s60 = sphi 0, %s46
    %s64 = sphi 0, %s64
    %s66 = sphi 0, %s64
    %s67 = sphi 0, %s66
    %s81 = sphi 0, %s67
    %s87 = sphi 0, %s89
    %s90 = sphi 0, %s87
    %s91 = sphi 0, %s90
    %s107 = sphi 0, %s91
  $region4: #{inception_d_forward.9} parent=0 // loop_header_branch
    %12 = sbr.rel (%p10) target = $region8
  $region5: #{inception_d_forward.9} parent=0 // loop_body
    %s14 = ssub.s32 %s9, 1
    %s15 = ssub.s32 %s9, 2
    %s16 = sadd.s32 %s9, 1
    %s17 = ssub.s32 %s9, %s16
    %p18 = scmp.eq.s32.totalorder %s17, 0
    %s20 = sadd.s32 %s19, 1
    %s21 = scalar_select %p18, %s19, %s20
    %p24 = pneg %p18
    %p25 = scmp.eq.s32.totalorder %s9, 1
    %p26 = por %p24, %p25
    %p27 = scmp.ne.s32.totalorder %s19, %s22
    %p28 = scmp.eq.s32.totalorder %s9, 0
    %p29 = por %p27, %p28
    %p30 = scmp.ne.s32.totalorder %s19, %s22
    %p31 = scmp.eq.s32.totalorder %s14, 1
    %p32 = por %p30, %p31
    %p33 = scmp.ne.s32.totalorder %s22, %s23
    %p34 = scmp.eq.s32.totalorder %s14, 0
    %p35 = por %p33, %p34
    %p36 = scmp.ne.s32.totalorder %s22, %s23
    %p37 = scmp.eq.s32.totalorder %s15, 1
    %p38 = por %p36, %p37
    %p40 = scmp.ne.s32.totalorder %s23, %s39
    %p41 = scmp.eq.s32.totalorder %s15, 0
    %p42 = por %p40, %p41
    %s44 = sadd.s32 %s43, 1
    %p47 = scmp.eq.s32.totalorder %s9, 1
    %p48 = scmp.ne.s32.totalorder %s43, %s45
    %p49 = scmp.eq.s32.totalorder %s9, 0
    %p50 = por %p48, %p49
    %p51 = scmp.ne.s32.totalorder %s43, %s45
    %p52 = scmp.eq.s32.totalorder %s14, 1
    %p53 = por %p51, %p52
    %p54 = scmp.ne.s32.totalorder %s45, %s46
    %p55 = scmp.eq.s32.totalorder %s14, 0
    %p56 = por %p54, %p55
    %p57 = scmp.ne.s32.totalorder %s45, %s46
    %p58 = scmp.eq.s32.totalorder %s15, 1
    %p59 = por %p57, %p58
    %p61 = scmp.ne.s32.totalorder %s46, %s60
    %p62 = scmp.eq.s32.totalorder %s15, 0
    %p63 = por %p61, %p62
    %s65 = sadd.s32 %s64, 1
    %p68 = scmp.eq.s32.totalorder %s9, 1
    %p69 = scmp.ne.s32.totalorder %s64, %s66
    %p70 = scmp.eq.s32.totalorder %s9, 0
    %p71 = por %p69, %p70
    %p72 = scmp.ne.s32.totalorder %s64, %s66
    %p73 = scmp.eq.s32.totalorder %s14, 1
    %p74 = por %p72, %p73
    %p75 = scmp.ne.s32.totalorder %s66, %s67
    %p76 = scmp.eq.s32.totalorder %s14, 0
    %p77 = por %p75, %p76
    %p78 = scmp.ne.s32.totalorder %s66, %s67
    %p79 = scmp.eq.s32.totalorder %s15, 1
    %p80 = por %p78, %p79
    %p82 = scmp.ne.s32.totalorder %s67, %s81
    %p83 = scmp.eq.s32.totalorder %s15, 0
    %p84 = por %p82, %p83
    %s85 = ssub.s32 %s9, %s16
    %p86 = scmp.eq.s32.totalorder %s85, 0
    %s88 = sadd.s32 %s87, 1
    %s89 = scalar_select %p86, %s87, %s88
    %p92 = pneg %p86
    %p93 = scmp.eq.s32.totalorder %s9, 1
    %p94 = por %p92, %p93
    %p95 = scmp.ne.s32.totalorder %s87, %s90
    %p96 = scmp.eq.s32.totalorder %s9, 0
    %p97 = por %p95, %p96
    %p98 = scmp.ne.s32.totalorder %s87, %s90
    %p99 = scmp.eq.s32.totalorder %s14, 1
    %p100 = por %p98, %p99
    %p101 = scmp.ne.s32.totalorder %s90, %s91
    %p102 = scmp.eq.s32.totalorder %s14, 0
    %p103 = por %p101, %p102
    %p104 = scmp.ne.s32.totalorder %s90, %s91
    %p105 = scmp.eq.s32.totalorder %s15, 1
    %p106 = por %p104, %p105
    %p108 = scmp.ne.s32.totalorder %s91, %s107
    %p109 = scmp.eq.s32.totalorder %s15, 0
    %p110 = por %p108, %p109
    %p111 = scmp.le.s32.totalorder 1, %s9
    %p112 = scmp.lt.s32.totalorder %s9, 3
    %p113 = pnand %p111, %p112
    %p114 = pneg %p113
    // Predicated region
    $region9: #{inception_d_forward.9} parent=5 // pred_check
      _
    $region10: #{inception_d_forward.9} parent=5 // pred_check_branch
      %116 = sbr.rel (%p113) target = $region12
    $region11: #{inception_d_forward.9} parent=5 // pred_region
      %s117 = ssub.s32 %s9, 1
      // Predicated region
      $region13: #{inception_d_forward.9} parent=11 // pred_check
        %p118 = pneg %p56
      $region14: #{inception_d_forward.9} parent=11 // pred_check_branch
        %120 = sbr.rel (%p118) target = $region16
      $region15: #{inception_d_forward.9} parent=11 // pred_region
        _
      $region16: #{inception_d_forward.9} parent=11 // pred_fallthru
        _
      // Predicated region
      $region17: #{inception_d_forward.9} parent=11 // pred_check
        %p121 = pneg %p77
      $region18: #{inception_d_forward.9} parent=11 // pred_check_branch
        %123 = sbr.rel (%p121) target = $region20
      $region19: #{inception_d_forward.9} parent=11 // pred_region
        _
      $region20: #{inception_d_forward.9} parent=11 // pred_fallthru
        _
    $region12: #{inception_d_forward.9} parent=5 // pred_fallthru
      _
    %p124 = scmp.lt.s32.totalorder %s9, 2
    // Predicated region
    $region21: #{inception_d_forward.9} parent=5 // pred_check
      %p125 = pneg %p124
    $region22: #{inception_d_forward.9} parent=5 // pred_check_branch
      %127 = sbr.rel (%p125) target = $region24
    $region23: #{inception_d_forward.9} parent=5 // pred_region
      // Predicated region
      $region25: #{inception_d_forward.9} parent=23 // pred_check
        %p128 = pneg %p29
      $region26: #{inception_d_forward.9} parent=23 // pred_check_branch
        %130 = sbr.rel (%p128) target = $region28
      $region27: #{inception_d_forward.9} parent=23 // pred_region
        %s131 = smul.u32 32, %s9
        %p132 = scmp.lt.s32.totalorder %s131, 63
        %s133 = scalar_select %p132, %s131, 63
        %s134 = smul.addr %s133, 4
        %s135 = smul.addr %s134, 4
        %s136 = scalar_lea.vmem %s0, %s135
        %s137 = smul.u32 32, %s9
      $region28: #{inception_d_forward.9} parent=23 // pred_fallthru
        _
    $region24: #{inception_d_forward.9} parent=5 // pred_fallthru
      _
    %p138 = scmp.le.s32.totalorder 1, %s9
    %p139 = scmp.lt.s32.totalorder %s9, 3
    %p140 = pnand %p138, %p139
    %p141 = pneg %p140
    // Predicated region
    $region29: #{inception_d_forward.9} parent=5 // pred_check
      _
    $region30: #{inception_d_forward.9} parent=5 // pred_check_branch
      %143 = sbr.rel (%p140) target = $region32
    $region31: #{inception_d_forward.9} parent=5 // pred_region
      %s144 = ssub.s32 %s9, 1
      %s145 = smul.u32 32, %s14
      %p146 = scmp.lt.s32.totalorder %s145, 63
      %s147 = scalar_select %p146, %s145, 63
      %s148 = smul.addr %s147, 4
      %s149 = smul.addr %s148, 4
      %s150 = scalar_lea.vmem %s0, %s149
      %p151 = pneg %p35
      %p152 = pneg %p32
      %p153 = pneg %p56
      %p154 = pneg %p53
      %p155 = pneg %p77
      %p156 = pneg %p74
      %p157 = pneg %p103
      %p158 = pneg %p100
      %s159 = smul.u32 32, %s14
      %p160 = scmp.lt.s32.totalorder %s159, 63
      %s161 = scalar_select %p160, %s159, 63
      %s162 = smul.addr %s161, 4
      %s163 = scalar_lea.vmem %s3, %s162
      %s164 = smul.u32 32, %s14
      %p165 = scmp.lt.s32.totalorder %s164, 63
      %s166 = scalar_select %p165, %s164, 63
      %s167 = smul.addr %s166, 4
      %s168 = smul.addr %s167, 4
      %s169 = scalar_lea.vmem %s0, %s168
      %s170 = smul.u32 32, %s14
      %s171 = smul.u32 32, %s14
      %p172 = scmp.lt.s32.totalorder %s171, 63
      %s173 = scalar_select %p172, %s171, 63
      %s174 = smul.addr %s173, 4
      %s175 = scalar_lea.vmem %s3, %s174
      %s176 = smul.u32 32, %s14
      %v178 = vld [vmem:[%s169] sm:$0xff]
      %v179 = vld [vmem:[%s169 + $0x8] sm:$0xff]
      %v180 = vld [vmem:[%s169 + $0x10] sm:$0xff]
      %v181 = vld [vmem:[%s169 + $0x18] sm:$0xff]
      %v182 = vld [vmem:[%s169 + $0x20] sm:$0xff]
      %v183 = vld [vmem:[%s169 + $0x28] sm:$0xff]
      %v184 = vld [vmem:[%s169 + $0x30] sm:$0xff]
      %v185 = vld [vmem:[%s169 + $0x38] sm:$0xff]
      %v186 = vld [vmem:[%s169 + $0x40] sm:$0xff]
      %v187 = vld [vmem:[%s169 + $0x48] sm:$0xff]
      %v188 = vld [vmem:[%s169 + $0x50] sm:$0xff]
      %v189 = vld [vmem:[%s169 + $0x58] sm:$0xff]
      %v190 = vld [vmem:[%s169 + $0x60] sm:$0xff]
      %v191 = vld [vmem:[%s169 + $0x68] sm:$0xff]
      %v192 = vld [vmem:[%s169 + $0x70] sm:$0xff]
      %v193 = vld [vmem:[%s169 + $0x78] sm:$0xff]
      %v194 = vld [vmem:[%s169 + $0x80] sm:$0xff]
      %v195 = vld [vmem:[%s169 + $0x88] sm:$0xff]
      %v196 = vld [vmem:[%s169 + $0x90] sm:$0xff]
      %v197 = vld [vmem:[%s169 + $0x98] sm:$0xff]
      %v198 = vld [vmem:[%s169 + $0xa0] sm:$0xff]
      %v199 = vld [vmem:[%s169 + $0xa8] sm:$0xff]
      %v200 = vld [vmem:[%s169 + $0xb0] sm:$0xff]
      %v201 = vld [vmem:[%s169 + $0xb8] sm:$0xff]
      %v202 = vld [vmem:[%s169 + $0xc0] sm:$0xff]
      %v203 = vld [vmem:[%s169 + $0xc8] sm:$0xff]
      %v204 = vld [vmem:[%s169 + $0xd0] sm:$0xff]
      %v205 = vld [vmem:[%s169 + $0xd8] sm:$0xff]
      %v206 = vld [vmem:[%s169 + $0xe0] sm:$0xff]
      %v207 = vld [vmem:[%s169 + $0xe8] sm:$0xff]
      %v208 = vld [vmem:[%s169 + $0xf0] sm:$0xff]
      %v209 = vld [vmem:[%s169 + $0xf8] sm:$0xff]
      %v210 = vld [vmem:[%s169 + $0x100] sm:$0xff]
      %v211 = vld [vmem:[%s169 + $0x108] sm:$0xff]
      %v212 = vld [vmem:[%s169 + $0x110] sm:$0xff]
      %v213 = vld [vmem:[%s169 + $0x118] sm:$0xff]
      %v214 = vld [vmem:[%s169 + $0x120] sm:$0xff]
      %v215 = vld [vmem:[%s169 + $0x128] sm:$0xff]
      %v216 = vld [vmem:[%s169 + $0x130] sm:$0xff]
      %v217 = vld [vmem:[%s169 + $0x138] sm:$0xff]
      %v218 = vld [vmem:[%s169 + $0x140] sm:$0xff]
      %v219 = vld [vmem:[%s169 + $0x148] sm:$0xff]
      %v220 = vld [vmem:[%s169 + $0x150] sm:$0xff]
      %v221 = vld [vmem:[%s169 + $0x158] sm:$0xff]
      %v222 = vld [vmem:[%s169 + $0x160] sm:$0xff]
      %v223 = vld [vmem:[%s169 + $0x168] sm:$0xff]
      %v224 = vld [vmem:[%s169 + $0x170] sm:$0xff]
      %v225 = vld [vmem:[%s169 + $0x178] sm:$0xff]
      %v226 = vld [vmem:[%s169 + $0x180] sm:$0xff]
      %v227 = vld [vmem:[%s169 + $0x188] sm:$0xff]
      %v228 = vld [vmem:[%s169 + $0x190] sm:$0xff]
      %v229 = vld [vmem:[%s169 + $0x198] sm:$0xff]
      %v230 = vld [vmem:[%s169 + $0x1a0] sm:$0xff]
      %v231 = vld [vmem:[%s169 + $0x1a8] sm:$0xff]
      %v232 = vld [vmem:[%s169 + $0x1b0] sm:$0xff]
      %v233 = vld [vmem:[%s169 + $0x1b8] sm:$0xff]
      %v234 = vld [vmem:[%s169 + $0x1c0] sm:$0xff]
      %v235 = vld [vmem:[%s169 + $0x1c8] sm:$0xff]
      %v236 = vld [vmem:[%s169 + $0x1d0] sm:$0xff]
      %v237 = vld [vmem:[%s169 + $0x1d8] sm:$0xff]
      %v238 = vld [vmem:[%s169 + $0x1e0] sm:$0xff]
      %v239 = vld [vmem:[%s169 + $0x1e8] sm:$0xff]
      %v240 = vld [vmem:[%s169 + $0x1f0] sm:$0xff]
      %v241 = vld [vmem:[%s169 + $0x1f8] sm:$0xff]
      %v242 = vld [vmem:[%s1] sm:$0xf]
      %v243 = vld [vmem:[%s1 + $0x4] sm:$0xf]
      %v244 = vld [vmem:[%s1 + $0x8] sm:$0xf]
      %v245 = vld [vmem:[%s1 + $0xc] sm:$0xf]
      %v246 = vld [vmem:[%s1 + $0x10] sm:$0xf]
      %v247 = vld [vmem:[%s1 + $0x14] sm:$0xf]
      %v248 = vld [vmem:[%s1 + $0x18] sm:$0xf]
      %v249 = vld [vmem:[%s1 + $0x1c] sm:$0xf]
      %v250 = vld [vmem:[%s1 + $0x20] sm:$0xf]
      %v251 = vld [vmem:[%s1 + $0x24] sm:$0xf]
      %v252 = vld [vmem:[%s1 + $0x28] sm:$0xf]
      %v253 = vld [vmem:[%s1 + $0x2c] sm:$0xf]
      %v254 = vld [vmem:[%s1 + $0x30] sm:$0xf]
      %v255 = vld [vmem:[%s1 + $0x34] sm:$0xf]
      %v256 = vld [vmem:[%s1 + $0x38] sm:$0xf]
      %v257 = vld [vmem:[%s1 + $0x3c] sm:$0xf]
      %v258 = vld [vmem:[%s1 + $0x40] sm:$0xf]
      %v259 = vld [vmem:[%s1 + $0x44] sm:$0xf]
      %v260 = vld [vmem:[%s1 + $0x48] sm:$0xf]
      %v261 = vld [vmem:[%s1 + $0x4c] sm:$0xf]
      %v262 = vld [vmem:[%s1 + $0x50] sm:$0xf]
      %v263 = vld [vmem:[%s1 + $0x54] sm:$0xf]
      %v264 = vld [vmem:[%s1 + $0x58] sm:$0xf]
      %v265 = vld [vmem:[%s1 + $0x5c] sm:$0xf]
      %v266 = vld [vmem:[%s1 + $0x60] sm:$0xf]
      %v267 = vld [vmem:[%s1 + $0x64] sm:$0xf]
      %v268 = vld [vmem:[%s1 + $0x68] sm:$0xf]
      %v269 = vld [vmem:[%s1 + $0x6c] sm:$0xf]
      %v270 = vld [vmem:[%s1 + $0x70] sm:$0xf]
      %v271 = vld [vmem:[%s1 + $0x74] sm:$0xf]
      %v272 = vld [vmem:[%s1 + $0x78] sm:$0xf]
      %v273 = vld [vmem:[%s1 + $0x7c] sm:$0xf]
      %v274 = vld [vmem:[%s1 + $0x80] sm:$0xf]
      %v275 = vld [vmem:[%s1 + $0x84] sm:$0xf]
      %v276 = vld [vmem:[%s1 + $0x88] sm:$0xf]
      %v277 = vld [vmem:[%s1 + $0x8c] sm:$0xf]
      %v278 = vld [vmem:[%s1 + $0x90] sm:$0xf]
      %v279 = vld [vmem:[%s1 + $0x94] sm:$0xf]
      %v280 = vld [vmem:[%s1 + $0x98] sm:$0xf]
      %v281 = vld [vmem:[%s1 + $0x9c] sm:$0xf]
      %v282 = vld [vmem:[%s1 + $0xa0] sm:$0xf]
      %v283 = vld [vmem:[%s1 + $0xa4] sm:$0xf]
      %v284 = vld [vmem:[%s1 + $0xa8] sm:$0xf]
      %v285 = vld [vmem:[%s1 + $0xac] sm:$0xf]
      %v286 = vld [vmem:[%s1 + $0xb0] sm:$0xf]
      %v287 = vld [vmem:[%s1 + $0xb4] sm:$0xf]
      %v288 = vld [vmem:[%s1 + $0xb8] sm:$0xf]
      %v289 = vld [vmem:[%s1 + $0xbc] sm:$0xf]
      %v290 = vld [vmem:[%s1 + $0xc0] sm:$0xf]
      %v291 = vld [vmem:[%s1 + $0xc4] sm:$0xf]
      %v292 = vld [vmem:[%s1 + $0xc8] sm:$0xf]
      %v293 = vld [vmem:[%s1 + $0xcc] sm:$0xf]
      %v294 = vld [vmem:[%s1 + $0xd0] sm:$0xf]
      %v295 = vld [vmem:[%s1 + $0xd4] sm:$0xf]
      %v296 = vld [vmem:[%s1 + $0xd8] sm:$0xf]
      %v297 = vld [vmem:[%s1 + $0xdc] sm:$0xf]
      %v298 = vld [vmem:[%s2] sm:$0x1]
      %v300 = vlaneseq
      %v301 = vshrl.u32 %v300, 7
      %v302 = vsub.s32 0, %v301
      %v303 = vrot.slane %v298, %v302
      %v369 = vunpack.c.l.b16 %v178
      %v370 = vunpack.c.h.b16 %v178
      %v371 = vunpack.c.l.b16 %v179
      %v372 = vunpack.c.h.b16 %v179
      %v373 = vunpack.c.l.b16 %v180
      %v374 = vunpack.c.h.b16 %v180
      %v375 = vunpack.c.l.b16 %v181
      %v376 = vunpack.c.h.b16 %v181
      %v377 = vunpack.c.l.b16 %v182
      %v378 = vunpack.c.h.b16 %v182
      %v379 = vunpack.c.l.b16 %v183
      %v380 = vunpack.c.h.b16 %v183
      %v381 = vunpack.c.l.b16 %v184
      %v382 = vunpack.c.h.b16 %v184
      %v383 = vunpack.c.l.b16 %v185
      %v384 = vunpack.c.h.b16 %v185
      %v385 = vunpack.c.l.b16 %v186
      %v386 = vunpack.c.h.b16 %v186
      %v387 = vunpack.c.l.b16 %v187
      %v388 = vunpack.c.h.b16 %v187
      %v389 = vunpack.c.l.b16 %v188
      %v390 = vunpack.c.h.b16 %v188
      %v391 = vunpack.c.l.b16 %v189
      %v392 = vunpack.c.h.b16 %v189
      %v393 = vunpack.c.l.b16 %v190
      %v394 = vunpack.c.h.b16 %v190
      %v395 = vunpack.c.l.b16 %v191
      %v396 = vunpack.c.h.b16 %v191
      %v397 = vunpack.c.l.b16 %v192
      %v398 = vunpack.c.h.b16 %v192
      %v399 = vunpack.c.l.b16 %v193
      %v400 = vunpack.c.h.b16 %v193
      %v401 = vunpack.c.l.b16 %v194
      %v402 = vunpack.c.h.b16 %v194
      %v403 = vunpack.c.l.b16 %v195
      %v404 = vunpack.c.h.b16 %v195
      %v405 = vunpack.c.l.b16 %v196
      %v406 = vunpack.c.h.b16 %v196
      %v407 = vunpack.c.l.b16 %v197
      %v408 = vunpack.c.h.b16 %v197
      %v409 = vunpack.c.l.b16 %v198
      %v410 = vunpack.c.h.b16 %v198
      %v411 = vunpack.c.l.b16 %v199
      %v412 = vunpack.c.h.b16 %v199
      %v413 = vunpack.c.l.b16 %v200
      %v414 = vunpack.c.h.b16 %v200
      %v415 = vunpack.c.l.b16 %v201
      %v416 = vunpack.c.h.b16 %v201
      %v417 = vunpack.c.l.b16 %v202
      %v418 = vunpack.c.h.b16 %v202
      %v419 = vunpack.c.l.b16 %v203
      %v420 = vunpack.c.h.b16 %v203
      %v421 = vunpack.c.l.b16 %v204
      %v422 = vunpack.c.h.b16 %v204
      %v423 = vunpack.c.l.b16 %v205
      %v424 = vunpack.c.h.b16 %v205
      %v425 = vunpack.c.l.b16 %v206
      %v426 = vunpack.c.h.b16 %v206
      %v427 = vunpack.c.l.b16 %v207
      %v428 = vunpack.c.h.b16 %v207
      %v429 = vunpack.c.l.b16 %v208
      %v430 = vunpack.c.h.b16 %v208
      %v431 = vunpack.c.l.b16 %v209
      %v432 = vunpack.c.h.b16 %v209
      %v433 = vunpack.c.l.b16 %v210
      %v434 = vunpack.c.h.b16 %v210
      %v435 = vunpack.c.l.b16 %v211
      %v436 = vunpack.c.h.b16 %v211
      %v437 = vunpack.c.l.b16 %v212
      %v438 = vunpack.c.h.b16 %v212
      %v439 = vunpack.c.l.b16 %v213
      %v440 = vunpack.c.h.b16 %v213
      %v441 = vunpack.c.l.b16 %v214
      %v442 = vunpack.c.h.b16 %v214
      %v443 = vunpack.c.l.b16 %v215
      %v444 = vunpack.c.h.b16 %v215
      %v445 = vunpack.c.l.b16 %v216
      %v446 = vunpack.c.h.b16 %v216
      %v447 = vunpack.c.l.b16 %v217
      %v448 = vunpack.c.h.b16 %v217
      %v449 = vunpack.c.l.b16 %v218
      %v450 = vunpack.c.h.b16 %v218
      %v451 = vunpack.c.l.b16 %v219
      %v452 = vunpack.c.h.b16 %v219
      %v453 = vunpack.c.l.b16 %v220
      %v454 = vunpack.c.h.b16 %v220
      %v455 = vunpack.c.l.b16 %v221
      %v456 = vunpack.c.h.b16 %v221
      %v457 = vunpack.c.l.b16 %v222
      %v458 = vunpack.c.h.b16 %v222
      %v459 = vunpack.c.l.b16 %v223
      %v460 = vunpack.c.h.b16 %v223
      %v461 = vunpack.c.l.b16 %v224
      %v462 = vunpack.c.h.b16 %v224
      %v463 = vunpack.c.l.b16 %v225
      %v464 = vunpack.c.h.b16 %v225
      %v465 = vunpack.c.l.b16 %v226
      %v466 = vunpack.c.h.b16 %v226
      %v467 = vunpack.c.l.b16 %v227
      %v468 = vunpack.c.h.b16 %v227
      %v469 = vunpack.c.l.b16 %v228
      %v470 = vunpack.c.h.b16 %v228
      %v471 = vunpack.c.l.b16 %v229
      %v472 = vunpack.c.h.b16 %v229
      %v473 = vunpack.c.l.b16 %v230
      %v474 = vunpack.c.h.b16 %v230
      %v475 = vunpack.c.l.b16 %v231
      %v476 = vunpack.c.h.b16 %v231
      %v477 = vunpack.c.l.b16 %v232
      %v478 = vunpack.c.h.b16 %v232
      %v479 = vunpack.c.l.b16 %v233
      %v480 = vunpack.c.h.b16 %v233
      %v481 = vunpack.c.l.b16 %v234
      %v482 = vunpack.c.h.b16 %v234
      %v483 = vunpack.c.l.b16 %v235
      %v484 = vunpack.c.h.b16 %v235
      %v485 = vunpack.c.l.b16 %v236
      %v486 = vunpack.c.h.b16 %v236
      %v487 = vunpack.c.l.b16 %v237
      %v488 = vunpack.c.h.b16 %v237
      %v489 = vunpack.c.l.b16 %v238
      %v490 = vunpack.c.h.b16 %v238
      %v491 = vunpack.c.l.b16 %v239
      %v492 = vunpack.c.h.b16 %v239
      %v493 = vunpack.c.l.b16 %v240
      %v494 = vunpack.c.h.b16 %v240
      %v495 = vunpack.c.l.b16 %v241
      %v496 = vunpack.c.h.b16 %v241
      %v497 = vpack.c.b16 %v373, %v369
      %v498 = vpack.c.b16 %v374, %v370
      %v499 = vpack.c.b16 %v375, %v371
      %v500 = vpack.c.b16 %v376, %v372
      %v501 = vpack.c.b16 %v381, %v377
      %v502 = vpack.c.b16 %v382, %v378
      %v503 = vpack.c.b16 %v383, %v379
      %v504 = vpack.c.b16 %v384, %v380
      %v505 = vpack.c.b16 %v389, %v385
      %v506 = vpack.c.b16 %v390, %v386
      %v507 = vpack.c.b16 %v391, %v387
      %v508 = vpack.c.b16 %v392, %v388
      %v509 = vpack.c.b16 %v397, %v393
      %v510 = vpack.c.b16 %v398, %v394
      %v511 = vpack.c.b16 %v399, %v395
      %v512 = vpack.c.b16 %v400, %v396
      %v513 = vpack.c.b16 %v405, %v401
      %v514 = vpack.c.b16 %v406, %v402
      %v515 = vpack.c.b16 %v407, %v403
      %v516 = vpack.c.b16 %v408, %v404
      %v517 = vpack.c.b16 %v413, %v409
      %v518 = vpack.c.b16 %v414, %v410
      %v519 = vpack.c.b16 %v415, %v411
      %v520 = vpack.c.b16 %v416, %v412
      %v521 = vpack.c.b16 %v421, %v417
      %v522 = vpack.c.b16 %v422, %v418
      %v523 = vpack.c.b16 %v423, %v419
      %v524 = vpack.c.b16 %v424, %v420
      %v525 = vpack.c.b16 %v429, %v425
      %v526 = vpack.c.b16 %v430, %v426
      %v527 = vpack.c.b16 %v431, %v427
      %v528 = vpack.c.b16 %v432, %v428
      %v529 = vpack.c.b16 %v437, %v433
      %v530 = vpack.c.b16 %v438, %v434
      %v531 = vpack.c.b16 %v439, %v435
      %v532 = vpack.c.b16 %v440, %v436
      %v533 = vpack.c.b16 %v445, %v441
      %v534 = vpack.c.b16 %v446, %v442
      %v535 = vpack.c.b16 %v447, %v443
      %v536 = vpack.c.b16 %v448, %v444
      %v537 = vpack.c.b16 %v453, %v449
      %v538 = vpack.c.b16 %v454, %v450
      %v539 = vpack.c.b16 %v455, %v451
      %v540 = vpack.c.b16 %v456, %v452
      %v541 = vpack.c.b16 %v461, %v457
      %v542 = vpack.c.b16 %v462, %v458
      %v543 = vpack.c.b16 %v463, %v459
      %v544 = vpack.c.b16 %v464, %v460
      %v545 = vpack.c.b16 %v469, %v465
      %v546 = vpack.c.b16 %v470, %v466
      %v547 = vpack.c.b16 %v471, %v467
      %v548 = vpack.c.b16 %v472, %v468
      %v549 = vpack.c.b16 %v477, %v473
      %v550 = vpack.c.b16 %v478, %v474
      %v551 = vpack.c.b16 %v479, %v475
      %v552 = vpack.c.b16 %v480, %v476
      %v553 = vpack.c.b16 %v485, %v481
      %v554 = vpack.c.b16 %v486, %v482
      %v555 = vpack.c.b16 %v487, %v483
      %v556 = vpack.c.b16 %v488, %v484
      %v557 = vpack.c.b16 %v493, %v489
      %v558 = vpack.c.b16 %v494, %v490
      %v559 = vpack.c.b16 %v495, %v491
      %v560 = vpack.c.b16 %v496, %v492
      %v665 = vunpack.c.l.b16 %v242
      %v666 = vunpack.c.l.b16 %v243
      %v667 = vunpack.c.l.b16 %v244
      %v668 = vunpack.c.l.b16 %v245
      %v669 = vunpack.c.l.b16 %v246
      %v670 = vunpack.c.l.b16 %v247
      %v671 = vunpack.c.l.b16 %v248
      %v672 = vunpack.c.l.b16 %v249
      %v673 = vunpack.c.l.b16 %v250
      %v674 = vunpack.c.l.b16 %v251
      %v675 = vunpack.c.l.b16 %v252
      %v676 = vunpack.c.l.b16 %v253
      %v677 = vunpack.c.l.b16 %v254
      %v678 = vunpack.c.l.b16 %v255
      %v679 = vunpack.c.l.b16 %v256
      %v680 = vunpack.c.l.b16 %v257
      %v681 = vunpack.c.l.b16 %v258
      %v682 = vunpack.c.l.b16 %v259
      %v683 = vunpack.c.l.b16 %v260
      %v684 = vunpack.c.l.b16 %v261
      %v685 = vunpack.c.l.b16 %v262
      %v686 = vunpack.c.l.b16 %v263
      %v687 = vunpack.c.l.b16 %v264
      %v688 = vunpack.c.l.b16 %v265
      %v689 = vunpack.c.l.b16 %v266
      %v690 = vunpack.c.l.b16 %v267
      %v691 = vunpack.c.l.b16 %v268
      %v692 = vunpack.c.l.b16 %v269
      %v693 = vunpack.c.l.b16 %v270
      %v694 = vunpack.c.l.b16 %v271
      %v695 = vunpack.c.l.b16 %v272
      %v696 = vunpack.c.l.b16 %v273
      %v697 = vunpack.c.l.b16 %v274
      %v698 = vunpack.c.l.b16 %v275
      %v699 = vunpack.c.l.b16 %v276
      %v700 = vunpack.c.l.b16 %v277
      %v701 = vunpack.c.l.b16 %v278
      %v702 = vunpack.c.l.b16 %v279
      %v703 = vunpack.c.l.b16 %v280
      %v704 = vunpack.c.l.b16 %v281
      %v705 = vunpack.c.l.b16 %v282
      %v706 = vunpack.c.l.b16 %v283
      %v707 = vunpack.c.l.b16 %v284
      %v708 = vunpack.c.l.b16 %v285
      %v709 = vunpack.c.l.b16 %v286
      %v710 = vunpack.c.l.b16 %v287
      %v711 = vunpack.c.l.b16 %v288
      %v712 = vunpack.c.l.b16 %v289
      %v713 = vunpack.c.l.b16 %v290
      %v714 = vunpack.c.l.b16 %v291
      %v715 = vunpack.c.l.b16 %v292
      %v716 = vunpack.c.l.b16 %v293
      %v717 = vunpack.c.l.b16 %v294
      %v718 = vunpack.c.l.b16 %v295
      %v719 = vunpack.c.l.b16 %v296
      %v720 = vunpack.c.l.b16 %v297
      %v721 = vpack.c.b16 %v666, %v665
      %v722 = vpack.c.b16 %v668, %v667
      %v723 = vpack.c.b16 %v670, %v669
      %v724 = vpack.c.b16 %v672, %v671
      %v725 = vpack.c.b16 %v674, %v673
      %v726 = vpack.c.b16 %v676, %v675
      %v727 = vpack.c.b16 %v678, %v677
      %v728 = vpack.c.b16 %v680, %v679
      %v729 = vpack.c.b16 %v682, %v681
      %v730 = vpack.c.b16 %v684, %v683
      %v731 = vpack.c.b16 %v686, %v685
      %v732 = vpack.c.b16 %v688, %v687
      %v733 = vpack.c.b16 %v690, %v689
      %v734 = vpack.c.b16 %v692, %v691
      %v735 = vpack.c.b16 %v694, %v693
      %v736 = vpack.c.b16 %v696, %v695
      %v737 = vpack.c.b16 %v698, %v697
      %v738 = vpack.c.b16 %v700, %v699
      %v739 = vpack.c.b16 %v702, %v701
      %v740 = vpack.c.b16 %v704, %v703
      %v741 = vpack.c.b16 %v706, %v705
      %v742 = vpack.c.b16 %v708, %v707
      %v743 = vpack.c.b16 %v710, %v709
      %v744 = vpack.c.b16 %v712, %v711
      %v745 = vpack.c.b16 %v714, %v713
      %v746 = vpack.c.b16 %v716, %v715
      %v747 = vpack.c.b16 %v718, %v717
      %v748 = vpack.c.b16 %v720, %v719
      %vm777 = vcmask 523264
      %v779 = vsel %vm777, %v500, 0
      %v782 = vsel %vm777, %v504, 0
      %v785 = vsel %vm777, %v508, 0
      %v788 = vsel %vm777, %v512, 0
      %v791 = vsel %vm777, %v516, 0
      %v794 = vsel %vm777, %v520, 0
      %v797 = vsel %vm777, %v524, 0
      %v800 = vsel %vm777, %v528, 0
      %v803 = vsel %vm777, %v532, 0
      %v806 = vsel %vm777, %v536, 0
      %v809 = vsel %vm777, %v540, 0
      %v812 = vsel %vm777, %v544, 0
      %v815 = vsel %vm777, %v548, 0
      %v818 = vsel %vm777, %v552, 0
      %v821 = vsel %vm777, %v556, 0
      %v824 = vsel %vm777, %v560, 0
      %826 = vmatprep.subr.bf16.mxu0 0
      %827 = vmatpush1.bf16.msra.mxu0 %v721
      %828 = vmatprep.subr.bf16.mxu0 0
      %829 = vmatpush1.bf16.msra.mxu0 %v722
      %830 = vmatprep.subr.bf16.mxu0 0
      %831 = vmatpush1.bf16.msra.mxu0 %v723
      %832 = vmatprep.subr.bf16.mxu0 0
      %833 = vmatpush1.bf16.msra.mxu0 %v724
      %834 = vmatprep.subr.bf16.mxu0 0
      %835 = vmatpush1.bf16.msra.mxu0 %v725
      %836 = vmatprep.subr.bf16.mxu0 0
      %837 = vmatpush1.bf16.msra.mxu0 %v726
      %838 = vmatprep.subr.bf16.mxu0 0
      %839 = vmatpush1.bf16.msra.mxu0 %v727
      %840 = vmatprep.subr.bf16.mxu0 0
      %841 = vmatpush1.bf16.msra.mxu0 %v728
      %842 = vmatprep.subr.bf16.mxu0 0
      %843 = vmatpush1.bf16.msra.mxu0 %v729
      %844 = vmatprep.subr.bf16.mxu0 0
      %845 = vmatpush1.bf16.msra.mxu0 %v730
      %846 = vmatprep.subr.bf16.mxu0 0
      %847 = vmatpush1.bf16.msra.mxu0 %v731
      %848 = vmatprep.subr.bf16.mxu0 0
      %849 = vmatpush1.bf16.msra.mxu0 %v732
      %850 = vmatprep.subr.bf16.mxu0 0
      %851 = vmatpush1.bf16.msra.mxu0 %v733
      %852 = vmatprep.subr.bf16.mxu0 0
      %853 = vmatpush1.bf16.msra.mxu0 %v734
      %854 = vmatprep.subr.bf16.mxu0 0
      %855 = vmatpush1.bf16.msra.mxu0 %v735
      %856 = vmatprep.subr.bf16.mxu0 0
      %857 = vmatpush1.bf16.msra.mxu0 %v736
      %858 = vmatprep.mubr.bf16.mxu0 %v498
      %859 = vmatmul.mubr.bf16.gmra.mrb[0].mxu0 %v497
      %v860 = vpop.f32.mrb[0].mxu0
      %v861 = vadd.f32 %v303, %v860
      %v862 = vpop.f32.mrb[0].mxu0
      %v863 = vpop.f32.mrb[0].mxu0
      %v864 = vadd.f32 %v303, %v863
      %v865 = vpop.f32.mrb[0].mxu0
      %866 = vmatprep.mubr.bf16.mxu0 %v502
      %867 = vmatmul.mubr.bf16.gmra.mrb[0].mxu0 %v501
      %v868 = vpop.f32.mrb[0].mxu0
      %v869 = vadd.f32 %v303, %v868
      %v870 = vpop.f32.mrb[0].mxu0
      %v871 = vpop.f32.mrb[0].mxu0
      %v872 = vadd.f32 %v303, %v871
      %v873 = vpop.f32.mrb[0].mxu0
      %874 = vmatprep.mubr.bf16.mxu0 %v506
      %875 = vmatmul.mubr.bf16.gmra.mrb[0].mxu0 %v505
      %v876 = vpop.f32.mrb[0].mxu0
      %v877 = vadd.f32 %v303, %v876
      %v878 = vpop.f32.mrb[0].mxu0
      %v879 = vpop.f32.mrb[0].mxu0
      %v880 = vadd.f32 %v303, %v879
      %v881 = vpop.f32.mrb[0].mxu0
      %882 = vmatprep.mubr.bf16.mxu0 %v510
      %883 = vmatmul.mubr.bf16.gmra.mrb[0].mxu0 %v509
      %v884 = vpop.f32.mrb[0].mxu0
      %v885 = vadd.f32 %v303, %v884
      %v886 = vpop.f32.mrb[0].mxu0
      %v887 = vpop.f32.mrb[0].mxu0
      %v888 = vadd.f32 %v303, %v887
      %v889 = vpop.f32.mrb[0].mxu0
      %890 = vmatprep.mubr.bf16.mxu0 %v514
      %891 = vmatmul.mubr.bf16.gmra.mrb[0].mxu0 %v513
      %v892 = vpop.f32.mrb[0].mxu0
      %v893 = vadd.f32 %v303, %v892
      %v894 = vpop.f32.mrb[0].mxu0
      %v895 = vpop.f32.mrb[0].mxu0
      %v896 = vadd.f32 %v303, %v895
      %v897 = vpop.f32.mrb[0].mxu0
      %898 = vmatprep.mubr.bf16.mxu0 %v518
      %899 = vmatmul.mubr.bf16.gmra.mrb[0].mxu0 %v517
      %v900 = vpop.f32.mrb[0].mxu0
      %v901 = vadd.f32 %v303, %v900
      %v902 = vpop.f32.mrb[0].mxu0
      %v903 = vpop.f32.mrb[0].mxu0
      %v904 = vadd.f32 %v303, %v903
      %v905 = vpop.f32.mrb[0].mxu0
      %906 = vmatprep.mubr.bf16.mxu0 %v522
      %907 = vmatmul.mubr.bf16.gmra.mrb[0].mxu0 %v521
      %v908 = vpop.f32.mrb[0].mxu0
      %v909 = vadd.f32 %v303, %v908
      %v910 = vpop.f32.mrb[0].mxu0
      %v911 = vpop.f32.mrb[0].mxu0
      %v912 = vadd.f32 %v303, %v911
      %v913 = vpop.f32.mrb[0].mxu0
      %914 = vmatprep.mubr.bf16.mxu0 %v526
      %915 = vmatmul.mubr.bf16.gmra.mrb[0].mxu0 %v525
      %v916 = vpop.f32.mrb[0].mxu0
      %v917 = vadd.f32 %v303, %v916
      %v918 = vpop.f32.mrb[0].mxu0
      %v919 = vpop.f32.mrb[0].mxu0
      %v920 = vadd.f32 %v303, %v919
      %v921 = vpop.f32.mrb[0].mxu0
      %922 = vmatprep.mubr.bf16.mxu0 %v530
      %923 = vmatmul.mubr.bf16.gmra.mrb[0].mxu0 %v529
      %v924 = vpop.f32.mrb[0].mxu0
      %v925 = vadd.f32 %v303, %v924
      %v926 = vpop.f32.mrb[0].mxu0
      %v927 = vpop.f32.mrb[0].mxu0
      %v928 = vadd.f32 %v303, %v927
      %v929 = vpop.f32.mrb[0].mxu0
      %930 = vmatprep.mubr.bf16.mxu0 %v534
      %931 = vmatmul.mubr.bf16.gmra.mrb[0].mxu0 %v533
      %v932 = vpop.f32.mrb[0].mxu0
      %v933 = vadd.f32 %v303, %v932
      %v934 = vpop.f32.mrb[0].mxu0
      %v935 = vpop.f32.mrb[0].mxu0
      %v936 = vadd.f32 %v303, %v935
      %v937 = vpop.f32.mrb[0].mxu0
      %938 = vmatprep.mubr.bf16.mxu0 %v538
      %939 = vmatmul.mubr.bf16.gmra.mrb[0].mxu0 %v537
      %v940 = vpop.f32.mrb[0].mxu0
      %v941 = vadd.f32 %v303, %v940
      %v942 = vpop.f32.mrb[0].mxu0
      %v943 = vpop.f32.mrb[0].mxu0
      %v944 = vadd.f32 %v303, %v943
      %v945 = vpop.f32.mrb[0].mxu0
      %946 = vmatprep.mubr.bf16.mxu0 %v542
      %947 = vmatmul.mubr.bf16.gmra.mrb[0].mxu0 %v541
      %v948 = vpop.f32.mrb[0].mxu0
      %v949 = vadd.f32 %v303, %v948
      %v950 = vpop.f32.mrb[0].mxu0
      %v951 = vpop.f32.mrb[0].mxu0
      %v952 = vadd.f32 %v303, %v951
      %v953 = vpop.f32.mrb[0].mxu0
      %954 = vmatprep.mubr.bf16.mxu0 %v546
      %955 = vmatmul.mubr.bf16.gmra.mrb[0].mxu0 %v545
      %v956 = vpop.f32.mrb[0].mxu0
      %v957 = vadd.f32 %v303, %v956
      %v958 = vpop.f32.mrb[0].mxu0
      %v959 = vpop.f32.mrb[0].mxu0
      %v960 = vadd.f32 %v303, %v959
      %v961 = vpop.f32.mrb[0].mxu0
      %962 = vmatprep.mubr.bf16.mxu0 %v550
      %963 = vmatmul.mubr.bf16.gmra.mrb[0].mxu0 %v549
      %v964 = vpop.f32.mrb[0].mxu0
      %v965 = vadd.f32 %v303, %v964
      %v966 = vpop.f32.mrb[0].mxu0
      %v967 = vpop.f32.mrb[0].mxu0
      %v968 = vadd.f32 %v303, %v967
      %v969 = vpop.f32.mrb[0].mxu0
      %970 = vmatprep.mubr.bf16.mxu0 %v554
      %971 = vmatmul.mubr.bf16.gmra.mrb[0].mxu0 %v553
      %v972 = vpop.f32.mrb[0].mxu0
      %v973 = vadd.f32 %v303, %v972
      %v974 = vpop.f32.mrb[0].mxu0
      %v975 = vpop.f32.mrb[0].mxu0
      %v976 = vadd.f32 %v303, %v975
      %v977 = vpop.f32.mrb[0].mxu0
      %978 = vmatprep.mubr.bf16.mxu0 %v558
      %979 = vmatmul.mubr.bf16.gmra.mrb[0].mxu0 %v557
      %v980 = vpop.f32.mrb[0].mxu0
      %v981 = vadd.f32 %v303, %v980
      %v982 = vpop.f32.mrb[0].mxu0
      %v983 = vpop.f32.mrb[0].mxu0
      %v984 = vadd.f32 %v303, %v983
      %v985 = vpop.f32.mrb[0].mxu0
      %986 = vdwg.mxu0
      %987 = vmatprep.subr.bf16.mxu0 0
      %988 = vmatpush1.bf16.msra.mxu0 %v737
      %989 = vmatprep.subr.bf16.mxu0 0
      %990 = vmatpush1.bf16.msra.mxu0 %v738
      %991 = vmatprep.subr.bf16.mxu0 0
      %992 = vmatpush1.bf16.msra.mxu0 %v739
      %993 = vmatprep.subr.bf16.mxu0 0
      %994 = vmatpush1.bf16.msra.mxu0 %v740
      %995 = vmatprep.subr.bf16.mxu0 0
      %996 = vmatpush1.bf16.msra.mxu0 %v741
      %997 = vmatprep.subr.bf16.mxu0 0
      %998 = vmatpush1.bf16.msra.mxu0 %v742
      %999 = vmatprep.subr.bf16.mxu0 0
      %1000 = vmatpush1.bf16.msra.mxu0 %v743
      %1001 = vmatprep.subr.bf16.mxu0 0
      %1002 = vmatpush1.bf16.msra.mxu0 %v744
      %1003 = vmatprep.subr.bf16.mxu0 0
      %1004 = vmatpush1.bf16.msra.mxu0 %v745
      %1005 = vmatprep.subr.bf16.mxu0 0
      %1006 = vmatpush1.bf16.msra.mxu0 %v746
      %1007 = vmatprep.subr.bf16.mxu0 0
      %1008 = vmatpush1.bf16.msra.mxu0 %v747
      %1009 = vmatprep.subr.bf16.mxu0 0
      %1010 = vmatpush1.bf16.msra.mxu0 %v748
      %1011 = vmatprep.subr.bf16.mxu0 0
      %1012 = vmatpush1.bf16.msra.mxu0 0
      %1013 = vmatprep.subr.bf16.mxu0 0
      %1014 = vmatpush1.bf16.msra.mxu0 0
      %1015 = vmatprep.subr.bf16.mxu0 0
      %1016 = vmatpush1.bf16.msra.mxu0 0
      %1017 = vmatprep.subr.bf16.mxu0 0
      %1018 = vmatpush1.bf16.msra.mxu0 0
      %1019 = vmatprep.mubr.bf16.mxu0 %v779
      %1020 = vmatmul.mubr.bf16.gmra.mrb[0].mxu0 %v499
      %v1021 = vpop.f32.mrb[0].mxu0
      %v1022 = vadd.f32 %v861, %v1021
      %v1023 = vpop.f32.mrb[0].mxu0
      %v1024 = vpop.f32.mrb[0].mxu0
      %v1025 = vadd.f32 %v864, %v1024
      %v1026 = vpop.f32.mrb[0].mxu0
      %1027 = vmatprep.mubr.bf16.mxu0 %v782
      %1028 = vmatmul.mubr.bf16.gmra.mrb[0].mxu0 %v503
      %v1029 = vpop.f32.mrb[0].mxu0
      %v1030 = vadd.f32 %v869, %v1029
      %v1031 = vpop.f32.mrb[0].mxu0
      %v1032 = vpop.f32.mrb[0].mxu0
      %v1033 = vadd.f32 %v872, %v1032
      %v1034 = vpop.f32.mrb[0].mxu0
      %1035 = vmatprep.mubr.bf16.mxu0 %v785
      %1036 = vmatmul.mubr.bf16.gmra.mrb[0].mxu0 %v507
      %v1037 = vpop.f32.mrb[0].mxu0
      %v1038 = vadd.f32 %v877, %v1037
      %v1039 = vpop.f32.mrb[0].mxu0
      %v1040 = vpop.f32.mrb[0].mxu0
      %v1041 = vadd.f32 %v880, %v1040
      %v1042 = vpop.f32.mrb[0].mxu0
      %1043 = vmatprep.mubr.bf16.mxu0 %v788
      %1044 = vmatmul.mubr.bf16.gmra.mrb[0].mxu0 %v511
      %v1045 = vpop.f32.mrb[0].mxu0
      %v1046 = vadd.f32 %v885, %v1045
      %v1047 = vpop.f32.mrb[0].mxu0
      %v1048 = vpop.f32.mrb[0].mxu0
      %v1049 = vadd.f32 %v888, %v1048
      %v1050 = vpop.f32.mrb[0].mxu0
      %1051 = vmatprep.mubr.bf16.mxu0 %v791
      %1052 = vmatmul.mubr.bf16.gmra.mrb[0].mxu0 %v515
      %v1053 = vpop.f32.mrb[0].mxu0
      %v1054 = vadd.f32 %v893, %v1053
      %v1055 = vpop.f32.mrb[0].mxu0
      %v1056 = vpop.f32.mrb[0].mxu0
      %v1057 = vadd.f32 %v896, %v1056
      %v1058 = vpop.f32.mrb[0].mxu0
      %1059 = vmatprep.mubr.bf16.mxu0 %v794
      %1060 = vmatmul.mubr.bf16.gmra.mrb[0].mxu0 %v519
      %v1061 = vpop.f32.mrb[0].mxu0
      %v1062 = vadd.f32 %v901, %v1061
      %v1063 = vpop.f32.mrb[0].mxu0
      %v1064 = vpop.f32.mrb[0].mxu0
      %v1065 = vadd.f32 %v904, %v1064
      %v1066 = vpop.f32.mrb[0].mxu0
      %1067 = vmatprep.mubr.bf16.mxu0 %v797
      %1068 = vmatmul.mubr.bf16.gmra.mrb[0].mxu0 %v523
      %v1069 = vpop.f32.mrb[0].mxu0
      %v1070 = vadd.f32 %v909, %v1069
      %v1071 = vpop.f32.mrb[0].mxu0
      %v1072 = vpop.f32.mrb[0].mxu0
      %v1073 = vadd.f32 %v912, %v1072
      %v1074 = vpop.f32.mrb[0].mxu0
      %1075 = vmatprep.mubr.bf16.mxu0 %v800
      %1076 = vmatmul.mubr.bf16.gmra.mrb[0].mxu0 %v527
      %v1077 = vpop.f32.mrb[0].mxu0
      %v1078 = vadd.f32 %v917, %v1077
      %v1079 = vpop.f32.mrb[0].mxu0
      %v1080 = vpop.f32.mrb[0].mxu0
      %v1081 = vadd.f32 %v920, %v1080
      %v1082 = vpop.f32.mrb[0].mxu0
      %1083 = vmatprep.mubr.bf16.mxu0 %v803
      %1084 = vmatmul.mubr.bf16.gmra.mrb[0].mxu0 %v531
      %v1085 = vpop.f32.mrb[0].mxu0
      %v1086 = vadd.f32 %v925, %v1085
      %v1087 = vpop.f32.mrb[0].mxu0
      %v1088 = vpop.f32.mrb[0].mxu0
      %v1089 = vadd.f32 %v928, %v1088
      %v1090 = vpop.f32.mrb[0].mxu0
      %1091 = vmatprep.mubr.bf16.mxu0 %v806
      %1092 = vmatmul.mubr.bf16.gmra.mrb[0].mxu0 %v535
      %v1093 = vpop.f32.mrb[0].mxu0
      %v1094 = vadd.f32 %v933, %v1093
      %v1095 = vpop.f32.mrb[0].mxu0
      %v1096 = vpop.f32.mrb[0].mxu0
      %v1097 = vadd.f32 %v936, %v1096
      %v1098 = vpop.f32.mrb[0].mxu0
      %1099 = vmatprep.mubr.bf16.mxu0 %v809
      %1100 = vmatmul.mubr.bf16.gmra.mrb[0].mxu0 %v539
      %v1101 = vpop.f32.mrb[0].mxu0
      %v1102 = vadd.f32 %v941, %v1101
      %v1103 = vpop.f32.mrb[0].mxu0
      %v1104 = vpop.f32.mrb[0].mxu0
      %v1105 = vadd.f32 %v944, %v1104
      %v1106 = vpop.f32.mrb[0].mxu0
      %1107 = vmatprep.mubr.bf16.mxu0 %v812
      %1108 = vmatmul.mubr.bf16.gmra.mrb[0].mxu0 %v543
      %v1109 = vpop.f32.mrb[0].mxu0
      %v1110 = vadd.f32 %v949, %v1109
      %v1111 = vpop.f32.mrb[0].mxu0
      %v1112 = vpop.f32.mrb[0].mxu0
      %v1113 = vadd.f32 %v952, %v1112
      %v1114 = vpop.f32.mrb[0].mxu0
      %1115 = vmatprep.mubr.bf16.mxu0 %v815
      %1116 = vmatmul.mubr.bf16.gmra.mrb[0].mxu0 %v547
      %v1117 = vpop.f32.mrb[0].mxu0
      %v1118 = vadd.f32 %v957, %v1117
      %v1119 = vpop.f32.mrb[0].mxu0
      %v1120 = vpop.f32.mrb[0].mxu0
      %v1121 = vadd.f32 %v960, %v1120
      %v1122 = vpop.f32.mrb[0].mxu0
      %1123 = vmatprep.mubr.bf16.mxu0 %v818
      %1124 = vmatmul.mubr.bf16.gmra.mrb[0].mxu0 %v551
      %v1125 = vpop.f32.mrb[0].mxu0
      %v1126 = vadd.f32 %v965, %v1125
      %v1127 = vpop.f32.mrb[0].mxu0
      %v1128 = vpop.f32.mrb[0].mxu0
      %v1129 = vadd.f32 %v968, %v1128
      %v1130 = vpop.f32.mrb[0].mxu0
      %1131 = vmatprep.mubr.bf16.mxu0 %v821
      %1132 = vmatmul.mubr.bf16.gmra.mrb[0].mxu0 %v555
      %v1133 = vpop.f32.mrb[0].mxu0
      %v1134 = vadd.f32 %v973, %v1133
      %v1135 = vpop.f32.mrb[0].mxu0
      %v1136 = vpop.f32.mrb[0].mxu0
      %v1137 = vadd.f32 %v976, %v1136
      %v1138 = vpop.f32.mrb[0].mxu0
      %1139 = vmatprep.mubr.bf16.mxu0 %v824
      %1140 = vmatmul.mubr.bf16.gmra.mrb[0].mxu0 %v559
      %v1141 = vpop.f32.mrb[0].mxu0
      %v1142 = vadd.f32 %v981, %v1141
      %v1143 = vpop.f32.mrb[0].mxu0
      %v1144 = vpop.f32.mrb[0].mxu0
      %v1145 = vadd.f32 %v984, %v1144
      %v1146 = vpop.f32.mrb[0].mxu0
      %1147 = vdwg.mxu0
      %v1148 = vmax.f32 %v1022, 0.0
      %v1149 = vmax.f32 %v1025, 0.0
      %v1150 = vmax.f32 %v1030, 0.0
      %v1151 = vmax.f32 %v1033, 0.0
      %v1152 = vmax.f32 %v1038, 0.0
      %v1153 = vmax.f32 %v1041, 0.0
      %v1154 = vmax.f32 %v1046, 0.0
      %v1155 = vmax.f32 %v1049, 0.0
      %v1156 = vmax.f32 %v1054, 0.0
      %v1157 = vmax.f32 %v1057, 0.0
      %v1158 = vmax.f32 %v1062, 0.0
      %v1159 = vmax.f32 %v1065, 0.0
      %v1160 = vmax.f32 %v1070, 0.0
      %v1161 = vmax.f32 %v1073, 0.0
      %v1162 = vmax.f32 %v1078, 0.0
      %v1163 = vmax.f32 %v1081, 0.0
      %v1164 = vmax.f32 %v1086, 0.0
      %v1165 = vmax.f32 %v1089, 0.0
      %v1166 = vmax.f32 %v1094, 0.0
      %v1167 = vmax.f32 %v1097, 0.0
      %v1168 = vmax.f32 %v1102, 0.0
      %v1169 = vmax.f32 %v1105, 0.0
      %v1170 = vmax.f32 %v1110, 0.0
      %v1171 = vmax.f32 %v1113, 0.0
      %v1172 = vmax.f32 %v1118, 0.0
      %v1173 = vmax.f32 %v1121, 0.0
      %v1174 = vmax.f32 %v1126, 0.0
      %v1175 = vmax.f32 %v1129, 0.0
      %v1176 = vmax.f32 %v1134, 0.0
      %v1177 = vmax.f32 %v1137, 0.0
      %v1178 = vmax.f32 %v1142, 0.0
      %v1179 = vmax.f32 %v1145, 0.0
      %v1180 = vpack.c.bf16 %v1149, %v1148
      %v1181 = vpack.c.bf16 %v1151, %v1150
      %v1182 = vpack.c.bf16 %v1153, %v1152
      %v1183 = vpack.c.bf16 %v1155, %v1154
      %v1184 = vpack.c.bf16 %v1157, %v1156
      %v1185 = vpack.c.bf16 %v1159, %v1158
      %v1186 = vpack.c.bf16 %v1161, %v1160
      %v1187 = vpack.c.bf16 %v1163, %v1162
      %v1188 = vpack.c.bf16 %v1165, %v1164
      %v1189 = vpack.c.bf16 %v1167, %v1166
      %v1190 = vpack.c.bf16 %v1169, %v1168
      %v1191 = vpack.c.bf16 %v1171, %v1170
      %v1192 = vpack.c.bf16 %v1173, %v1172
      %v1193 = vpack.c.bf16 %v1175, %v1174
      %v1194 = vpack.c.bf16 %v1177, %v1176
      %v1195 = vpack.c.bf16 %v1179, %v1178
      %v1212 = vunpack.c.l.b16 %v1180
      %v1213 = vunpack.c.h.b16 %v1180
      %v1214 = vunpack.c.l.b16 %v1181
      %v1215 = vunpack.c.h.b16 %v1181
      %v1216 = vunpack.c.l.b16 %v1182
      %v1217 = vunpack.c.h.b16 %v1182
      %v1218 = vunpack.c.l.b16 %v1183
      %v1219 = vunpack.c.h.b16 %v1183
      %v1220 = vunpack.c.l.b16 %v1184
      %v1221 = vunpack.c.h.b16 %v1184
      %v1222 = vunpack.c.l.b16 %v1185
      %v1223 = vunpack.c.h.b16 %v1185
      %v1224 = vunpack.c.l.b16 %v1186
      %v1225 = vunpack.c.h.b16 %v1186
      %v1226 = vunpack.c.l.b16 %v1187
      %v1227 = vunpack.c.h.b16 %v1187
      %v1228 = vunpack.c.l.b16 %v1188
      %v1229 = vunpack.c.h.b16 %v1188
      %v1230 = vunpack.c.l.b16 %v1189
      %v1231 = vunpack.c.h.b16 %v1189
      %v1232 = vunpack.c.l.b16 %v1190
      %v1233 = vunpack.c.h.b16 %v1190
      %v1234 = vunpack.c.l.b16 %v1191
      %v1235 = vunpack.c.h.b16 %v1191
      %v1236 = vunpack.c.l.b16 %v1192
      %v1237 = vunpack.c.h.b16 %v1192
      %v1238 = vunpack.c.l.b16 %v1193
      %v1239 = vunpack.c.h.b16 %v1193
      %v1240 = vunpack.c.l.b16 %v1194
      %v1241 = vunpack.c.h.b16 %v1194
      %v1242 = vunpack.c.l.b16 %v1195
      %v1243 = vunpack.c.h.b16 %v1195
      %v1244 = vpack.c.b16 %v1212, %v1212
      %v1245 = vpack.c.b16 %v1213, %v1213
      %v1246 = vpack.c.b16 %v1214, %v1214
      %v1247 = vpack.c.b16 %v1215, %v1215
      %v1248 = vpack.c.b16 %v1216, %v1216
      %v1249 = vpack.c.b16 %v1217, %v1217
      %v1250 = vpack.c.b16 %v1218, %v1218
      %v1251 = vpack.c.b16 %v1219, %v1219
      %v1252 = vpack.c.b16 %v1220, %v1220
      %v1253 = vpack.c.b16 %v1221, %v1221
      %v1254 = vpack.c.b16 %v1222, %v1222
      %v1255 = vpack.c.b16 %v1223, %v1223
      %v1256 = vpack.c.b16 %v1224, %v1224
      %v1257 = vpack.c.b16 %v1225, %v1225
      %v1258 = vpack.c.b16 %v1226, %v1226
      %v1259 = vpack.c.b16 %v1227, %v1227
      %v1260 = vpack.c.b16 %v1228, %v1228
      %v1261 = vpack.c.b16 %v1229, %v1229
      %v1262 = vpack.c.b16 %v1230, %v1230
      %v1263 = vpack.c.b16 %v1231, %v1231
      %v1264 = vpack.c.b16 %v1232, %v1232
      %v1265 = vpack.c.b16 %v1233, %v1233
      %v1266 = vpack.c.b16 %v1234, %v1234
      %v1267 = vpack.c.b16 %v1235, %v1235
      %v1268 = vpack.c.b16 %v1236, %v1236
      %v1269 = vpack.c.b16 %v1237, %v1237
      %v1270 = vpack.c.b16 %v1238, %v1238
      %v1271 = vpack.c.b16 %v1239, %v1239
      %v1272 = vpack.c.b16 %v1240, %v1240
      %v1273 = vpack.c.b16 %v1241, %v1241
      %v1274 = vpack.c.b16 %v1242, %v1242
      %v1275 = vpack.c.b16 %v1243, %v1243
      %1308 = vst [vmem:[%s175] sm:$0xf] %v1244
      %1309 = vst [vmem:[%s175 + $0x4] sm:$0xf] %v1245
      %1310 = vst [vmem:[%s175 + $0x8] sm:$0xf] %v1246
      %1311 = vst [vmem:[%s175 + $0xc] sm:$0xf] %v1247
      %1312 = vst [vmem:[%s175 + $0x10] sm:$0xf] %v1248
      %1313 = vst [vmem:[%s175 + $0x14] sm:$0xf] %v1249
      %1314 = vst [vmem:[%s175 + $0x18] sm:$0xf] %v1250
      %1315 = vst [vmem:[%s175 + $0x1c] sm:$0xf] %v1251
      %1316 = vst [vmem:[%s175 + $0x20] sm:$0xf] %v1252
      %1317 = vst [vmem:[%s175 + $0x24] sm:$0xf] %v1253
      %1318 = vst [vmem:[%s175 + $0x28] sm:$0xf] %v1254
      %1319 = vst [vmem:[%s175 + $0x2c] sm:$0xf] %v1255
      %1320 = vst [vmem:[%s175 + $0x30] sm:$0xf] %v1256
      %1321 = vst [vmem:[%s175 + $0x34] sm:$0xf] %v1257
      %1322 = vst [vmem:[%s175 + $0x38] sm:$0xf] %v1258
      %1323 = vst [vmem:[%s175 + $0x3c] sm:$0xf] %v1259
      %1324 = vst [vmem:[%s175 + $0x40] sm:$0xf] %v1260
      %1325 = vst [vmem:[%s175 + $0x44] sm:$0xf] %v1261
      %1326 = vst [vmem:[%s175 + $0x48] sm:$0xf] %v1262
      %1327 = vst [vmem:[%s175 + $0x4c] sm:$0xf] %v1263
      %1328 = vst [vmem:[%s175 + $0x50] sm:$0xf] %v1264
      %1329 = vst [vmem:[%s175 + $0x54] sm:$0xf] %v1265
      %1330 = vst [vmem:[%s175 + $0x58] sm:$0xf] %v1266
      %1331 = vst [vmem:[%s175 + $0x5c] sm:$0xf] %v1267
      %1332 = vst [vmem:[%s175 + $0x60] sm:$0xf] %v1268
      %1333 = vst [vmem:[%s175 + $0x64] sm:$0xf] %v1269
      %1334 = vst [vmem:[%s175 + $0x68] sm:$0xf] %v1270
      %1335 = vst [vmem:[%s175 + $0x6c] sm:$0xf] %v1271
      %1336 = vst [vmem:[%s175 + $0x70] sm:$0xf] %v1272
      %1337 = vst [vmem:[%s175 + $0x74] sm:$0xf] %v1273
      %1338 = vst [vmem:[%s175 + $0x78] sm:$0xf] %v1274
      %1339 = vst [vmem:[%s175 + $0x7c] sm:$0xf] %v1275
      %s1340 = smul.u32 32, %s14
      %p1341 = scmp.lt.s32.totalorder %s1340, 63
      %s1342 = scalar_select %p1341, %s1340, 63
      %s1343 = smul.addr %s1342, 4
      %s1344 = scalar_lea.vmem %s3, %s1343
      // Predicated region
      $region33: #{inception_d_forward.9} parent=31 // pred_check
        %p1345 = pneg %p100
      $region34: #{inception_d_forward.9} parent=31 // pred_check_branch
        %1347 = sbr.rel (%p1345) target = $region36
      $region35: #{inception_d_forward.9} parent=31 // pred_region
        %s1348 = smul.u32 32, %s14
      $region36: #{inception_d_forward.9} parent=31 // pred_fallthru
        _
    $region32: #{inception_d_forward.9} parent=5 // pred_fallthru
      _
    %p1349 = scmp.le.s32.totalorder 2, %s9
    // Predicated region
    $region37: #{inception_d_forward.9} parent=5 // pred_check
      %p1350 = pneg %p1349
    $region38: #{inception_d_forward.9} parent=5 // pred_check_branch
      %1352 = sbr.rel (%p1350) target = $region40
    $region39: #{inception_d_forward.9} parent=5 // pred_region
      %s1353 = ssub.s32 %s9, 2
      // Predicated region
      $region41: #{inception_d_forward.9} parent=39 // pred_check
        %p1354 = pneg %p106
      $region42: #{inception_d_forward.9} parent=39 // pred_check_branch
        %1356 = sbr.rel (%p1354) target = $region44
      $region43: #{inception_d_forward.9} parent=39 // pred_region
        %s1357 = smul.u32 32, %s15
        %p1358 = scmp.lt.s32.totalorder %s1357, 63
        %s1359 = scalar_select %p1358, %s1357, 63
        %s1360 = smul.addr %s1359, 4
        %s1361 = scalar_lea.vmem %s3, %s1360
      $region44: #{inception_d_forward.9} parent=39 // pred_fallthru
        _
    $region40: #{inception_d_forward.9} parent=5 // pred_fallthru
      _
  $region6: #{inception_d_forward.9} parent=0 // loop_footer
    %s13 = sadd.s32 1, %s9
  $region7: #{inception_d_forward.9} parent=0 // loop_footer_branch
    %8 = sbr.rel target = $region3
  $region8: #{inception_d_forward.9} parent=0 // loop_exit
    _

// kernel: inception_d_forward.10
$region0: #{inception_d_forward.10}
  #allocation0 [shape = 'u32[]', space=smem, size = 0x4, offset = 0x4, fixed_abs, tag = 'smem constant byte address 0x4 - core index']
  #allocation1 [shape = 'u32[144,128]{1,0:T(1,128)}', space=vmem, size = 0x12000, scoped, tag = 'internal scratch']
  %s0 = inlined_call_operand.vmem [shape: bf16[98,1152], index: 0, kind: input, shape index: {}]
  %s1 = inlined_call_operand.vmem [shape: bf16[1152,192], index: 1, kind: input, shape index: {}]
  %s2 = inlined_call_operand.vmem [shape: f32[1,192], index: 2, kind: input, shape index: {}]
  %s3 = inlined_call_operand.vmem [shape: bf16[98,192], index: 3, kind: output, shape index: {}]
  %s4 = sld [smem:[#allocation0]]
  $region93: #{inception_d_forward.10} parent=0
    _
  %s6 = ssub.s32 1, %s4
  %s7 = scalar_select 0, %s6, %s4
  $region1: #{inception_d_forward.10} parent=0
    #allocation2 [shape = 'u8[65536]{0}', space=vmem, size = 0x10000, scoped, tag = 'output window, operand 0']
    loop: start=0, step=1, limit=4
    $region2: #{inception_d_forward.10} parent=1 // loop_pre_header
      _
    $region3: #{inception_d_forward.10} parent=1 // loop_header
      %s9 = sphi 0, %s13
      %p10 = scmp.ge.s32.totalorder %s9, 4
      %s19 = sphi 0, %s21
      %s22 = sphi 0, %s19
      %s23 = sphi 0, %s22
      %s39 = sphi 0, %s23
      %s43 = sphi 0, %s43
      %s45 = sphi 0, %s43
      %s46 = sphi 0, %s45
      %s60 = sphi 0, %s46
      %s64 = sphi 0, %s64
      %s66 = sphi 0, %s64
      %s67 = sphi 0, %s66
      %s81 = sphi 0, %s67
      %s87 = sphi 0, %s89
      %s90 = sphi 0, %s87
      %s91 = sphi 0, %s90
      %s107 = sphi 0, %s91
    $region4: #{inception_d_forward.10} parent=1 // loop_header_branch
      %12 = sbr.rel (%p10) target = $region8
    $region5: #{inception_d_forward.10} parent=1 // loop_body
      %s14 = ssub.s32 %s9, 1
      %s15 = ssub.s32 %s9, 2
      %s16 = sadd.s32 %s9, 1
      %s17 = ssub.s32 %s9, %s16
      %p18 = scmp.eq.s32.totalorder %s17, 0
      %s20 = sadd.s32 %s19, 1
      %s21 = scalar_select %p18, %s19, %s20
      %p24 = pneg %p18
      %p25 = scmp.eq.s32.totalorder %s9, 1
      %p26 = por %p24, %p25
      %p27 = scmp.ne.s32.totalorder %s19, %s22
      %p28 = scmp.eq.s32.totalorder %s9, 0
      %p29 = por %p27, %p28
      %p30 = scmp.ne.s32.totalorder %s19, %s22
      %p31 = scmp.eq.s32.totalorder %s14, 1
      %p32 = por %p30, %p31
      %p33 = scmp.ne.s32.totalorder %s22, %s23
      %p34 = scmp.eq.s32.totalorder %s14, 0
      %p35 = por %p33, %p34
      %p36 = scmp.ne.s32.totalorder %s22, %s23
      %p37 = scmp.eq.s32.totalorder %s15, 1
      %p38 = por %p36, %p37
      %p40 = scmp.ne.s32.totalorder %s23, %s39
      %p41 = scmp.eq.s32.totalorder %s15, 0
      %p42 = por %p40, %p41
      %s44 = sadd.s32 %s43, 1
      %p47 = scmp.eq.s32.totalorder %s9, 1
      %p48 = scmp.ne.s32.totalorder %s43, %s45
      %p49 = scmp.eq.s32.totalorder %s9, 0
      %p50 = por %p48, %p49
      %p51 = scmp.ne.s32.totalorder %s43, %s45
      %p52 = scmp.eq.s32.totalorder %s14, 1
      %p53 = por %p51, %p52
      %p54 = scmp.ne.s32.totalorder %s45, %s46
      %p55 = scmp.eq.s32.totalorder %s14, 0
      %p56 = por %p54, %p55
      %p57 = scmp.ne.s32.totalorder %s45, %s46
      %p58 = scmp.eq.s32.totalorder %s15, 1
      %p59 = por %p57, %p58
      %p61 = scmp.ne.s32.totalorder %s46, %s60
      %p62 = scmp.eq.s32.totalorder %s15, 0
      %p63 = por %p61, %p62
      %s65 = sadd.s32 %s64, 1
      %p68 = scmp.eq.s32.totalorder %s9, 1
      %p69 = scmp.ne.s32.totalorder %s64, %s66
      %p70 = scmp.eq.s32.totalorder %s9, 0
      %p71 = por %p69, %p70
      %p72 = scmp.ne.s32.totalorder %s64, %s66
      %p73 = scmp.eq.s32.totalorder %s14, 1
      %p74 = por %p72, %p73
      %p75 = scmp.ne.s32.totalorder %s66, %s67
      %p76 = scmp.eq.s32.totalorder %s14, 0
      %p77 = por %p75, %p76
      %p78 = scmp.ne.s32.totalorder %s66, %s67
      %p79 = scmp.eq.s32.totalorder %s15, 1
      %p80 = por %p78, %p79
      %p82 = scmp.ne.s32.totalorder %s67, %s81
      %p83 = scmp.eq.s32.totalorder %s15, 0
      %p84 = por %p82, %p83
      %s85 = ssub.s32 %s9, %s16
      %p86 = scmp.eq.s32.totalorder %s85, 0
      %s88 = sadd.s32 %s87, 1
      %s89 = scalar_select %p86, %s87, %s88
      %p92 = pneg %p86
      %p93 = scmp.eq.s32.totalorder %s9, 1
      %p94 = por %p92, %p93
      %p95 = scmp.ne.s32.totalorder %s87, %s90
      %p96 = scmp.eq.s32.totalorder %s9, 0
      %p97 = por %p95, %p96
      %p98 = scmp.ne.s32.totalorder %s87, %s90
      %p99 = scmp.eq.s32.totalorder %s14, 1
      %p100 = por %p98, %p99
      %p101 = scmp.ne.s32.totalorder %s90, %s91
      %p102 = scmp.eq.s32.totalorder %s14, 0
      %p103 = por %p101, %p102
      %p104 = scmp.ne.s32.totalorder %s90, %s91
      %p105 = scmp.eq.s32.totalorder %s15, 1
      %p106 = por %p104, %p105
      %p108 = scmp.ne.s32.totalorder %s91, %s107
      %p109 = scmp.eq.s32.totalorder %s15, 0
      %p110 = por %p108, %p109
      %p111 = scmp.le.s32.totalorder 1, %s9
      %p112 = scmp.lt.s32.totalorder %s9, 3
      %p113 = pnand %p111, %p112
      %p114 = pneg %p113
      // Predicated region
      $region9: #{inception_d_forward.10} parent=5 // pred_check
        _
      $region10: #{inception_d_forward.10} parent=5 // pred_check_branch
        %116 = sbr.rel (%p113) target = $region12
      $region11: #{inception_d_forward.10} parent=5 // pred_region
        %s117 = ssub.s32 %s9, 1
        // Predicated region
        $region13: #{inception_d_forward.10} parent=11 // pred_check
          %p118 = pneg %p56
        $region14: #{inception_d_forward.10} parent=11 // pred_check_branch
          %120 = sbr.rel (%p118) target = $region16
        $region15: #{inception_d_forward.10} parent=11 // pred_region
          _
        $region16: #{inception_d_forward.10} parent=11 // pred_fallthru
          _
        // Predicated region
        $region17: #{inception_d_forward.10} parent=11 // pred_check
          %p121 = pneg %p77
        $region18: #{inception_d_forward.10} parent=11 // pred_check_branch
          %123 = sbr.rel (%p121) target = $region20
        $region19: #{inception_d_forward.10} parent=11 // pred_region
          _
        $region20: #{inception_d_forward.10} parent=11 // pred_fallthru
          _
      $region12: #{inception_d_forward.10} parent=5 // pred_fallthru
        _
      %p124 = scmp.lt.s32.totalorder %s9, 2
      // Predicated region
      $region21: #{inception_d_forward.10} parent=5 // pred_check
        %p125 = pneg %p124
      $region22: #{inception_d_forward.10} parent=5 // pred_check_branch
        %127 = sbr.rel (%p125) target = $region24
      $region23: #{inception_d_forward.10} parent=5 // pred_region
        // Predicated region
        $region25: #{inception_d_forward.10} parent=23 // pred_check
          %p128 = pneg %p29
        $region26: #{inception_d_forward.10} parent=23 // pred_check_branch
          %130 = sbr.rel (%p128) target = $region28
        $region27: #{inception_d_forward.10} parent=23 // pred_region
          %s131 = smul.u32 8, %s9
          %s132 = ssub.s32 13, %s131
          %p133 = scmp.lt.s32.totalorder %s132, 8
          %s134 = scalar_select %p133, %s132, 8
          %s135 = smul.u32 64, %s134
          %s136 = smul.u32 %s135, 9
          %p137 = scmp.lt.s32.totalorder %s131, 12
          %s138 = scalar_select %p137, %s131, 12
          %s139 = smul.addr %s138, 9
          %s140 = smul.addr %s139, 4
          %s141 = scalar_lea.vmem %s0, %s140
          %s142 = smul.u32 8, %s9
          %s143 = ssub.s32 13, %s142
          %p144 = scmp.lt.s32.totalorder %s143, 8
          %s145 = scalar_select %p144, %s143, 8
          %s146 = smul.u32 64, %s145
          %s147 = smul.u32 %s146, 9
        $region28: #{inception_d_forward.10} parent=23 // pred_fallthru
          _
      $region24: #{inception_d_forward.10} parent=5 // pred_fallthru
        _
      %p148 = scmp.le.s32.totalorder 1, %s9
      %p149 = scmp.lt.s32.totalorder %s9, 3
      %p150 = pnand %p148, %p149
      %p151 = pneg %p150
      // Predicated region
      $region29: #{inception_d_forward.10} parent=5 // pred_check
        _
      $region30: #{inception_d_forward.10} parent=5 // pred_check_branch
        %153 = sbr.rel (%p150) target = $region32
      $region31: #{inception_d_forward.10} parent=5 // pred_region
        %s154 = ssub.s32 %s9, 1
        %s155 = smul.u32 8, %s14
        %s156 = ssub.s32 13, %s155
        %p157 = scmp.lt.s32.totalorder %s156, 8
        %s158 = scalar_select %p157, %s156, 8
        %s159 = smul.u32 64, %s158
        %s160 = smul.u32 %s159, 9
        %p161 = scmp.lt.s32.totalorder %s155, 12
        %s162 = scalar_select %p161, %s155, 12
        %s163 = smul.addr %s162, 9
        %s164 = smul.addr %s163, 4
        %s165 = scalar_lea.vmem %s0, %s164
        %p166 = pneg %p35
        %p167 = pneg %p32
        %p168 = pneg %p56
        %p169 = pneg %p53
        %p170 = pneg %p77
        %p171 = pneg %p74
        %p172 = pneg %p103
        %p173 = pneg %p100
        %s174 = sand.u32 %s90, 1
        %s175 = sand.u32 %s90, 1
        %s176 = smul.addr %s175, 64
        %s177 = scalar_lea.vmem [#allocation2], %s176
        %s178 = smul.u32 8, %s14
        %s179 = ssub.s32 13, %s178
        %p180 = scmp.lt.s32.totalorder %s179, 8
        %s181 = scalar_select %p180, %s179, 8
        %s182 = smul.u32 64, %s181
        %s183 = smul.u32 %s182, 9
        %p184 = scmp.lt.s32.totalorder %s178, 12
        %s185 = scalar_select %p184, %s178, 12
        %s186 = smul.addr %s185, 9
        %s187 = smul.addr %s186, 4
        %s188 = scalar_lea.vmem %s0, %s187
        %s189 = smul.u32 8, %s14
        %s190 = ssub.s32 13, %s189
        %p191 = scmp.lt.s32.totalorder %s190, 8
        %s192 = scalar_select %p191, %s190, 8
        %s193 = smul.u32 64, %s192
        %s194 = smul.u32 %s193, 9
        %s195 = smul.u32 8, %s14
        %s196 = ssub.s32 13, %s195
        %p197 = scmp.lt.s32.totalorder %s196, 8
        %s198 = scalar_select %p197, %s196, 8
        %s199 = smul.u32 64, %s198
        %s200 = smul.u32 %s199, 2
        %v202 = vld [vmem:[%s188] sm:$0xff]
        %v203 = vld [vmem:[%s188 + $0x8] sm:$0xff]
        %v204 = vld [vmem:[%s188 + $0x10] sm:$0xff]
        %v205 = vld [vmem:[%s188 + $0x18] sm:$0xff]
        %v206 = vld [vmem:[%s188 + $0x20] sm:$0xf]
        %v207 = vld [vmem:[%s188 + $0x24] sm:$0xff]
        %v208 = vld [vmem:[%s188 + $0x2c] sm:$0xff]
        %v209 = vld [vmem:[%s188 + $0x34] sm:$0xff]
        %v210 = vld [vmem:[%s188 + $0x3c] sm:$0xff]
        %v211 = vld [vmem:[%s188 + $0x44] sm:$0xf]
        %v212 = vld [vmem:[%s188 + $0x48] sm:$0xff]
        %v213 = vld [vmem:[%s188 + $0x50] sm:$0xff]
        %v214 = vld [vmem:[%s188 + $0x58] sm:$0xff]
        %v215 = vld [vmem:[%s188 + $0x60] sm:$0xff]
        %v216 = vld [vmem:[%s188 + $0x68] sm:$0xf]
        %v217 = vld [vmem:[%s188 + $0x6c] sm:$0xff]
        %v218 = vld [vmem:[%s188 + $0x74] sm:$0xff]
        %v219 = vld [vmem:[%s188 + $0x7c] sm:$0xff]
        %v220 = vld [vmem:[%s188 + $0x84] sm:$0xff]
        %v221 = vld [vmem:[%s188 + $0x8c] sm:$0xf]
        %v222 = vld [vmem:[%s188 + $0x90] sm:$0xff]
        %v223 = vld [vmem:[%s188 + $0x98] sm:$0xff]
        %v224 = vld [vmem:[%s188 + $0xa0] sm:$0xff]
        %v225 = vld [vmem:[%s188 + $0xa8] sm:$0xff]
        %v226 = vld [vmem:[%s188 + $0xb0] sm:$0xf]
        %v227 = vld [vmem:[%s188 + $0xb4] sm:$0xff]
        %v228 = vld [vmem:[%s188 + $0xbc] sm:$0xff]
        %v229 = vld [vmem:[%s188 + $0xc4] sm:$0xff]
        %v230 = vld [vmem:[%s188 + $0xcc] sm:$0xff]
        %v231 = vld [vmem:[%s188 + $0xd4] sm:$0xf]
        %v232 = vld [vmem:[%s188 + $0xd8] sm:$0xff]
        %v233 = vld [vmem:[%s188 + $0xe0] sm:$0xff]
        %v234 = vld [vmem:[%s188 + $0xe8] sm:$0xff]
        %v235 = vld [vmem:[%s188 + $0xf0] sm:$0xff]
        %v236 = vld [vmem:[%s188 + $0xf8] sm:$0xf]
        %v237 = vld [vmem:[%s188 + $0xfc] sm:$0xff]
        %v238 = vld [vmem:[%s188 + $0x104] sm:$0xff]
        %v239 = vld [vmem:[%s188 + $0x10c] sm:$0xff]
        %v240 = vld [vmem:[%s188 + $0x114] sm:$0xff]
        %v241 = vld [vmem:[%s188 + $0x11c] sm:$0xf]
        %v242 = vld [vmem:[%s1] sm:$0xff]
        %v243 = vld [vmem:[%s1 + $0x8] sm:$0xff]
        %v244 = vld [vmem:[%s1 + $0x10] sm:$0xff]
        %v245 = vld [vmem:[%s1 + $0x18] sm:$0xff]
        %v246 = vld [vmem:[%s1 + $0x20] sm:$0xff]
        %v247 = vld [vmem:[%s1 + $0x28] sm:$0xff]
        %v248 = vld [vmem:[%s1 + $0x30] sm:$0xff]
        %v249 = vld [vmem:[%s1 + $0x38] sm:$0xff]
        %v250 = vld [vmem:[%s1 + $0x40] sm:$0xff]
        %v251 = vld [vmem:[%s1 + $0x48] sm:$0xff]
        %v252 = vld [vmem:[%s1 + $0x50] sm:$0xff]
        %v253 = vld [vmem:[%s1 + $0x58] sm:$0xff]
        %v254 = vld [vmem:[%s1 + $0x60] sm:$0xff]
        %v255 = vld [vmem:[%s1 + $0x68] sm:$0xff]
        %v256 = vld [vmem:[%s1 + $0x70] sm:$0xff]
        %v257 = vld [vmem:[%s1 + $0x78] sm:$0xff]
        %v258 = vld [vmem:[%s1 + $0x80] sm:$0xff]
        %v259 = vld [vmem:[%s1 + $0x88] sm:$0xff]
        %v260 = vld [vmem:[%s1 + $0x90] sm:$0xff]
        %v261 = vld [vmem:[%s1 + $0x98] sm:$0xff]
        %v262 = vld [vmem:[%s1 + $0xa0] sm:$0xff]
        %v263 = vld [vmem:[%s1 + $0xa8] sm:$0xff]
        %v264 = vld [vmem:[%s1 + $0xb0] sm:$0xff]
        %v265 = vld [vmem:[%s1 + $0xb8] sm:$0xff]
        %v266 = vld [vmem:[%s1 + $0xc0] sm:$0xff]
        %v267 = vld [vmem:[%s1 + $0xc8] sm:$0xff]
        %v268 = vld [vmem:[%s1 + $0xd0] sm:$0xff]
        %v269 = vld [vmem:[%s1 + $0xd8] sm:$0xff]
        %v270 = vld [vmem:[%s1 + $0xe0] sm:$0xff]
        %v271 = vld [vmem:[%s1 + $0xe8] sm:$0xff]
        %v272 = vld [vmem:[%s1 + $0xf0] sm:$0xff]
        %v273 = vld [vmem:[%s1 + $0xf8] sm:$0xff]
        %v274 = vld [vmem:[%s1 + $0x100] sm:$0xff]
        %v275 = vld [vmem:[%s1 + $0x108] sm:$0xff]
        %v276 = vld [vmem:[%s1 + $0x110] sm:$0xff]
        %v277 = vld [vmem:[%s1 + $0x118] sm:$0xff]
        %v278 = vld [vmem:[%s1 + $0x120] sm:$0xff]
        %v279 = vld [vmem:[%s1 + $0x128] sm:$0xff]
        %v280 = vld [vmem:[%s1 + $0x130] sm:$0xff]
        %v281 = vld [vmem:[%s1 + $0x138] sm:$0xff]
        %v282 = vld [vmem:[%s1 + $0x140] sm:$0xff]
        %v283 = vld [vmem:[%s1 + $0x148] sm:$0xff]
        %v284 = vld [vmem:[%s1 + $0x150] sm:$0xff]
        %v285 = vld [vmem:[%s1 + $0x158] sm:$0xff]
        %v286 = vld [vmem:[%s1 + $0x160] sm:$0xff]
        %v287 = vld [vmem:[%s1 + $0x168] sm:$0xff]
        %v288 = vld [vmem:[%s1 + $0x170] sm:$0xff]
        %v289 = vld [vmem:[%s1 + $0x178] sm:$0xff]
        %v290 = vld [vmem:[%s1 + $0x180] sm:$0xff]
        %v291 = vld [vmem:[%s1 + $0x188] sm:$0xff]
        %v292 = vld [vmem:[%s1 + $0x190] sm:$0xff]
        %v293 = vld [vmem:[%s1 + $0x198] sm:$0xff]
        %v294 = vld [vmem:[%s1 + $0x1a0] sm:$0xff]
        %v295 = vld [vmem:[%s1 + $0x1a8] sm:$0xff]
        %v296 = vld [vmem:[%s1 + $0x1b0] sm:$0xff]
        %v297 = vld [vmem:[%s1 + $0x1b8] sm:$0xff]
        %v298 = vld [vmem:[%s1 + $0x1c0] sm:$0xff]
        %v299 = vld [vmem:[%s1 + $0x1c8] sm:$0xff]
        %v300 = vld [vmem:[%s1 + $0x1d0] sm:$0xff]
        %v301 = vld [vmem:[%s1 + $0x1d8] sm:$0xff]
        %v302 = vld [vmem:[%s1 + $0x1e0] sm:$0xff]
        %v303 = vld [vmem:[%s1 + $0x1e8] sm:$0xff]
        %v304 = vld [vmem:[%s1 + $0x1f0] sm:$0xff]
        %v305 = vld [vmem:[%s1 + $0x1f8] sm:$0xff]
        %v306 = vld [vmem:[%s1 + $0x200] sm:$0xff]
        %v307 = vld [vmem:[%s1 + $0x208] sm:$0xff]
        %v308 = vld [vmem:[%s1 + $0x210] sm:$0xff]
        %v309 = vld [vmem:[%s1 + $0x218] sm:$0xff]
        %v310 = vld [vmem:[%s1 + $0x220] sm:$0xff]
        %v311 = vld [vmem:[%s1 + $0x228] sm:$0xff]
        %v312 = vld [vmem:[%s1 + $0x230] sm:$0xff]
        %v313 = vld [vmem:[%s1 + $0x238] sm:$0xff]
        %v314 = vld [vmem:[%s1 + $0x240] sm:$0xff]
        %v315 = vld [vmem:[%s1 + $0x248] sm:$0xff]
        %v316 = vld [vmem:[%s1 + $0x250] sm:$0xff]
        %v317 = vld [vmem:[%s1 + $0x258] sm:$0xff]
        %v318 = vld [vmem:[%s1 + $0x260] sm:$0xff]
        %v319 = vld [vmem:[%s1 + $0x268] sm:$0xff]
        %v320 = vld [vmem:[%s1 + $0x270] sm:$0xff]
        %v321 = vld [vmem:[%s1 + $0x278] sm:$0xff]
        %v322 = vld [vmem:[%s1 + $0x280] sm:$0xff]
        %v323 = vld [vmem:[%s1 + $0x288] sm:$0xff]
        %v324 = vld [vmem:[%s1 + $0x290] sm:$0xff]
        %v325 = vld [vmem:[%s1 + $0x298] sm:$0xff]
        %v326 = vld [vmem:[%s1 + $0x2a0] sm:$0xff]
        %v327 = vld [vmem:[%s1 + $0x2a8] sm:$0xff]
        %v328 = vld [vmem:[%s1 + $0x2b0] sm:$0xff]
        %v329 = vld [vmem:[%s1 + $0x2b8] sm:$0xff]
        %v330 = vld [vmem:[%s1 + $0x2c0] sm:$0xff]
        %v331 = vld [vmem:[%s1 + $0x2c8] sm:$0xff]
        %v332 = vld [vmem:[%s1 + $0x2d0] sm:$0xff]
        %v333 = vld [vmem:[%s1 + $0x2d8] sm:$0xff]
        %v334 = vld [vmem:[%s1 + $0x2e0] sm:$0xff]
        %v335 = vld [vmem:[%s1 + $0x2e8] sm:$0xff]
        %v336 = vld [vmem:[%s1 + $0x2f0] sm:$0xff]
        %v337 = vld [vmem:[%s1 + $0x2f8] sm:$0xff]
        %v338 = vld [vmem:[%s1 + $0x300] sm:$0xff]
        %v339 = vld [vmem:[%s1 + $0x308] sm:$0xff]
        %v340 = vld [vmem:[%s1 + $0x310] sm:$0xff]
        %v341 = vld [vmem:[%s1 + $0x318] sm:$0xff]
        %v342 = vld [vmem:[%s1 + $0x320] sm:$0xff]
        %v343 = vld [vmem:[%s1 + $0x328] sm:$0xff]
        %v344 = vld [vmem:[%s1 + $0x330] sm:$0xff]
        %v345 = vld [vmem:[%s1 + $0x338] sm:$0xff]
        %v346 = vld [vmem:[%s1 + $0x340] sm:$0xff]
        %v347 = vld [vmem:[%s1 + $0x348] sm:$0xff]
        %v348 = vld [vmem:[%s1 + $0x350] sm:$0xff]
        %v349 = vld [vmem:[%s1 + $0x358] sm:$0xff]
        %v350 = vld [vmem:[%s1 + $0x360] sm:$0xff]
        %v351 = vld [vmem:[%s1 + $0x368] sm:$0xff]
        %v352 = vld [vmem:[%s1 + $0x370] sm:$0xff]
        %v353 = vld [vmem:[%s1 + $0x378] sm:$0xff]
        %v354 = vld [vmem:[%s1 + $0x380] sm:$0xff]
        %v355 = vld [vmem:[%s1 + $0x388] sm:$0xff]
        %v356 = vld [vmem:[%s1 + $0x390] sm:$0xff]
        %v357 = vld [vmem:[%s1 + $0x398] sm:$0xff]
        %v358 = vld [vmem:[%s1 + $0x3a0] sm:$0xff]
        %v359 = vld [vmem:[%s1 + $0x3a8] sm:$0xff]
        %v360 = vld [vmem:[%s1 + $0x3b0] sm:$0xff]
        %v361 = vld [vmem:[%s1 + $0x3b8] sm:$0xff]
        %v362 = vld [vmem:[%s1 + $0x3c0] sm:$0xff]
        %v363 = vld [vmem:[%s1 + $0x3c8] sm:$0xff]
        %v364 = vld [vmem:[%s1 + $0x3d0] sm:$0xff]
        %v365 = vld [vmem:[%s1 + $0x3d8] sm:$0xff]
        %v366 = vld [vmem:[%s1 + $0x3e0] sm:$0xff]
        %v367 = vld [vmem:[%s1 + $0x3e8] sm:$0xff]
        %v368 = vld [vmem:[%s1 + $0x3f0] sm:$0xff]
        %v369 = vld [vmem:[%s1 + $0x3f8] sm:$0xff]
        %v370 = vld [vmem:[%s1 + $0x400] sm:$0xff]
        %v371 = vld [vmem:[%s1 + $0x408] sm:$0xff]
        %v372 = vld [vmem:[%s1 + $0x410] sm:$0xff]
        %v373 = vld [vmem:[%s1 + $0x418] sm:$0xff]
        %v374 = vld [vmem:[%s1 + $0x420] sm:$0xff]
        %v375 = vld [vmem:[%s1 + $0x428] sm:$0xff]
        %v376 = vld [vmem:[%s1 + $0x430] sm:$0xff]
        %v377 = vld [vmem:[%s1 + $0x438] sm:$0xff]
        %v378 = vld [vmem:[%s1 + $0x440] sm:$0xff]
        %v379 = vld [vmem:[%s1 + $0x448] sm:$0xff]
        %v380 = vld [vmem:[%s1 + $0x450] sm:$0xff]
        %v381 = vld [vmem:[%s1 + $0x458] sm:$0xff]
        %v382 = vld [vmem:[%s1 + $0x460] sm:$0xff]
        %v383 = vld [vmem:[%s1 + $0x468] sm:$0xff]
        %v384 = vld [vmem:[%s1 + $0x470] sm:$0xff]
        %v385 = vld [vmem:[%s1 + $0x478] sm:$0xff]
        %v386 = vld [vmem:[%s2] sm:$0x3]
        %v388 = vlaneseq
        %v389 = vshrl.u32 %v388, 7
        %v390 = vsub.s32 0, %v389
        %v391 = vrot.slane %v386, %v390
        %v392 = vlaneseq
        %v393 = vshrl.u32 %v392, 7
        %v394 = vsub.s32 1, %v393
        %v395 = vrot.slane %v386, %v394
        %v438 = vunpack.c.l.b16 %v202
        %v439 = vunpack.c.h.b16 %v202
        %v440 = vunpack.c.l.b16 %v203
        %v441 = vunpack.c.h.b16 %v203
        %v442 = vunpack.c.l.b16 %v204
        %v443 = vunpack.c.h.b16 %v204
        %v444 = vunpack.c.l.b16 %v205
        %v445 = vunpack.c.h.b16 %v205
        %v446 = vunpack.c.l.b16 %v206
        %v447 = vunpack.c.l.b16 %v207
        %v448 = vunpack.c.h.b16 %v207
        %v449 = vunpack.c.l.b16 %v208
        %v450 = vunpack.c.h.b16 %v208
        %v451 = vunpack.c.l.b16 %v209
        %v452 = vunpack.c.h.b16 %v209
        %v453 = vunpack.c.l.b16 %v210
        %v454 = vunpack.c.h.b16 %v210
        %v455 = vunpack.c.l.b16 %v211
        %v456 = vunpack.c.l.b16 %v212
        %v457 = vunpack.c.h.b16 %v212
        %v458 = vunpack.c.l.b16 %v213
        %v459 = vunpack.c.h.b16 %v213
        %v460 = vunpack.c.l.b16 %v214
        %v461 = vunpack.c.h.b16 %v214
        %v462 = vunpack.c.l.b16 %v215
        %v463 = vunpack.c.h.b16 %v215
        %v464 = vunpack.c.l.b16 %v216
        %v465 = vunpack.c.l.b16 %v217
        %v466 = vunpack.c.h.b16 %v217
        %v467 = vunpack.c.l.b16 %v218
        %v468 = vunpack.c.h.b16 %v218
        %v469 = vunpack.c.l.b16 %v219
        %v470 = vunpack.c.h.b16 %v219
        %v471 = vunpack.c.l.b16 %v220
        %v472 = vunpack.c.h.b16 %v220
        %v473 = vunpack.c.l.b16 %v221
        %v474 = vunpack.c.l.b16 %v222
        %v475 = vunpack.c.h.b16 %v222
        %v476 = vunpack.c.l.b16 %v223
        %v477 = vunpack.c.h.b16 %v223
        %v478 = vunpack.c.l.b16 %v224
        %v479 = vunpack.c.h.b16 %v224
        %v480 = vunpack.c.l.b16 %v225
        %v481 = vunpack.c.h.b16 %v225
        %v482 = vunpack.c.l.b16 %v226
        %v483 = vunpack.c.l.b16 %v227
        %v484 = vunpack.c.h.b16 %v227
        %v485 = vunpack.c.l.b16 %v228
        %v486 = vunpack.c.h.b16 %v228
        %v487 = vunpack.c.l.b16 %v229
        %v488 = vunpack.c.h.b16 %v229
        %v489 = vunpack.c.l.b16 %v230
        %v490 = vunpack.c.h.b16 %v230
        %v491 = vunpack.c.l.b16 %v231
        %v492 = vunpack.c.l.b16 %v232
        %v493 = vunpack.c.h.b16 %v232
        %v494 = vunpack.c.l.b16 %v233
        %v495 = vunpack.c.h.b16 %v233
        %v496 = vunpack.c.l.b16 %v234
        %v497 = vunpack.c.h.b16 %v234
        %v498 = vunpack.c.l.b16 %v235
        %v499 = vunpack.c.h.b16 %v235
        %v500 = vunpack.c.l.b16 %v236
        %v501 = vunpack.c.l.b16 %v237
        %v502 = vunpack.c.h.b16 %v237
        %v503 = vunpack.c.l.b16 %v238
        %v504 = vunpack.c.h.b16 %v238
        %v505 = vunpack.c.l.b16 %v239
        %v506 = vunpack.c.h.b16 %v239
        %v507 = vunpack.c.l.b16 %v240
        %v508 = vunpack.c.h.b16 %v240
        %v509 = vunpack.c.l.b16 %v241
        %v510 = vpack.c.b16 %v447, %v438
        %v511 = vpack.c.b16 %v448, %v439
        %v512 = vpack.c.b16 %v449, %v440
        %v513 = vpack.c.b16 %v450, %v441
        %v514 = vpack.c.b16 %v451, %v442
        %v515 = vpack.c.b16 %v452, %v443
        %v516 = vpack.c.b16 %v453, %v444
        %v517 = vpack.c.b16 %v454, %v445
        %v518 = vpack.c.b16 %v455, %v446
        %v519 = vpack.c.b16 %v465, %v456
        %v520 = vpack.c.b16 %v466, %v457
        %v521 = vpack.c.b16 %v467, %v458
        %v522 = vpack.c.b16 %v468, %v459
        %v523 = vpack.c.b16 %v469, %v460
        %v524 = vpack.c.b16 %v470, %v461
        %v525 = vpack.c.b16 %v471, %v462
        %v526 = vpack.c.b16 %v472, %v463
        %v527 = vpack.c.b16 %v473, %v464
        %v528 = vpack.c.b16 %v483, %v474
        %v529 = vpack.c.b16 %v484, %v475
        %v530 = vpack.c.b16 %v485, %v476
        %v531 = vpack.c.b16 %v486, %v477
        %v532 = vpack.c.b16 %v487, %v478
        %v533 = vpack.c.b16 %v488, %v479
        %v534 = vpack.c.b16 %v489, %v480
        %v535 = vpack.c.b16 %v490, %v481
        %v536 = vpack.c.b16 %v491, %v482
        %v537 = vpack.c.b16 %v501, %v492
        %v538 = vpack.c.b16 %v502, %v493
        %v539 = vpack.c.b16 %v503, %v494
        %v540 = vpack.c.b16 %v504, %v495
        %v541 = vpack.c.b16 %v505, %v496
        %v542 = vpack.c.b16 %v506, %v497
        %v543 = vpack.c.b16 %v507, %v498
        %v544 = vpack.c.b16 %v508, %v499
        %v545 = vpack.c.b16 %v509, %v500
        %v726 = vunpack.c.l.b16 %v242
        %v727 = vunpack.c.h.b16 %v242
        %v728 = vunpack.c.l.b16 %v243
        %v729 = vunpack.c.h.b16 %v243
        %v730 = vunpack.c.l.b16 %v244
        %v731 = vunpack.c.h.b16 %v244
        %v732 = vunpack.c.l.b16 %v245
        %v733 = vunpack.c.h.b16 %v245
        %v734 = vunpack.c.l.b16 %v246
        %v735 = vunpack.c.h.b16 %v246
        %v736 = vunpack.c.l.b16 %v247
        %v737 = vunpack.c.h.b16 %v247
        %v738 = vunpack.c.l.b16 %v248
        %v739 = vunpack.c.h.b16 %v248
        %v740 = vunpack.c.l.b16 %v249
        %v741 = vunpack.c.h.b16 %v249
        %v742 = vunpack.c.l.b16 %v250
        %v743 = vunpack.c.h.b16 %v250
        %v744 = vunpack.c.l.b16 %v251
        %v745 = vunpack.c.h.b16 %v251
        %v746 = vunpack.c.l.b16 %v252
        %v747 = vunpack.c.h.b16 %v252
        %v748 = vunpack.c.l.b16 %v253
        %v749 = vunpack.c.h.b16 %v253
        %v750 = vunpack.c.l.b16 %v254
        %v751 = vunpack.c.h.b16 %v254
        %v752 = vunpack.c.l.b16 %v255
        %v753 = vunpack.c.h.b16 %v255
        %v754 = vunpack.c.l.b16 %v256
        %v755 = vunpack.c.h.b16 %v256
        %v756 = vunpack.c.l.b16 %v257
        %v757 = vunpack.c.h.b16 %v257
        %v758 = vunpack.c.l.b16 %v258
        %v759 = vunpack.c.h.b16 %v258
        %v760 = vunpack.c.l.b16 %v259
        %v761 = vunpack.c.h.b16 %v259
        %v762 = vunpack.c.l.b16 %v260
        %v763 = vunpack.c.h.b16 %v260
        %v764 = vunpack.c.l.b16 %v261
        %v765 = vunpack.c.h.b16 %v261
        %v766 = vunpack.c.l.b16 %v262
        %v767 = vunpack.c.h.b16 %v262
        %v768 = vunpack.c.l.b16 %v263
        %v769 = vunpack.c.h.b16 %v263
        %v770 = vunpack.c.l.b16 %v264
        %v771 = vunpack.c.h.b16 %v264
        %v772 = vunpack.c.l.b16 %v265
        %v773 = vunpack.c.h.b16 %v265
        %v774 = vunpack.c.l.b16 %v266
        %v775 = vunpack.c.h.b16 %v266
        %v776 = vunpack.c.l.b16 %v267
        %v777 = vunpack.c.h.b16 %v267
        %v778 = vunpack.c.l.b16 %v268
        %v779 = vunpack.c.h.b16 %v268
        %v780 = vunpack.c.l.b16 %v269
        %v781 = vunpack.c.h.b16 %v269
        %v782 = vunpack.c.l.b16 %v270
        %v783 = vunpack.c.h.b16 %v270
        %v784 = vunpack.c.l.b16 %v271
        %v785 = vunpack.c.h.b16 %v271
        %v786 = vunpack.c.l.b16 %v272
        %v787 = vunpack.c.h.b16 %v272
        %v788 = vunpack.c.l.b16 %v273
        %v789 = vunpack.c.h.b16 %v273
        %v790 = vunpack.c.l.b16 %v274
        %v791 = vunpack.c.h.b16 %v274
        %v792 = vunpack.c.l.b16 %v275
        %v793 = vunpack.c.h.b16 %v275
        %v794 = vunpack.c.l.b16 %v276
        %v795 = vunpack.c.h.b16 %v276
        %v796 = vunpack.c.l.b16 %v277
        %v797 = vunpack.c.h.b16 %v277
        %v798 = vunpack.c.l.b16 %v278
        %v799 = vunpack.c.h.b16 %v278
        %v800 = vunpack.c.l.b16 %v279
        %v801 = vunpack.c.h.b16 %v279
        %v802 = vunpack.c.l.b16 %v280
        %v803 = vunpack.c.h.b16 %v280
        %v804 = vunpack.c.l.b16 %v281
        %v805 = vunpack.c.h.b16 %v281
        %v806 = vunpack.c.l.b16 %v282
        %v807 = vunpack.c.h.b16 %v282
        %v808 = vunpack.c.l.b16 %v283
        %v809 = vunpack.c.h.b16 %v283
        %v810 = vunpack.c.l.b16 %v284
        %v811 = vunpack.c.h.b16 %v284
        %v812 = vunpack.c.l.b16 %v285
        %v813 = vunpack.c.h.b16 %v285
        %v814 = vunpack.c.l.b16 %v286
        %v815 = vunpack.c.h.b16 %v286
        %v816 = vunpack.c.l.b16 %v287
        %v817 = vunpack.c.h.b16 %v287
        %v818 = vunpack.c.l.b16 %v288
        %v819 = vunpack.c.h.b16 %v288
        %v820 = vunpack.c.l.b16 %v289
        %v821 = vunpack.c.h.b16 %v289
        %v822 = vunpack.c.l.b16 %v290
        %v823 = vunpack.c.h.b16 %v290
        %v824 = vunpack.c.l.b16 %v291
        %v825 = vunpack.c.h.b16 %v291
        %v826 = vunpack.c.l.b16 %v292
        %v827 = vunpack.c.h.b16 %v292
        %v828 = vunpack.c.l.b16 %v293
        %v829 = vunpack.c.h.b16 %v293
        %v830 = vunpack.c.l.b16 %v294
        %v831 = vunpack.c.h.b16 %v294
        %v832 = vunpack.c.l.b16 %v295
        %v833 = vunpack.c.h.b16 %v295
        %v834 = vunpack.c.l.b16 %v296
        %v835 = vunpack.c.h.b16 %v296
        %v836 = vunpack.c.l.b16 %v297
        %v837 = vunpack.c.h.b16 %v297
        %v838 = vunpack.c.l.b16 %v298
        %v839 = vunpack.c.h.b16 %v298
        %v840 = vunpack.c.l.b16 %v299
        %v841 = vunpack.c.h.b16 %v299
        %v842 = vunpack.c.l.b16 %v300
        %v843 = vunpack.c.h.b16 %v300
        %v844 = vunpack.c.l.b16 %v301
        %v845 = vunpack.c.h.b16 %v301
        %v846 = vunpack.c.l.b16 %v302
        %v847 = vunpack.c.h.b16 %v302
        %v848 = vunpack.c.l.b16 %v303
        %v849 = vunpack.c.h.b16 %v303
        %v850 = vunpack.c.l.b16 %v304
        %v851 = vunpack.c.h.b16 %v304
        %v852 = vunpack.c.l.b16 %v305
        %v853 = vunpack.c.h.b16 %v305
        %v854 = vunpack.c.l.b16 %v306
        %v855 = vunpack.c.h.b16 %v306
        %v856 = vunpack.c.l.b16 %v307
        %v857 = vunpack.c.h.b16 %v307
        %v858 = vunpack.c.l.b16 %v308
        %v859 = vunpack.c.h.b16 %v308
        %v860 = vunpack.c.l.b16 %v309
        %v861 = vunpack.c.h.b16 %v309
        %v862 = vunpack.c.l.b16 %v310
        %v863 = vunpack.c.h.b16 %v310
        %v864 = vunpack.c.l.b16 %v311
        %v865 = vunpack.c.h.b16 %v311
        %v866 = vunpack.c.l.b16 %v312
        %v867 = vunpack.c.h.b16 %v312
        %v868 = vunpack.c.l.b16 %v313
        %v869 = vunpack.c.h.b16 %v313
        %v870 = vunpack.c.l.b16 %v314
        %v871 = vunpack.c.h.b16 %v314
        %v872 = vunpack.c.l.b16 %v315
        %v873 = vunpack.c.h.b16 %v315
        %v874 = vunpack.c.l.b16 %v316
        %v875 = vunpack.c.h.b16 %v316
        %v876 = vunpack.c.l.b16 %v317
        %v877 = vunpack.c.h.b16 %v317
        %v878 = vunpack.c.l.b16 %v318
        %v879 = vunpack.c.h.b16 %v318
        %v880 = vunpack.c.l.b16 %v319
        %v881 = vunpack.c.h.b16 %v319
        %v882 = vunpack.c.l.b16 %v320
        %v883 = vunpack.c.h.b16 %v320
        %v884 = vunpack.c.l.b16 %v321
        %v885 = vunpack.c.h.b16 %v321
        %v886 = vunpack.c.l.b16 %v322
        %v887 = vunpack.c.h.b16 %v322
        %v888 = vunpack.c.l.b16 %v323
        %v889 = vunpack.c.h.b16 %v323
        %v890 = vunpack.c.l.b16 %v324
        %v891 = vunpack.c.h.b16 %v324
        %v892 = vunpack.c.l.b16 %v325
        %v893 = vunpack.c.h.b16 %v325
        %v894 = vunpack.c.l.b16 %v326
        %v895 = vunpack.c.h.b16 %v326
        %v896 = vunpack.c.l.b16 %v327
        %v897 = vunpack.c.h.b16 %v327
        %v898 = vunpack.c.l.b16 %v328
        %v899 = vunpack.c.h.b16 %v328
        %v900 = vunpack.c.l.b16 %v329
        %v901 = vunpack.c.h.b16 %v329
        %v902 = vunpack.c.l.b16 %v330
        %v903 = vunpack.c.h.b16 %v330
        %v904 = vunpack.c.l.b16 %v331
        %v905 = vunpack.c.h.b16 %v331
        %v906 = vunpack.c.l.b16 %v332
        %v907 = vunpack.c.h.b16 %v332
        %v908 = vunpack.c.l.b16 %v333
        %v909 = vunpack.c.h.b16 %v333
        %v910 = vunpack.c.l.b16 %v334
        %v911 = vunpack.c.h.b16 %v334
        %v912 = vunpack.c.l.b16 %v335
        %v913 = vunpack.c.h.b16 %v335
        %v914 = vunpack.c.l.b16 %v336
        %v915 = vunpack.c.h.b16 %v336
        %v916 = vunpack.c.l.b16 %v337
        %v917 = vunpack.c.h.b16 %v337
        %v918 = vunpack.c.l.b16 %v338
        %v919 = vunpack.c.h.b16 %v338
        %v920 = vunpack.c.l.b16 %v339
        %v921 = vunpack.c.h.b16 %v339
        %v922 = vunpack.c.l.b16 %v340
        %v923 = vunpack.c.h.b16 %v340
        %v924 = vunpack.c.l.b16 %v341
        %v925 = vunpack.c.h.b16 %v341
        %v926 = vunpack.c.l.b16 %v342
        %v927 = vunpack.c.h.b16 %v342
        %v928 = vunpack.c.l.b16 %v343
        %v929 = vunpack.c.h.b16 %v343
        %v930 = vunpack.c.l.b16 %v344
        %v931 = vunpack.c.h.b16 %v344
        %v932 = vunpack.c.l.b16 %v345
        %v933 = vunpack.c.h.b16 %v345
        %v934 = vunpack.c.l.b16 %v346
        %v935 = vunpack.c.h.b16 %v346
        %v936 = vunpack.c.l.b16 %v347
        %v937 = vunpack.c.h.b16 %v347
        %v938 = vunpack.c.l.b16 %v348
        %v939 = vunpack.c.h.b16 %v348
        %v940 = vunpack.c.l.b16 %v349
        %v941 = vunpack.c.h.b16 %v349
        %v942 = vunpack.c.l.b16 %v350
        %v943 = vunpack.c.h.b16 %v350
        %v944 = vunpack.c.l.b16 %v351
        %v945 = vunpack.c.h.b16 %v351
        %v946 = vunpack.c.l.b16 %v352
        %v947 = vunpack.c.h.b16 %v352
        %v948 = vunpack.c.l.b16 %v353
        %v949 = vunpack.c.h.b16 %v353
        %v950 = vunpack.c.l.b16 %v354
        %v951 = vunpack.c.h.b16 %v354
        %v952 = vunpack.c.l.b16 %v355
        %v953 = vunpack.c.h.b16 %v355
        %v954 = vunpack.c.l.b16 %v356
        %v955 = vunpack.c.h.b16 %v356
        %v956 = vunpack.c.l.b16 %v357
        %v957 = vunpack.c.h.b16 %v357
        %v958 = vunpack.c.l.b16 %v358
        %v959 = vunpack.c.h.b16 %v358
        %v960 = vunpack.c.l.b16 %v359
        %v961 = vunpack.c.h.b16 %v359
        %v962 = vunpack.c.l.b16 %v360
        %v963 = vunpack.c.h.b16 %v360
        %v964 = vunpack.c.l.b16 %v361
        %v965 = vunpack.c.h.b16 %v361
        %v966 = vunpack.c.l.b16 %v362
        %v967 = vunpack.c.h.b16 %v362
        %v968 = vunpack.c.l.b16 %v363
        %v969 = vunpack.c.h.b16 %v363
        %v970 = vunpack.c.l.b16 %v364
        %v971 = vunpack.c.h.b16 %v364
        %v972 = vunpack.c.l.b16 %v365
        %v973 = vunpack.c.h.b16 %v365
        %v974 = vunpack.c.l.b16 %v366
        %v975 = vunpack.c.h.b16 %v366
        %v976 = vunpack.c.l.b16 %v367
        %v977 = vunpack.c.h.b16 %v367
        %v978 = vunpack.c.l.b16 %v368
        %v979 = vunpack.c.h.b16 %v368
        %v980 = vunpack.c.l.b16 %v369
        %v981 = vunpack.c.h.b16 %v369
        %v982 = vunpack.c.l.b16 %v370
        %v983 = vunpack.c.h.b16 %v370
        %v984 = vunpack.c.l.b16 %v371
        %v985 = vunpack.c.h.b16 %v371
        %v986 = vunpack.c.l.b16 %v372
        %v987 = vunpack.c.h.b16 %v372
        %v988 = vunpack.c.l.b16 %v373
        %v989 = vunpack.c.h.b16 %v373
        %v990 = vunpack.c.l.b16 %v374
        %v991 = vunpack.c.h.b16 %v374
        %v992 = vunpack.c.l.b16 %v375
        %v993 = vunpack.c.h.b16 %v375
        %v994 = vunpack.c.l.b16 %v376
        %v995 = vunpack.c.h.b16 %v376
        %v996 = vunpack.c.l.b16 %v377
        %v997 = vunpack.c.h.b16 %v377
        %v998 = vunpack.c.l.b16 %v378
        %v999 = vunpack.c.h.b16 %v378
        %v1000 = vunpack.c.l.b16 %v379
        %v1001 = vunpack.c.h.b16 %v379
        %v1002 = vunpack.c.l.b16 %v380
        %v1003 = vunpack.c.h.b16 %v380
        %v1004 = vunpack.c.l.b16 %v381
        %v1005 = vunpack.c.h.b16 %v381
        %v1006 = vunpack.c.l.b16 %v382
        %v1007 = vunpack.c.h.b16 %v382
        %v1008 = vunpack.c.l.b16 %v383
        %v1009 = vunpack.c.h.b16 %v383
        %v1010 = vunpack.c.l.b16 %v384
        %v1011 = vunpack.c.h.b16 %v384
        %v1012 = vunpack.c.l.b16 %v385
        %v1013 = vunpack.c.h.b16 %v385
        %v1014 = vpack.c.b16 %v728, %v726
        %v1015 = vpack.c.b16 %v729, %v727
        %v1016 = vpack.c.b16 %v732, %v730
        %v1017 = vpack.c.b16 %v733, %v731
        %v1018 = vpack.c.b16 %v736, %v734
        %v1019 = vpack.c.b16 %v737, %v735
        %v1020 = vpack.c.b16 %v740, %v738
        %v1021 = vpack.c.b16 %v741, %v739
        %v1022 = vpack.c.b16 %v744, %v742
        %v1023 = vpack.c.b16 %v745, %v743
        %v1024 = vpack.c.b16 %v748, %v746
        %v1025 = vpack.c.b16 %v749, %v747
        %v1026 = vpack.c.b16 %v752, %v750
        %v1027 = vpack.c.b16 %v753, %v751
        %v1028 = vpack.c.b16 %v756, %v754
        %v1029 = vpack.c.b16 %v757, %v755
        %v1030 = vpack.c.b16 %v760, %v758
        %v1031 = vpack.c.b16 %v761, %v759
        %v1032 = vpack.c.b16 %v764, %v762
        %v1033 = vpack.c.b16 %v765, %v763
        %v1034 = vpack.c.b16 %v768, %v766
        %v1035 = vpack.c.b16 %v769, %v767
        %v1036 = vpack.c.b16 %v772, %v770
        %v1037 = vpack.c.b16 %v773, %v771
        %v1038 = vpack.c.b16 %v776, %v774
        %v1039 = vpack.c.b16 %v777, %v775
        %v1040 = vpack.c.b16 %v780, %v778
        %v1041 = vpack.c.b16 %v781, %v779
        %v1042 = vpack.c.b16 %v784, %v782
        %v1043 = vpack.c.b16 %v785, %v783
        %v1044 = vpack.c.b16 %v788, %v786
        %v1045 = vpack.c.b16 %v789, %v787
        %v1046 = vpack.c.b16 %v792, %v790
        %v1047 = vpack.c.b16 %v793, %v791
        %v1048 = vpack.c.b16 %v796, %v794
        %v1049 = vpack.c.b16 %v797, %v795
        %v1050 = vpack.c.b16 %v800, %v798
        %v1051 = vpack.c.b16 %v801, %v799
        %v1052 = vpack.c.b16 %v804, %v802
        %v1053 = vpack.c.b16 %v805, %v803
        %v1054 = vpack.c.b16 %v808, %v806
        %v1055 = vpack.c.b16 %v809, %v807
        %v1056 = vpack.c.b16 %v812, %v810
        %v1057 = vpack.c.b16 %v813, %v811
        %v1058 = vpack.c.b16 %v816, %v814
        %v1059 = vpack.c.b16 %v817, %v815
        %v1060 = vpack.c.b16 %v820, %v818
        %v1061 = vpack.c.b16 %v821, %v819
        %v1062 = vpack.c.b16 %v824, %v822
        %v1063 = vpack.c.b16 %v825, %v823
        %v1064 = vpack.c.b16 %v828, %v826
        %v1065 = vpack.c.b16 %v829, %v827
        %v1066 = vpack.c.b16 %v832, %v830
        %v1067 = vpack.c.b16 %v833, %v831
        %v1068 = vpack.c.b16 %v836, %v834
        %v1069 = vpack.c.b16 %v837, %v835
        %v1070 = vpack.c.b16 %v840, %v838
        %v1071 = vpack.c.b16 %v841, %v839
        %v1072 = vpack.c.b16 %v844, %v842
        %v1073 = vpack.c.b16 %v845, %v843
        %v1074 = vpack.c.b16 %v848, %v846
        %v1075 = vpack.c.b16 %v849, %v847
        %v1076 = vpack.c.b16 %v852, %v850
        %v1077 = vpack.c.b16 %v853, %v851
        %v1078 = vpack.c.b16 %v856, %v854
        %v1079 = vpack.c.b16 %v857, %v855
        %v1080 = vpack.c.b16 %v860, %v858
        %v1081 = vpack.c.b16 %v861, %v859
        %v1082 = vpack.c.b16 %v864, %v862
        %v1083 = vpack.c.b16 %v865, %v863
        %v1084 = vpack.c.b16 %v868, %v866
        %v1085 = vpack.c.b16 %v869, %v867
        %v1086 = vpack.c.b16 %v872, %v870
        %v1087 = vpack.c.b16 %v873, %v871
        %v1088 = vpack.c.b16 %v876, %v874
        %v1089 = vpack.c.b16 %v877, %v875
        %v1090 = vpack.c.b16 %v880, %v878
        %v1091 = vpack.c.b16 %v881, %v879
        %v1092 = vpack.c.b16 %v884, %v882
        %v1093 = vpack.c.b16 %v885, %v883
        %v1094 = vpack.c.b16 %v888, %v886
        %v1095 = vpack.c.b16 %v889, %v887
        %v1096 = vpack.c.b16 %v892, %v890
        %v1097 = vpack.c.b16 %v893, %v891
        %v1098 = vpack.c.b16 %v896, %v894
        %v1099 = vpack.c.b16 %v897, %v895
        %v1100 = vpack.c.b16 %v900, %v898
        %v1101 = vpack.c.b16 %v901, %v899
        %v1102 = vpack.c.b16 %v904, %v902
        %v1103 = vpack.c.b16 %v905, %v903
        %v1104 = vpack.c.b16 %v908, %v906
        %v1105 = vpack.c.b16 %v909, %v907
        %v1106 = vpack.c.b16 %v912, %v910
        %v1107 = vpack.c.b16 %v913, %v911
        %v1108 = vpack.c.b16 %v916, %v914
        %v1109 = vpack.c.b16 %v917, %v915
        %v1110 = vpack.c.b16 %v920, %v918
        %v1111 = vpack.c.b16 %v921, %v919
        %v1112 = vpack.c.b16 %v924, %v922
        %v1113 = vpack.c.b16 %v925, %v923
        %v1114 = vpack.c.b16 %v928, %v926
        %v1115 = vpack.c.b16 %v929, %v927
        %v1116 = vpack.c.b16 %v932, %v930
        %v1117 = vpack.c.b16 %v933, %v931
        %v1118 = vpack.c.b16 %v936, %v934
        %v1119 = vpack.c.b16 %v937, %v935
        %v1120 = vpack.c.b16 %v940, %v938
        %v1121 = vpack.c.b16 %v941, %v939
        %v1122 = vpack.c.b16 %v944, %v942
        %v1123 = vpack.c.b16 %v945, %v943
        %v1124 = vpack.c.b16 %v948, %v946
        %v1125 = vpack.c.b16 %v949, %v947
        %v1126 = vpack.c.b16 %v952, %v950
        %v1127 = vpack.c.b16 %v953, %v951
        %v1128 = vpack.c.b16 %v956, %v954
        %v1129 = vpack.c.b16 %v957, %v955
        %v1130 = vpack.c.b16 %v960, %v958
        %v1131 = vpack.c.b16 %v961, %v959
        %v1132 = vpack.c.b16 %v964, %v962
        %v1133 = vpack.c.b16 %v965, %v963
        %v1134 = vpack.c.b16 %v968, %v966
        %v1135 = vpack.c.b16 %v969, %v967
        %v1136 = vpack.c.b16 %v972, %v970
        %v1137 = vpack.c.b16 %v973, %v971
        %v1138 = vpack.c.b16 %v976, %v974
        %v1139 = vpack.c.b16 %v977, %v975
        %v1140 = vpack.c.b16 %v980, %v978
        %v1141 = vpack.c.b16 %v981, %v979
        %v1142 = vpack.c.b16 %v984, %v982
        %v1143 = vpack.c.b16 %v985, %v983
        %v1144 = vpack.c.b16 %v988, %v986
        %v1145 = vpack.c.b16 %v989, %v987
        %v1146 = vpack.c.b16 %v992, %v990
        %v1147 = vpack.c.b16 %v993, %v991
        %v1148 = vpack.c.b16 %v996, %v994
        %v1149 = vpack.c.b16 %v997, %v995
        %v1150 = vpack.c.b16 %v1000, %v998
        %v1151 = vpack.c.b16 %v1001, %v999
        %v1152 = vpack.c.b16 %v1004, %v1002
        %v1153 = vpack.c.b16 %v1005, %v1003
        %v1154 = vpack.c.b16 %v1008, %v1006
        %v1155 = vpack.c.b16 %v1009, %v1007
        %v1156 = vpack.c.b16 %v1012, %v1010
        %v1157 = vpack.c.b16 %v1013, %v1011
        %1302 = vmatprep.subr.bf16.mxu0 %v1015
        %1303 = vmatpush1.bf16.msra.mxu0 %v1014
        %1304 = vmatprep.subr.bf16.mxu0 %v1017
        %1305 = vmatpush1.bf16.msra.mxu0 %v1016
        %1306 = vmatprep.subr.bf16.mxu0 %v1019
        %1307 = vmatpush1.bf16.msra.mxu0 %v1018
        %1308 = vmatprep.subr.bf16.mxu0 %v1021
        %1309 = vmatpush1.bf16.msra.mxu0 %v1020
        %1310 = vmatprep.subr.bf16.mxu0 %v1023
        %1311 = vmatpush1.bf16.msra.mxu0 %v1022
        %1312 = vmatprep.subr.bf16.mxu0 %v1025
        %1313 = vmatpush1.bf16.msra.mxu0 %v1024
        %1314 = vmatprep.subr.bf16.mxu0 %v1027
        %1315 = vmatpush1.bf16.msra.mxu0 %v1026
        %1316 = vmatprep.subr.bf16.mxu0 %v1029
        %1317 = vmatpush1.bf16.msra.mxu0 %v1028
        %1318 = vmatprep.subr.bf16.mxu0 %v1031
        %1319 = vmatpush1.bf16.msra.mxu0 %v1030
        %1320 = vmatprep.subr.bf16.mxu0 %v1033
        %1321 = vmatpush1.bf16.msra.mxu0 %v1032
        %1322 = vmatprep.subr.bf16.mxu0 %v1035
        %1323 = vmatpush1.bf16.msra.mxu0 %v1034
        %1324 = vmatprep.subr.bf16.mxu0 %v1037
        %1325 = vmatpush1.bf16.msra.mxu0 %v1036
        %1326 = vmatprep.subr.bf16.mxu0 %v1039
        %1327 = vmatpush1.bf16.msra.mxu0 %v1038
        %1328 = vmatprep.subr.bf16.mxu0 %v1041
        %1329 = vmatpush1.bf16.msra.mxu0 %v1040
        %1330 = vmatprep.subr.bf16.mxu0 %v1043
        %1331 = vmatpush1.bf16.msra.mxu0 %v1042
        %1332 = vmatprep.subr.bf16.mxu0 %v1045
        %1333 = vmatpush1.bf16.msra.mxu0 %v1044
        %1334 = vmatprep.mubr.bf16.mxu0 %v511
        %1335 = vmatmul.mubr.bf16.gmra.mrb[0].mxu0 %v510
        %v1336 = vpop.f32.mrb[0].mxu0
        %v1337 = vadd.f32 %v391, %v1336
        %v1338 = vpop.f32.mrb[0].mxu0
        %v1339 = vadd.f32 %v395, %v1338
        %v1340 = vpop.f32.mrb[0].mxu0
        %v1341 = vadd.f32 %v391, %v1340
        %v1342 = vpop.f32.mrb[0].mxu0
        %v1343 = vadd.f32 %v395, %v1342
        %1344 = vmatprep.mubr.bf16.mxu0 %v520
        %1345 = vmatmul.mubr.bf16.gmra.mrb[0].mxu0 %v519
        %v1346 = vpop.f32.mrb[0].mxu0
        %v1347 = vadd.f32 %v391, %v1346
        %v1348 = vpop.f32.mrb[0].mxu0
        %v1349 = vadd.f32 %v395, %v1348
        %v1350 = vpop.f32.mrb[0].mxu0
        %v1351 = vadd.f32 %v391, %v1350
        %v1352 = vpop.f32.mrb[0].mxu0
        %v1353 = vadd.f32 %v395, %v1352
        %1354 = vmatprep.mubr.bf16.mxu0 %v529
        %1355 = vmatmul.mubr.bf16.gmra.mrb[0].mxu0 %v528
        %v1356 = vpop.f32.mrb[0].mxu0
        %v1357 = vadd.f32 %v391, %v1356
        %v1358 = vpop.f32.mrb[0].mxu0
        %v1359 = vadd.f32 %v395, %v1358
        %v1360 = vpop.f32.mrb[0].mxu0
        %v1361 = vadd.f32 %v391, %v1360
        %v1362 = vpop.f32.mrb[0].mxu0
        %v1363 = vadd.f32 %v395, %v1362
        %1364 = vmatprep.mubr.bf16.mxu0 %v538
        %1365 = vmatmul.mubr.bf16.gmra.mrb[0].mxu0 %v537
        %v1366 = vpop.f32.mrb[0].mxu0
        %v1367 = vadd.f32 %v391, %v1366
        %v1368 = vpop.f32.mrb[0].mxu0
        %v1369 = vadd.f32 %v395, %v1368
        %v1370 = vpop.f32.mrb[0].mxu0
        %v1371 = vadd.f32 %v391, %v1370
        %v1372 = vpop.f32.mrb[0].mxu0
        %v1373 = vadd.f32 %v395, %v1372
        %1374 = vdwg.mxu0
        %1375 = vmatprep.subr.bf16.mxu0 %v1047
        %1376 = vmatpush1.bf16.msra.mxu0 %v1046
        %1377 = vmatprep.subr.bf16.mxu0 %v1049
        %1378 = vmatpush1.bf16.msra.mxu0 %v1048
        %1379 = vmatprep.subr.bf16.mxu0 %v1051
        %1380 = vmatpush1.bf16.msra.mxu0 %v1050
        %1381 = vmatprep.subr.bf16.mxu0 %v1053
        %1382 = vmatpush1.bf16.msra.mxu0 %v1052
        %1383 = vmatprep.subr.bf16.mxu0 %v1055
        %1384 = vmatpush1.bf16.msra.mxu0 %v1054
        %1385 = vmatprep.subr.bf16.mxu0 %v1057
        %1386 = vmatpush1.bf16.msra.mxu0 %v1056
        %1387 = vmatprep.subr.bf16.mxu0 %v1059
        %1388 = vmatpush1.bf16.msra.mxu0 %v1058
        %1389 = vmatprep.subr.bf16.mxu0 %v1061
        %1390 = vmatpush1.bf16.msra.mxu0 %v1060
        %1391 = vmatprep.subr.bf16.mxu0 %v1063
        %1392 = vmatpush1.bf16.msra.mxu0 %v1062
        %1393 = vmatprep.subr.bf16.mxu0 %v1065
        %1394 = vmatpush1.bf16.msra.mxu0 %v1064
        %1395 = vmatprep.subr.bf16.mxu0 %v1067
        %1396 = vmatpush1.bf16.msra.mxu0 %v1066
        %1397 = vmatprep.subr.bf16.mxu0 %v1069
        %1398 = vmatpush1.bf16.msra.mxu0 %v1068
        %1399 = vmatprep.subr.bf16.mxu0 %v1071
        %1400 = vmatpush1.bf16.msra.mxu0 %v1070
        %1401 = vmatprep.subr.bf16.mxu0 %v1073
        %1402 = vmatpush1.bf16.msra.mxu0 %v1072
        %1403 = vmatprep.subr.bf16.mxu0 %v1075
        %1404 = vmatpush1.bf16.msra.mxu0 %v1074
        %1405 = vmatprep.subr.bf16.mxu0 %v1077
        %1406 = vmatpush1.bf16.msra.mxu0 %v1076
        %1407 = vmatprep.mubr.bf16.mxu0 %v513
        %1408 = vmatmul.mubr.bf16.gmra.mrb[0].mxu0 %v512
        %v1409 = vpop.f32.mrb[0].mxu0
        %v1410 = vadd.f32 %v1337, %v1409
        %v1411 = vpop.f32.mrb[0].mxu0
        %v1412 = vadd.f32 %v1339, %v1411
        %v1413 = vpop.f32.mrb[0].mxu0
        %v1414 = vadd.f32 %v1341, %v1413
        %v1415 = vpop.f32.mrb[0].mxu0
        %v1416 = vadd.f32 %v1343, %v1415
        %1417 = vmatprep.mubr.bf16.mxu0 %v522
        %1418 = vmatmul.mubr.bf16.gmra.mrb[0].mxu0 %v521
        %v1419 = vpop.f32.mrb[0].mxu0
        %v1420 = vadd.f32 %v1347, %v1419
        %v1421 = vpop.f32.mrb[0].mxu0
        %v1422 = vadd.f32 %v1349, %v1421
        %v1423 = vpop.f32.mrb[0].mxu0
        %v1424 = vadd.f32 %v1351, %v1423
        %v1425 = vpop.f32.mrb[0].mxu0
        %v1426 = vadd.f32 %v1353, %v1425
        %1427 = vmatprep.mubr.bf16.mxu0 %v531
        %1428 = vmatmul.mubr.bf16.gmra.mrb[0].mxu0 %v530
        %v1429 = vpop.f32.mrb[0].mxu0
        %v1430 = vadd.f32 %v1357, %v1429
        %v1431 = vpop.f32.mrb[0].mxu0
        %v1432 = vadd.f32 %v1359, %v1431
        %v1433 = vpop.f32.mrb[0].mxu0
        %v1434 = vadd.f32 %v1361, %v1433
        %v1435 = vpop.f32.mrb[0].mxu0
        %v1436 = vadd.f32 %v1363, %v1435
        %1437 = vmatprep.mubr.bf16.mxu0 %v540
        %1438 = vmatmul.mubr.bf16.gmra.mrb[0].mxu0 %v539
        %v1439 = vpop.f32.mrb[0].mxu0
        %v1440 = vadd.f32 %v1367, %v1439
        %v1441 = vpop.f32.mrb[0].mxu0
        %v1442 = vadd.f32 %v1369, %v1441
        %v1443 = vpop.f32.mrb[0].mxu0
        %v1444 = vadd.f32 %v1371, %v1443
        %v1445 = vpop.f32.mrb[0].mxu0
        %v1446 = vadd.f32 %v1373, %v1445
        %1447 = vdwg.mxu0
        %1448 = vmatprep.subr.bf16.mxu0 %v1079
        %1449 = vmatpush1.bf16.msra.mxu0 %v1078
        %1450 = vmatprep.subr.bf16.mxu0 %v1081
        %1451 = vmatpush1.bf16.msra.mxu0 %v1080
        %1452 = vmatprep.subr.bf16.mxu0 %v1083
        %1453 = vmatpush1.bf16.msra.mxu0 %v1082
        %1454 = vmatprep.subr.bf16.mxu0 %v1085
        %1455 = vmatpush1.bf16.msra.mxu0 %v1084
        %1456 = vmatprep.subr.bf16.mxu0 %v1087
        %1457 = vmatpush1.bf16.msra.mxu0 %v1086
        %1458 = vmatprep.subr.bf16.mxu0 %v1089
        %1459 = vmatpush1.bf16.msra.mxu0 %v1088
        %1460 = vmatprep.subr.bf16.mxu0 %v1091
        %1461 = vmatpush1.bf16.msra.mxu0 %v1090
        %1462 = vmatprep.subr.bf16.mxu0 %v1093
        %1463 = vmatpush1.bf16.msra.mxu0 %v1092
        %1464 = vmatprep.subr.bf16.mxu0 %v1095
        %1465 = vmatpush1.bf16.msra.mxu0 %v1094
        %1466 = vmatprep.subr.bf16.mxu0 %v1097
        %1467 = vmatpush1.bf16.msra.mxu0 %v1096
        %1468 = vmatprep.subr.bf16.mxu0 %v1099
        %1469 = vmatpush1.bf16.msra.mxu0 %v1098
        %1470 = vmatprep.subr.bf16.mxu0 %v1101
        %1471 = vmatpush1.bf16.msra.mxu0 %v1100
        %1472 = vmatprep.subr.bf16.mxu0 %v1103
        %1473 = vmatpush1.bf16.msra.mxu0 %v1102
        %1474 = vmatprep.subr.bf16.mxu0 %v1105
        %1475 = vmatpush1.bf16.msra.mxu0 %v1104
        %1476 = vmatprep.subr.bf16.mxu0 %v1107
        %1477 = vmatpush1.bf16.msra.mxu0 %v1106
        %1478 = vmatprep.subr.bf16.mxu0 %v1109
        %1479 = vmatpush1.bf16.msra.mxu0 %v1108
        %1480 = vmatprep.mubr.bf16.mxu0 %v515
        %1481 = vmatmul.mubr.bf16.gmra.mrb[0].mxu0 %v514
        %v1482 = vpop.f32.mrb[0].mxu0
        %v1483 = vadd.f32 %v1410, %v1482
        %v1484 = vpop.f32.mrb[0].mxu0
        %v1485 = vadd.f32 %v1412, %v1484
        %v1486 = vpop.f32.mrb[0].mxu0
        %v1487 = vadd.f32 %v1414, %v1486
        %v1488 = vpop.f32.mrb[0].mxu0
        %v1489 = vadd.f32 %v1416, %v1488
        %1490 = vmatprep.mubr.bf16.mxu0 %v524
        %1491 = vmatmul.mubr.bf16.gmra.mrb[0].mxu0 %v523
        %v1492 = vpop.f32.mrb[0].mxu0
        %v1493 = vadd.f32 %v1420, %v1492
        %v1494 = vpop.f32.mrb[0].mxu0
        %v1495 = vadd.f32 %v1422, %v1494
        %v1496 = vpop.f32.mrb[0].mxu0
        %v1497 = vadd.f32 %v1424, %v1496
        %v1498 = vpop.f32.mrb[0].mxu0
        %v1499 = vadd.f32 %v1426, %v1498
        %1500 = vmatprep.mubr.bf16.mxu0 %v533
        %1501 = vmatmul.mubr.bf16.gmra.mrb[0].mxu0 %v532
        %v1502 = vpop.f32.mrb[0].mxu0
        %v1503 = vadd.f32 %v1430, %v1502
        %v1504 = vpop.f32.mrb[0].mxu0
        %v1505 = vadd.f32 %v1432, %v1504
        %v1506 = vpop.f32.mrb[0].mxu0
        %v1507 = vadd.f32 %v1434, %v1506
        %v1508 = vpop.f32.mrb[0].mxu0
        %v1509 = vadd.f32 %v1436, %v1508
        %1510 = vmatprep.mubr.bf16.mxu0 %v542
        %1511 = vmatmul.mubr.bf16.gmra.mrb[0].mxu0 %v541
        %v1512 = vpop.f32.mrb[0].mxu0
        %v1513 = vadd.f32 %v1440, %v1512
        %v1514 = vpop.f32.mrb[0].mxu0
        %v1515 = vadd.f32 %v1442, %v1514
        %v1516 = vpop.f32.mrb[0].mxu0
        %v1517 = vadd.f32 %v1444, %v1516
        %v1518 = vpop.f32.mrb[0].mxu0
        %v1519 = vadd.f32 %v1446, %v1518
        %1520 = vdwg.mxu0
        %1521 = vmatprep.subr.bf16.mxu0 %v1111
        %1522 = vmatpush1.bf16.msra.mxu0 %v1110
        %1523 = vmatprep.subr.bf16.mxu0 %v1113
        %1524 = vmatpush1.bf16.msra.mxu0 %v1112
        %1525 = vmatprep.subr.bf16.mxu0 %v1115
        %1526 = vmatpush1.bf16.msra.mxu0 %v1114
        %1527 = vmatprep.subr.bf16.mxu0 %v1117
        %1528 = vmatpush1.bf16.msra.mxu0 %v1116
        %1529 = vmatprep.subr.bf16.mxu0 %v1119
        %1530 = vmatpush1.bf16.msra.mxu0 %v1118
        %1531 = vmatprep.subr.bf16.mxu0 %v1121
        %1532 = vmatpush1.bf16.msra.mxu0 %v1120
        %1533 = vmatprep.subr.bf16.mxu0 %v1123
        %1534 = vmatpush1.bf16.msra.mxu0 %v1122
        %1535 = vmatprep.subr.bf16.mxu0 %v1125
        %1536 = vmatpush1.bf16.msra.mxu0 %v1124
        %1537 = vmatprep.subr.bf16.mxu0 %v1127
        %1538 = vmatpush1.bf16.msra.mxu0 %v1126
        %1539 = vmatprep.subr.bf16.mxu0 %v1129
        %1540 = vmatpush1.bf16.msra.mxu0 %v1128
        %1541 = vmatprep.subr.bf16.mxu0 %v1131
        %1542 = vmatpush1.bf16.msra.mxu0 %v1130
        %1543 = vmatprep.subr.bf16.mxu0 %v1133
        %1544 = vmatpush1.bf16.msra.mxu0 %v1132
        %1545 = vmatprep.subr.bf16.mxu0 %v1135
        %1546 = vmatpush1.bf16.msra.mxu0 %v1134
        %1547 = vmatprep.subr.bf16.mxu0 %v1137
        %1548 = vmatpush1.bf16.msra.mxu0 %v1136
        %1549 = vmatprep.subr.bf16.mxu0 %v1139
        %1550 = vmatpush1.bf16.msra.mxu0 %v1138
        %1551 = vmatprep.subr.bf16.mxu0 %v1141
        %1552 = vmatpush1.bf16.msra.mxu0 %v1140
        %1553 = vmatprep.mubr.bf16.mxu0 %v517
        %1554 = vmatmul.mubr.bf16.gmra.mrb[0].mxu0 %v516
        %v1555 = vpop.f32.mrb[0].mxu0
        %v1556 = vadd.f32 %v1483, %v1555
        %v1557 = vpop.f32.mrb[0].mxu0
        %v1558 = vadd.f32 %v1485, %v1557
        %v1559 = vpop.f32.mrb[0].mxu0
        %v1560 = vadd.f32 %v1487, %v1559
        %v1561 = vpop.f32.mrb[0].mxu0
        %v1562 = vadd.f32 %v1489, %v1561
        %1563 = vmatprep.mubr.bf16.mxu0 %v526
        %1564 = vmatmul.mubr.bf16.gmra.mrb[0].mxu0 %v525
        %v1565 = vpop.f32.mrb[0].mxu0
        %v1566 = vadd.f32 %v1493, %v1565
        %v1567 = vpop.f32.mrb[0].mxu0
        %v1568 = vadd.f32 %v1495, %v1567
        %v1569 = vpop.f32.mrb[0].mxu0
        %v1570 = vadd.f32 %v1497, %v1569
        %v1571 = vpop.f32.mrb[0].mxu0
        %v1572 = vadd.f32 %v1499, %v1571
        %1573 = vmatprep.mubr.bf16.mxu0 %v535
        %1574 = vmatmul.mubr.bf16.gmra.mrb[0].mxu0 %v534
        %v1575 = vpop.f32.mrb[0].mxu0
        %v1576 = vadd.f32 %v1503, %v1575
        %v1577 = vpop.f32.mrb[0].mxu0
        %v1578 = vadd.f32 %v1505, %v1577
        %v1579 = vpop.f32.mrb[0].mxu0
        %v1580 = vadd.f32 %v1507, %v1579
        %v1581 = vpop.f32.mrb[0].mxu0
        %v1582 = vadd.f32 %v1509, %v1581
        %1583 = vmatprep.mubr.bf16.mxu0 %v544
        %1584 = vmatmul.mubr.bf16.gmra.mrb[0].mxu0 %v543
        %v1585 = vpop.f32.mrb[0].mxu0
        %v1586 = vadd.f32 %v1513, %v1585
        %v1587 = vpop.f32.mrb[0].mxu0
        %v1588 = vadd.f32 %v1515, %v1587
        %v1589 = vpop.f32.mrb[0].mxu0
        %v1590 = vadd.f32 %v1517, %v1589
        %v1591 = vpop.f32.mrb[0].mxu0
        %v1592 = vadd.f32 %v1519, %v1591
        %1593 = vdwg.mxu0
        %1594 = vmatprep.subr.bf16.mxu0 %v1143
        %1595 = vmatpush1.bf16.msra.mxu0 %v1142
        %1596 = vmatprep.subr.bf16.mxu0 %v1145
        %1597 = vmatpush1.bf16.msra.mxu0 %v1144
        %1598 = vmatprep.subr.bf16.mxu0 %v1147
        %1599 = vmatpush1.bf16.msra.mxu0 %v1146
        %1600 = vmatprep.subr.bf16.mxu0 %v1149
        %1601 = vmatpush1.bf16.msra.mxu0 %v1148
        %1602 = vmatprep.subr.bf16.mxu0 %v1151
        %1603 = vmatpush1.bf16.msra.mxu0 %v1150
        %1604 = vmatprep.subr.bf16.mxu0 %v1153
        %1605 = vmatpush1.bf16.msra.mxu0 %v1152
        %1606 = vmatprep.subr.bf16.mxu0 %v1155
        %1607 = vmatpush1.bf16.msra.mxu0 %v1154
        %1608 = vmatprep.subr.bf16.mxu0 %v1157
        %1609 = vmatpush1.bf16.msra.mxu0 %v1156
        %1610 = vmatprep.subr.bf16.mxu0 0
        %1611 = vmatpush1.bf16.msra.mxu0 0
        %1612 = vmatprep.subr.bf16.mxu0 0
        %1613 = vmatpush1.bf16.msra.mxu0 0
        %1614 = vmatprep.subr.bf16.mxu0 0
        %1615 = vmatpush1.bf16.msra.mxu0 0
        %1616 = vmatprep.subr.bf16.mxu0 0
        %1617 = vmatpush1.bf16.msra.mxu0 0
        %1618 = vmatprep.subr.bf16.mxu0 0
        %1619 = vmatpush1.bf16.msra.mxu0 0
        %1620 = vmatprep.subr.bf16.mxu0 0
        %1621 = vmatpush1.bf16.msra.mxu0 0
        %1622 = vmatprep.subr.bf16.mxu0 0
        %1623 = vmatpush1.bf16.msra.mxu0 0
        %1624 = vmatprep.subr.bf16.mxu0 0
        %1625 = vmatpush1.bf16.msra.mxu0 0
        %1626 = vmatprep.mubr.bf16.mxu0 0
        %1627 = vmatmul.mubr.bf16.gmra.mrb[0].mxu0 %v518
        %v1628 = vpop.f32.mrb[0].mxu0
        %v1629 = vadd.f32 %v1556, %v1628
        %v1630 = vpop.f32.mrb[0].mxu0
        %v1631 = vadd.f32 %v1558, %v1630
        %v1632 = vpop.f32.mrb[0].mxu0
        %v1633 = vadd.f32 %v1560, %v1632
        %v1634 = vpop.f32.mrb[0].mxu0
        %v1635 = vadd.f32 %v1562, %v1634
        %1636 = vmatprep.mubr.bf16.mxu0 0
        %1637 = vmatmul.mubr.bf16.gmra.mrb[0].mxu0 %v527
        %v1638 = vpop.f32.mrb[0].mxu0
        %v1639 = vadd.f32 %v1566, %v1638
        %v1640 = vpop.f32.mrb[0].mxu0
        %v1641 = vadd.f32 %v1568, %v1640
        %v1642 = vpop.f32.mrb[0].mxu0
        %v1643 = vadd.f32 %v1570, %v1642
        %v1644 = vpop.f32.mrb[0].mxu0
        %v1645 = vadd.f32 %v1572, %v1644
        %1646 = vmatprep.mubr.bf16.mxu0 0
        %1647 = vmatmul.mubr.bf16.gmra.mrb[0].mxu0 %v536
        %v1648 = vpop.f32.mrb[0].mxu0
        %v1649 = vadd.f32 %v1576, %v1648
        %v1650 = vpop.f32.mrb[0].mxu0
        %v1651 = vadd.f32 %v1578, %v1650
        %v1652 = vpop.f32.mrb[0].mxu0
        %v1653 = vadd.f32 %v1580, %v1652
        %v1654 = vpop.f32.mrb[0].mxu0
        %v1655 = vadd.f32 %v1582, %v1654
        %1656 = vmatprep.mubr.bf16.mxu0 0
        %1657 = vmatmul.mubr.bf16.gmra.mrb[0].mxu0 %v545
        %v1658 = vpop.f32.mrb[0].mxu0
        %v1659 = vadd.f32 %v1586, %v1658
        %v1660 = vpop.f32.mrb[0].mxu0
        %v1661 = vadd.f32 %v1588, %v1660
        %v1662 = vpop.f32.mrb[0].mxu0
        %v1663 = vadd.f32 %v1590, %v1662
        %v1664 = vpop.f32.mrb[0].mxu0
        %v1665 = vadd.f32 %v1592, %v1664
        %1666 = vdwg.mxu0
        %v1667 = vmax.f32 %v1629, 0.0
        %v1668 = vmax.f32 %v1631, 0.0
        %v1669 = vmax.f32 %v1633, 0.0
        %v1670 = vmax.f32 %v1635, 0.0
        %v1671 = vmax.f32 %v1639, 0.0
        %v1672 = vmax.f32 %v1641, 0.0
        %v1673 = vmax.f32 %v1643, 0.0
        %v1674 = vmax.f32 %v1645, 0.0
        %v1675 = vmax.f32 %v1649, 0.0
        %v1676 = vmax.f32 %v1651, 0.0
        %v1677 = vmax.f32 %v1653, 0.0
        %v1678 = vmax.f32 %v1655, 0.0
        %v1679 = vmax.f32 %v1659, 0.0
        %v1680 = vmax.f32 %v1661, 0.0
        %v1681 = vmax.f32 %v1663, 0.0
        %v1682 = vmax.f32 %v1665, 0.0
        %v1683 = vpack.c.bf16 %v1669, %v1667
        %v1684 = vpack.c.bf16 %v1670, %v1668
        %v1685 = vpack.c.bf16 %v1673, %v1671
        %v1686 = vpack.c.bf16 %v1674, %v1672
        %v1687 = vpack.c.bf16 %v1677, %v1675
        %v1688 = vpack.c.bf16 %v1678, %v1676
        %v1689 = vpack.c.bf16 %v1681, %v1679
        %v1690 = vpack.c.bf16 %v1682, %v1680
        %v1699 = vunpack.c.l.b16 %v1683
        %v1700 = vunpack.c.l.b16 %v1684
        %v1701 = vunpack.c.h.b16 %v1683
        %v1702 = vunpack.c.h.b16 %v1684
        %v1703 = vunpack.c.l.b16 %v1685
        %v1704 = vunpack.c.l.b16 %v1686
        %v1705 = vunpack.c.h.b16 %v1685
        %v1706 = vunpack.c.h.b16 %v1686
        %v1707 = vunpack.c.l.b16 %v1687
        %v1708 = vunpack.c.l.b16 %v1688
        %v1709 = vunpack.c.h.b16 %v1687
        %v1710 = vunpack.c.h.b16 %v1688
        %v1711 = vunpack.c.l.b16 %v1689
        %v1712 = vunpack.c.l.b16 %v1690
        %v1713 = vunpack.c.h.b16 %v1689
        %v1714 = vunpack.c.h.b16 %v1690
        %v1715 = vpack.c.b16 %v1700, %v1699
        %v1716 = vpack.c.b16 %v1702, %v1701
        %v1717 = vpack.c.b16 %v1704, %v1703
        %v1718 = vpack.c.b16 %v1706, %v1705
        %v1719 = vpack.c.b16 %v1708, %v1707
        %v1720 = vpack.c.b16 %v1710, %v1709
        %v1721 = vpack.c.b16 %v1712, %v1711
        %v1722 = vpack.c.b16 %v1714, %v1713
        %vm1731 = vcmask 1043456
        %vm1732 = vcmask 523268
        %vm1733 = vmor %vm1732, %vm1731
        %1734 = vst.msk [vmem:[%s177] sm:$0xff] %vm1733, %v1715
        %1735 = vst.msk [vmem:[%s177 + $0x8] sm:$0xff] %vm1733, %v1716
        %1736 = vst.msk [vmem:[%s177 + $0x10] sm:$0xff] %vm1733, %v1717
        %1737 = vst.msk [vmem:[%s177 + $0x18] sm:$0xff] %vm1733, %v1718
        %1738 = vst.msk [vmem:[%s177 + $0x20] sm:$0xff] %vm1733, %v1719
        %1739 = vst.msk [vmem:[%s177 + $0x28] sm:$0xff] %vm1733, %v1720
        %1740 = vst.msk [vmem:[%s177 + $0x30] sm:$0xff] %vm1733, %v1721
        %1741 = vst.msk [vmem:[%s177 + $0x38] sm:$0xff] %vm1733, %v1722
        %s1742 = sand.u32 %s90, 1
        %s1743 = sand.u32 %s90, 1
        %s1744 = smul.addr %s1743, 64
        %s1745 = scalar_lea.vmem [#allocation2], %s1744
        // Predicated region
        $region33: #{inception_d_forward.10} parent=31 // pred_check
          %p1746 = pneg %p100
        $region34: #{inception_d_forward.10} parent=31 // pred_check_branch
          %1748 = sbr.rel (%p1746) target = $region36
        $region35: #{inception_d_forward.10} parent=31 // pred_region
          %s1749 = smul.u32 8, %s14
          %s1750 = ssub.s32 13, %s1749
          %p1751 = scmp.lt.s32.totalorder %s1750, 8
          %s1752 = scalar_select %p1751, %s1750, 8
          %s1753 = smul.u32 64, %s1752
          %s1754 = smul.u32 %s1753, 2
          %p1755 = scmp.ne.s32.totalorder 0, %s1754
          %s1756 = smul.addr %s1749, 2
          %s1757 = smul.addr %s1756, 4
          %s1758 = scalar_lea.vmem %s3, %s1757
          // Predicated region
          $region37: #{inception_d_forward.10} parent=35 // pred_check
            %p1759 = pneg %p1755
          $region38: #{inception_d_forward.10} parent=35 // pred_check_branch
            %1761 = sbr.rel (%p1759) target = $region40
          $region39: #{inception_d_forward.10} parent=35 // pred_region
            // Predicated region
            $region41: #{inception_d_forward.10} parent=39 // pred_check
              _
            $region42: #{inception_d_forward.10} parent=39 // pred_check_branch
              %1763 = sbr.rel (0) target = $region44
            $region43: #{inception_d_forward.10} parent=39 // pred_region
              // Predicated region
              $region63: #{inception_d_forward.10} parent=43 // pred_check
                _
              $region64: #{inception_d_forward.10} parent=43 // pred_check_branch
                %1826 = sbr.rel (0) target = $region66
              $region65: #{inception_d_forward.10} parent=43 // pred_region
                %s1827 = sshrl.u32 %s1752, 3
                // While loop
                $region67: #{inception_d_forward.10} parent=65 // loop_pre_header
                  _
                $region68: #{inception_d_forward.10} parent=65 // loop_header
                  %s1829 = sphi 0, %s1831
                  %p1830 = scmp.ge.s32.totalorder %s1829, %s1827
                  %s1834 = sphi 0, %s1855
                  %s1835 = sphi %s1745, %s1858
                  %s1836 = sphi %s1758, %s1859
                $region69: #{inception_d_forward.10} parent=65 // loop_header_branch
                  %1833 = sbr.rel (%p1830) target = $region73
                $region70: #{inception_d_forward.10} parent=65 // loop_body
                  %v1837 = vld [vmem:[%s1835] sm:$0xff]
                  %1838 = vst [vmem:[%s1836] sm:$0xff] %v1837
                  %v1839 = vld [vmem:[%s1835 + $0x8] sm:$0xff]
                  %1840 = vst [vmem:[%s1836 + $0x8] sm:$0xff] %v1839
                  %v1841 = vld [vmem:[%s1835 + $0x10] sm:$0xff]
                  %1842 = vst [vmem:[%s1836 + $0x10] sm:$0xff] %v1841
                  %v1843 = vld [vmem:[%s1835 + $0x18] sm:$0xff]
                  %1844 = vst [vmem:[%s1836 + $0x18] sm:$0xff] %v1843
                  %v1845 = vld [vmem:[%s1835 + $0x20] sm:$0xff]
                  %1846 = vst [vmem:[%s1836 + $0x20] sm:$0xff] %v1845
                  %v1847 = vld [vmem:[%s1835 + $0x28] sm:$0xff]
                  %1848 = vst [vmem:[%s1836 + $0x28] sm:$0xff] %v1847
                  %v1849 = vld [vmem:[%s1835 + $0x30] sm:$0xff]
                  %1850 = vst [vmem:[%s1836 + $0x30] sm:$0xff] %v1849
                  %v1851 = vld [vmem:[%s1835 + $0x38] sm:$0xff]
                  %1852 = vst [vmem:[%s1836 + $0x38] sm:$0xff] %v1851
                  %s1853 = sadd.s32 1, %s1834
                  %p1854 = scmp.ge.s32.totalorder %s1853, %s1827
                  %s1855 = scalar_select %p1854, 0, %s1853
                  %s1856 = smul.u32 %s1855, 64
                  %s1857 = smul.u32 %s1855, 64
                  %s1858 = scalar_lea.vmem %s1745, %s1856 [#allocation2]
                  %s1859 = scalar_lea.vmem %s1758, %s1857
                $region71: #{inception_d_forward.10} parent=65 // loop_footer
                  %s1831 = sadd.s32 %s1829, 1
                $region72: #{inception_d_forward.10} parent=65 // loop_footer_branch
                  %1828 = sbr.rel target = $region68
                $region73: #{inception_d_forward.10} parent=65 // loop_exit
                  _
                %s1860 = sshrl.u32 %s1752, 3
                %s1861 = sand.u32 %s1752, 7
                %s1862 = smul.u32 %s1860, 8
                %s1863 = smul.u32 8, %s1862
                %s1864 = scalar_lea.vmem %s1745, %s1863 [#allocation2]
                %s1865 = smul.u32 8, %s1862
                %s1866 = scalar_lea.vmem %s1758, %s1865
                // While loop
                $region74: #{inception_d_forward.10} parent=65 // loop_pre_header
                  _
                $region75: #{inception_d_forward.10} parent=65 // loop_header
                  %s1868 = sphi 0, %s1870
                  %p1869 = scmp.ge.s32.totalorder %s1868, %s1861
                  %s1873 = sphi 0, %s1880
                  %s1874 = sphi %s1864, %s1883
                  %s1875 = sphi %s1866, %s1884
                $region76: #{inception_d_forward.10} parent=65 // loop_header_branch
                  %1872 = sbr.rel (%p1869) target = $region80
                $region77: #{inception_d_forward.10} parent=65 // loop_body
                  %v1876 = vld [vmem:[%s1874] sm:$0xff]
                  %1877 = vst [vmem:[%s1875] sm:$0xff] %v1876
                  %s1878 = sadd.s32 1, %s1873
                  %p1879 = scmp.ge.s32.totalorder %s1878, %s1861
                  %s1880 = scalar_select %p1879, 0, %s1878
                  %s1881 = smul.u32 %s1880, 8
                  %s1882 = smul.u32 %s1880, 8
                  %s1883 = scalar_lea.vmem %s1864, %s1881 [#allocation2]
                  %s1884 = scalar_lea.vmem %s1866, %s1882
                $region78: #{inception_d_forward.10} parent=65 // loop_footer
                  %s1870 = sadd.s32 %s1868, 1
                $region79: #{inception_d_forward.10} parent=65 // loop_footer_branch
                  %1867 = sbr.rel target = $region75
                $region80: #{inception_d_forward.10} parent=65 // loop_exit
                  _
              $region66: #{inception_d_forward.10} parent=43 // pred_fallthru
                _
              // Predicated region
              $region81: #{inception_d_forward.10} parent=43 // pred_check
                _
              $region82: #{inception_d_forward.10} parent=43 // pred_check_branch
                %1886 = sbr.rel target = $region84
              $region83: #{inception_d_forward.10} parent=43 // pred_region
                _
              $region84: #{inception_d_forward.10} parent=43 // pred_fallthru
                _
            $region44: #{inception_d_forward.10} parent=39 // pred_fallthru
              _
            // Predicated region
            $region45: #{inception_d_forward.10} parent=39 // pred_check
              _
            $region46: #{inception_d_forward.10} parent=39 // pred_check_branch
              %1765 = sbr.rel target = $region48
            $region47: #{inception_d_forward.10} parent=39 // pred_region
              %s1767 = sshrl.u32 %s1752, 3
              // While loop
              $region49: #{inception_d_forward.10} parent=47 // loop_pre_header
                _
              $region50: #{inception_d_forward.10} parent=47 // loop_header
                %s1769 = sphi 0, %s1771
                %p1770 = scmp.ge.s32.totalorder %s1769, %s1767
                %s1774 = sphi 0, %s1795
                %s1775 = sphi %s1745, %s1798
                %s1776 = sphi %s1758, %s1799
              $region51: #{inception_d_forward.10} parent=47 // loop_header_branch
                %1773 = sbr.rel (%p1770) target = $region55
              $region52: #{inception_d_forward.10} parent=47 // loop_body
                %v1777 = vld [vmem:[%s1775] sm:$0xff]
                %1778 = vst [vmem:[%s1776] sm:$0xff] %v1777
                %v1779 = vld [vmem:[%s1775 + $0x8] sm:$0xff]
                %1780 = vst [vmem:[%s1776 + $0x8] sm:$0xff] %v1779
                %v1781 = vld [vmem:[%s1775 + $0x10] sm:$0xff]
                %1782 = vst [vmem:[%s1776 + $0x10] sm:$0xff] %v1781
                %v1783 = vld [vmem:[%s1775 + $0x18] sm:$0xff]
                %1784 = vst [vmem:[%s1776 + $0x18] sm:$0xff] %v1783
                %v1785 = vld [vmem:[%s1775 + $0x20] sm:$0xff]
                %1786 = vst [vmem:[%s1776 + $0x20] sm:$0xff] %v1785
                %v1787 = vld [vmem:[%s1775 + $0x28] sm:$0xff]
                %1788 = vst [vmem:[%s1776 + $0x28] sm:$0xff] %v1787
                %v1789 = vld [vmem:[%s1775 + $0x30] sm:$0xff]
                %1790 = vst [vmem:[%s1776 + $0x30] sm:$0xff] %v1789
                %v1791 = vld [vmem:[%s1775 + $0x38] sm:$0xff]
                %1792 = vst [vmem:[%s1776 + $0x38] sm:$0xff] %v1791
                %s1793 = sadd.s32 1, %s1774
                %p1794 = scmp.ge.s32.totalorder %s1793, %s1767
                %s1795 = scalar_select %p1794, 0, %s1793
                %s1796 = smul.u32 %s1795, 64
                %s1797 = smul.u32 %s1795, 64
                %s1798 = scalar_lea.vmem %s1745, %s1796 [#allocation2]
                %s1799 = scalar_lea.vmem %s1758, %s1797
              $region53: #{inception_d_forward.10} parent=47 // loop_footer
                %s1771 = sadd.s32 %s1769, 1
              $region54: #{inception_d_forward.10} parent=47 // loop_footer_branch
                %1768 = sbr.rel target = $region50
              $region55: #{inception_d_forward.10} parent=47 // loop_exit
                _
              %s1800 = sshrl.u32 %s1752, 3
              %s1801 = sand.u32 %s1752, 7
              %s1802 = smul.u32 %s1800, 8
              %s1803 = smul.u32 8, %s1802
              %s1804 = scalar_lea.vmem %s1745, %s1803 [#allocation2]
              %s1805 = smul.u32 8, %s1802
              %s1806 = scalar_lea.vmem %s1758, %s1805
              // While loop
              $region56: #{inception_d_forward.10} parent=47 // loop_pre_header
                _
              $region57: #{inception_d_forward.10} parent=47 // loop_header
                %s1808 = sphi 0, %s1810
                %p1809 = scmp.ge.s32.totalorder %s1808, %s1801
                %s1813 = sphi 0, %s1820
                %s1814 = sphi %s1804, %s1823
                %s1815 = sphi %s1806, %s1824
              $region58: #{inception_d_forward.10} parent=47 // loop_header_branch
                %1812 = sbr.rel (%p1809) target = $region62
              $region59: #{inception_d_forward.10} parent=47 // loop_body
                %v1816 = vld [vmem:[%s1814] sm:$0xff]
                %1817 = vst [vmem:[%s1815] sm:$0xff] %v1816
                %s1818 = sadd.s32 1, %s1813
                %p1819 = scmp.ge.s32.totalorder %s1818, %s1801
                %s1820 = scalar_select %p1819, 0, %s1818
                %s1821 = smul.u32 %s1820, 8
                %s1822 = smul.u32 %s1820, 8
                %s1823 = scalar_lea.vmem %s1804, %s1821 [#allocation2]
                %s1824 = scalar_lea.vmem %s1806, %s1822
              $region60: #{inception_d_forward.10} parent=47 // loop_footer
                %s1810 = sadd.s32 %s1808, 1
              $region61: #{inception_d_forward.10} parent=47 // loop_footer_branch
                %1807 = sbr.rel target = $region57
              $region62: #{inception_d_forward.10} parent=47 // loop_exit
                _
            $region48: #{inception_d_forward.10} parent=39 // pred_fallthru
              _
          $region40: #{inception_d_forward.10} parent=35 // pred_fallthru
            _
          %1887 = vnop
        $region36: #{inception_d_forward.10} parent=31 // pred_fallthru
          _
      $region32: #{inception_d_forward.10} parent=5 // pred_fallthru
        _
      %p1888 = scmp.le.s32.totalorder 2, %s9
      // Predicated region
      $region85: #{inception_d_forward.10} parent=5 // pred_check
        %p1889 = pneg %p1888
      $region86: #{inception_d_forward.10} parent=5 // pred_check_branch
        %1891 = sbr.rel (%p1889) target = $region88
      $region87: #{inception_d_forward.10} parent=5 // pred_region
        %s1892 = ssub.s32 %s9, 2
        // Predicated region
        $region89: #{inception_d_forward.10} parent=87 // pred_check
          %p1893 = pneg %p106
        $region90: #{inception_d_forward.10} parent=87 // pred_check_branch
          %1895 = sbr.rel (%p1893) target = $region92
        $region91: #{inception_d_forward.10} parent=87 // pred_region
          %s1896 = sand.u32 %s91, 1
          %s1897 = sand.u32 %s91, 1
          %s1898 = smul.addr %s1897, 64
          %s1899 = scalar_lea.vmem [#allocation2], %s1898
        $region92: #{inception_d_forward.10} parent=87 // pred_fallthru
          _
      $region88: #{inception_d_forward.10} parent=5 // pred_fallthru
        _
    $region6: #{inception_d_forward.10} parent=1 // loop_footer
      %s13 = sadd.s32 1, %s9
    $region7: #{inception_d_forward.10} parent=1 // loop_footer_branch
      %8 = sbr.rel target = $region3
    $region8: #{inception_d_forward.10} parent=1 // loop_exit
      _

// kernel: inception_d_forward.7
$region0: #{inception_d_forward.7}
  #allocation0 [shape = 'u32[]', space=smem, size = 0x4, offset = 0x4, fixed_abs, tag = 'smem constant byte address 0x4 - core index']
  #allocation1 [shape = 'u32[144,128]{1,0:T(1,128)}', space=vmem, size = 0x12000, scoped, tag = 'internal scratch']
  %s0 = inlined_call_operand.vmem [shape: bf16[98,288], index: 0, kind: input, shape index: {}]
  %s1 = inlined_call_operand.vmem [shape: bf16[288,64], index: 1, kind: input, shape index: {}]
  %s2 = inlined_call_operand.vmem [shape: f32[1,64], index: 2, kind: input, shape index: {}]
  %s3 = inlined_call_operand.vmem [shape: bf16[98,64], index: 3, kind: output, shape index: {}]
  %s4 = sld [smem:[#allocation0]]
  $region89: #{inception_d_forward.7} parent=0
    _
  %s6 = ssub.s32 1, %s4
  %s7 = scalar_select 0, %s6, %s4
  $region1: #{inception_d_forward.7} parent=0
    #allocation2 [shape = 'u8[32768]{0}', space=vmem, size = 0x8000, scoped, tag = 'output window, operand 0']
    loop: start=0, step=1, limit=4
    $region2: #{inception_d_forward.7} parent=1 // loop_pre_header
      _
    $region3: #{inception_d_forward.7} parent=1 // loop_header
      %s9 = sphi 0, %s13
      %p10 = scmp.ge.s32.totalorder %s9, 4
      %s19 = sphi 0, %s21
      %s22 = sphi 0, %s19
      %s23 = sphi 0, %s22
      %s39 = sphi 0, %s23
      %s43 = sphi 0, %s43
      %s45 = sphi 0, %s43
      %s46 = sphi 0, %s45
      %s60 = sphi 0, %s46
      %s64 = sphi 0, %s64
      %s66 = sphi 0, %s64
      %s67 = sphi 0, %s66
      %s81 = sphi 0, %s67
      %s87 = sphi 0, %s89
      %s90 = sphi 0, %s87
      %s91 = sphi 0, %s90
      %s107 = sphi 0, %s91
    $region4: #{inception_d_forward.7} parent=1 // loop_header_branch
      %12 = sbr.rel (%p10) target = $region8
    $region5: #{inception_d_forward.7} parent=1 // loop_body
      %s14 = ssub.s32 %s9, 1
      %s15 = ssub.s32 %s9, 2
      %s16 = sadd.s32 %s9, 1
      %s17 = ssub.s32 %s9, %s16
      %p18 = scmp.eq.s32.totalorder %s17, 0
      %s20 = sadd.s32 %s19, 1
      %s21 = scalar_select %p18, %s19, %s20
      %p24 = pneg %p18
      %p25 = scmp.eq.s32.totalorder %s9, 1
      %p26 = por %p24, %p25
      %p27 = scmp.ne.s32.totalorder %s19, %s22
      %p28 = scmp.eq.s32.totalorder %s9, 0
      %p29 = por %p27, %p28
      %p30 = scmp.ne.s32.totalorder %s19, %s22
      %p31 = scmp.eq.s32.totalorder %s14, 1
      %p32 = por %p30, %p31
      %p33 = scmp.ne.s32.totalorder %s22, %s23
      %p34 = scmp.eq.s32.totalorder %s14, 0
      %p35 = por %p33, %p34
      %p36 = scmp.ne.s32.totalorder %s22, %s23
      %p37 = scmp.eq.s32.totalorder %s15, 1
      %p38 = por %p36, %p37
      %p40 = scmp.ne.s32.totalorder %s23, %s39
      %p41 = scmp.eq.s32.totalorder %s15, 0
      %p42 = por %p40, %p41
      %s44 = sadd.s32 %s43, 1
      %p47 = scmp.eq.s32.totalorder %s9, 1
      %p48 = scmp.ne.s32.totalorder %s43, %s45
      %p49 = scmp.eq.s32.totalorder %s9, 0
      %p50 = por %p48, %p49
      %p51 = scmp.ne.s32.totalorder %s43, %s45
      %p52 = scmp.eq.s32.totalorder %s14, 1
      %p53 = por %p51, %p52
      %p54 = scmp.ne.s32.totalorder %s45, %s46
      %p55 = scmp.eq.s32.totalorder %s14, 0
      %p56 = por %p54, %p55
      %p57 = scmp.ne.s32.totalorder %s45, %s46
      %p58 = scmp.eq.s32.totalorder %s15, 1
      %p59 = por %p57, %p58
      %p61 = scmp.ne.s32.totalorder %s46, %s60
      %p62 = scmp.eq.s32.totalorder %s15, 0
      %p63 = por %p61, %p62
      %s65 = sadd.s32 %s64, 1
      %p68 = scmp.eq.s32.totalorder %s9, 1
      %p69 = scmp.ne.s32.totalorder %s64, %s66
      %p70 = scmp.eq.s32.totalorder %s9, 0
      %p71 = por %p69, %p70
      %p72 = scmp.ne.s32.totalorder %s64, %s66
      %p73 = scmp.eq.s32.totalorder %s14, 1
      %p74 = por %p72, %p73
      %p75 = scmp.ne.s32.totalorder %s66, %s67
      %p76 = scmp.eq.s32.totalorder %s14, 0
      %p77 = por %p75, %p76
      %p78 = scmp.ne.s32.totalorder %s66, %s67
      %p79 = scmp.eq.s32.totalorder %s15, 1
      %p80 = por %p78, %p79
      %p82 = scmp.ne.s32.totalorder %s67, %s81
      %p83 = scmp.eq.s32.totalorder %s15, 0
      %p84 = por %p82, %p83
      %s85 = ssub.s32 %s9, %s16
      %p86 = scmp.eq.s32.totalorder %s85, 0
      %s88 = sadd.s32 %s87, 1
      %s89 = scalar_select %p86, %s87, %s88
      %p92 = pneg %p86
      %p93 = scmp.eq.s32.totalorder %s9, 1
      %p94 = por %p92, %p93
      %p95 = scmp.ne.s32.totalorder %s87, %s90
      %p96 = scmp.eq.s32.totalorder %s9, 0
      %p97 = por %p95, %p96
      %p98 = scmp.ne.s32.totalorder %s87, %s90
      %p99 = scmp.eq.s32.totalorder %s14, 1
      %p100 = por %p98, %p99
      %p101 = scmp.ne.s32.totalorder %s90, %s91
      %p102 = scmp.eq.s32.totalorder %s14, 0
      %p103 = por %p101, %p102
      %p104 = scmp.ne.s32.totalorder %s90, %s91
      %p105 = scmp.eq.s32.totalorder %s15, 1
      %p106 = por %p104, %p105
      %p108 = scmp.ne.s32.totalorder %s91, %s107
      %p109 = scmp.eq.s32.totalorder %s15, 0
      %p110 = por %p108, %p109
      %p111 = scmp.le.s32.totalorder 1, %s9
      %p112 = scmp.lt.s32.totalorder %s9, 3
      %p113 = pnand %p111, %p112
      %p114 = pneg %p113
      // Predicated region
      $region9: #{inception_d_forward.7} parent=5 // pred_check
        _
      $region10: #{inception_d_forward.7} parent=5 // pred_check_branch
        %116 = sbr.rel (%p113) target = $region12
      $region11: #{inception_d_forward.7} parent=5 // pred_region
        %s117 = ssub.s32 %s9, 1
        // Predicated region
        $region13: #{inception_d_forward.7} parent=11 // pred_check
          %p118 = pneg %p56
        $region14: #{inception_d_forward.7} parent=11 // pred_check_branch
          %120 = sbr.rel (%p118) target = $region16
        $region15: #{inception_d_forward.7} parent=11 // pred_region
          _
        $region16: #{inception_d_forward.7} parent=11 // pred_fallthru
          _
        // Predicated region
        $region17: #{inception_d_forward.7} parent=11 // pred_check
          %p121 = pneg %p77
        $region18: #{inception_d_forward.7} parent=11 // pred_check_branch
          %123 = sbr.rel (%p121) target = $region20
        $region19: #{inception_d_forward.7} parent=11 // pred_region
          _
        $region20: #{inception_d_forward.7} parent=11 // pred_fallthru
          _
      $region12: #{inception_d_forward.7} parent=5 // pred_fallthru
        _
      %p124 = scmp.lt.s32.totalorder %s9, 2
      // Predicated region
      $region21: #{inception_d_forward.7} parent=5 // pred_check
        %p125 = pneg %p124
      $region22: #{inception_d_forward.7} parent=5 // pred_check_branch
        %127 = sbr.rel (%p125) target = $region24
      $region23: #{inception_d_forward.7} parent=5 // pred_region
        // Predicated region
        $region25: #{inception_d_forward.7} parent=23 // pred_check
          %p128 = pneg %p29
        $region26: #{inception_d_forward.7} parent=23 // pred_check_branch
          %130 = sbr.rel (%p128) target = $region28
        $region27: #{inception_d_forward.7} parent=23 // pred_region
          %s131 = smul.u32 8, %s9
          %s132 = ssub.s32 13, %s131
          %p133 = scmp.lt.s32.totalorder %s132, 8
          %s134 = scalar_select %p133, %s132, 8
          %s135 = smul.u32 64, %s134
          %s136 = smul.u32 %s135, 3
          %p137 = scmp.lt.s32.totalorder %s131, 12
          %s138 = scalar_select %p137, %s131, 12
          %s139 = smul.addr %s138, 3
          %s140 = smul.addr %s139, 4
          %s141 = scalar_lea.vmem %s0, %s140
          %s142 = smul.u32 8, %s9
          %s143 = ssub.s32 13, %s142
          %p144 = scmp.lt.s32.totalorder %s143, 8
          %s145 = scalar_select %p144, %s143, 8
          %s146 = smul.u32 64, %s145
          %s147 = smul.u32 %s146, 3
        $region28: #{inception_d_forward.7} parent=23 // pred_fallthru
          _
      $region24: #{inception_d_forward.7} parent=5 // pred_fallthru
        _
      %p148 = scmp.le.s32.totalorder 1, %s9
      %p149 = scmp.lt.s32.totalorder %s9, 3
      %p150 = pnand %p148, %p149
      %p151 = pneg %p150
      // Predicated region
      $region29: #{inception_d_forward.7} parent=5 // pred_check
        _
      $region30: #{inception_d_forward.7} parent=5 // pred_check_branch
        %153 = sbr.rel (%p150) target = $region32
      $region31: #{inception_d_forward.7} parent=5 // pred_region
        %s154 = ssub.s32 %s9, 1
        %s155 = smul.u32 8, %s14
        %s156 = ssub.s32 13, %s155
        %p157 = scmp.lt.s32.totalorder %s156, 8
        %s158 = scalar_select %p157, %s156, 8
        %s159 = smul.u32 64, %s158
        %s160 = smul.u32 %s159, 3
        %p161 = scmp.lt.s32.totalorder %s155, 12
        %s162 = scalar_select %p161, %s155, 12
        %s163 = smul.addr %s162, 3
        %s164 = smul.addr %s163, 4
        %s165 = scalar_lea.vmem %s0, %s164
        %p166 = pneg %p35
        %p167 = pneg %p32
        %p168 = pneg %p56
        %p169 = pneg %p53
        %p170 = pneg %p77
        %p171 = pneg %p74
        %p172 = pneg %p103
        %p173 = pneg %p100
        %s174 = sand.u32 %s90, 1
        %s175 = sand.u32 %s90, 1
        %s176 = smul.addr %s175, 32
        %s177 = scalar_lea.vmem [#allocation2], %s176
        %s178 = smul.u32 8, %s14
        %s179 = ssub.s32 13, %s178
        %p180 = scmp.lt.s32.totalorder %s179, 8
        %s181 = scalar_select %p180, %s179, 8
        %s182 = smul.u32 64, %s181
        %s183 = smul.u32 %s182, 3
        %p184 = scmp.lt.s32.totalorder %s178, 12
        %s185 = scalar_select %p184, %s178, 12
        %s186 = smul.addr %s185, 3
        %s187 = smul.addr %s186, 4
        %s188 = scalar_lea.vmem %s0, %s187
        %s189 = smul.u32 8, %s14
        %s190 = ssub.s32 13, %s189
        %p191 = scmp.lt.s32.totalorder %s190, 8
        %s192 = scalar_select %p191, %s190, 8
        %s193 = smul.u32 64, %s192
        %s194 = smul.u32 %s193, 3
        %s195 = smul.u32 8, %s14
        %s196 = ssub.s32 13, %s195
        %p197 = scmp.lt.s32.totalorder %s196, 8
        %s198 = scalar_select %p197, %s196, 8
        %s199 = smul.u32 64, %s198
        %v201 = vld [vmem:[%s188] sm:$0xff]
        %v202 = vld [vmem:[%s188 + $0x8] sm:$0xf]
        %v203 = vld [vmem:[%s188 + $0xc] sm:$0xff]
        %v204 = vld [vmem:[%s188 + $0x14] sm:$0xf]
        %v205 = vld [vmem:[%s188 + $0x18] sm:$0xff]
        %v206 = vld [vmem:[%s188 + $0x20] sm:$0xf]
        %v207 = vld [vmem:[%s188 + $0x24] sm:$0xff]
        %v208 = vld [vmem:[%s188 + $0x2c] sm:$0xf]
        %v209 = vld [vmem:[%s188 + $0x30] sm:$0xff]
        %v210 = vld [vmem:[%s188 + $0x38] sm:$0xf]
        %v211 = vld [vmem:[%s188 + $0x3c] sm:$0xff]
        %v212 = vld [vmem:[%s188 + $0x44] sm:$0xf]
        %v213 = vld [vmem:[%s188 + $0x48] sm:$0xff]
        %v214 = vld [vmem:[%s188 + $0x50] sm:$0xf]
        %v215 = vld [vmem:[%s188 + $0x54] sm:$0xff]
        %v216 = vld [vmem:[%s188 + $0x5c] sm:$0xf]
        %v217 = vld [vmem:[%s1] sm:$0xf]
        %v218 = vld [vmem:[%s1 + $0x4] sm:$0xf]
        %v219 = vld [vmem:[%s1 + $0x8] sm:$0xf]
        %v220 = vld [vmem:[%s1 + $0xc] sm:$0xf]
        %v221 = vld [vmem:[%s1 + $0x10] sm:$0xf]
        %v222 = vld [vmem:[%s1 + $0x14] sm:$0xf]
        %v223 = vld [vmem:[%s1 + $0x18] sm:$0xf]
        %v224 = vld [vmem:[%s1 + $0x1c] sm:$0xf]
        %v225 = vld [vmem:[%s1 + $0x20] sm:$0xf]
        %v226 = vld [vmem:[%s1 + $0x24] sm:$0xf]
        %v227 = vld [vmem:[%s1 + $0x28] sm:$0xf]
        %v228 = vld [vmem:[%s1 + $0x2c] sm:$0xf]
        %v229 = vld [vmem:[%s1 + $0x30] sm:$0xf]
        %v230 = vld [vmem:[%s1 + $0x34] sm:$0xf]
        %v231 = vld [vmem:[%s1 + $0x38] sm:$0xf]
        %v232 = vld [vmem:[%s1 + $0x3c] sm:$0xf]
        %v233 = vld [vmem:[%s1 + $0x40] sm:$0xf]
        %v234 = vld [vmem:[%s1 + $0x44] sm:$0xf]
        %v235 = vld [vmem:[%s1 + $0x48] sm:$0xf]
        %v236 = vld [vmem:[%s1 + $0x4c] sm:$0xf]
        %v237 = vld [vmem:[%s1 + $0x50] sm:$0xf]
        %v238 = vld [vmem:[%s1 + $0x54] sm:$0xf]
        %v239 = vld [vmem:[%s1 + $0x58] sm:$0xf]
        %v240 = vld [vmem:[%s1 + $0x5c] sm:$0xf]
        %v241 = vld [vmem:[%s1 + $0x60] sm:$0xf]
        %v242 = vld [vmem:[%s1 + $0x64] sm:$0xf]
        %v243 = vld [vmem:[%s1 + $0x68] sm:$0xf]
        %v244 = vld [vmem:[%s1 + $0x6c] sm:$0xf]
        %v245 = vld [vmem:[%s1 + $0x70] sm:$0xf]
        %v246 = vld [vmem:[%s1 + $0x74] sm:$0xf]
        %v247 = vld [vmem:[%s1 + $0x78] sm:$0xf]
        %v248 = vld [vmem:[%s1 + $0x7c] sm:$0xf]
        %v249 = vld [vmem:[%s1 + $0x80] sm:$0xf]
        %v250 = vld [vmem:[%s1 + $0x84] sm:$0xf]
        %v251 = vld [vmem:[%s1 + $0x88] sm:$0xf]
        %v252 = vld [vmem:[%s1 + $0x8c] sm:$0xf]
        %v253 = vld [vmem:[%s2] sm:$0x1]
        %v255 = vlaneseq
        %v256 = vshrl.u32 %v255, 7
        %v257 = vsub.s32 0, %v256
        %v258 = vrot.slane %v253, %v257
        %v276 = vunpack.c.l.b16 %v201
        %v277 = vunpack.c.h.b16 %v201
        %v278 = vunpack.c.l.b16 %v202
        %v279 = vunpack.c.l.b16 %v203
        %v280 = vunpack.c.h.b16 %v203
        %v281 = vunpack.c.l.b16 %v204
        %v282 = vunpack.c.l.b16 %v205
        %v283 = vunpack.c.h.b16 %v205
        %v284 = vunpack.c.l.b16 %v206
        %v285 = vunpack.c.l.b16 %v207
        %v286 = vunpack.c.h.b16 %v207
        %v287 = vunpack.c.l.b16 %v208
        %v288 = vunpack.c.l.b16 %v209
        %v289 = vunpack.c.h.b16 %v209
        %v290 = vunpack.c.l.b16 %v210
        %v291 = vunpack.c.l.b16 %v211
        %v292 = vunpack.c.h.b16 %v211
        %v293 = vunpack.c.l.b16 %v212
        %v294 = vunpack.c.l.b16 %v213
        %v295 = vunpack.c.h.b16 %v213
        %v296 = vunpack.c.l.b16 %v214
        %v297 = vunpack.c.l.b16 %v215
        %v298 = vunpack.c.h.b16 %v215
        %v299 = vunpack.c.l.b16 %v216
        %v300 = vpack.c.b16 %v279, %v276
        %v301 = vpack.c.b16 %v280, %v277
        %v302 = vpack.c.b16 %v281, %v278
        %v303 = vpack.c.b16 %v285, %v282
        %v304 = vpack.c.b16 %v286, %v283
        %v305 = vpack.c.b16 %v287, %v284
        %v306 = vpack.c.b16 %v291, %v288
        %v307 = vpack.c.b16 %v292, %v289
        %v308 = vpack.c.b16 %v293, %v290
        %v309 = vpack.c.b16 %v297, %v294
        %v310 = vpack.c.b16 %v298, %v295
        %v311 = vpack.c.b16 %v299, %v296
        %v356 = vunpack.c.l.b16 %v217
        %v357 = vunpack.c.l.b16 %v218
        %v358 = vunpack.c.l.b16 %v219
        %v359 = vunpack.c.l.b16 %v220
        %v360 = vunpack.c.l.b16 %v221
        %v361 = vunpack.c.l.b16 %v222
        %v362 = vunpack.c.l.b16 %v223
        %v363 = vunpack.c.l.b16 %v224
        %v364 = vunpack.c.l.b16 %v225
        %v365 = vunpack.c.l.b16 %v226
        %v366 = vunpack.c.l.b16 %v227
        %v367 = vunpack.c.l.b16 %v228
        %v368 = vunpack.c.l.b16 %v229
        %v369 = vunpack.c.l.b16 %v230
        %v370 = vunpack.c.l.b16 %v231
        %v371 = vunpack.c.l.b16 %v232
        %v372 = vunpack.c.l.b16 %v233
        %v373 = vunpack.c.l.b16 %v234
        %v374 = vunpack.c.l.b16 %v235
        %v375 = vunpack.c.l.b16 %v236
        %v376 = vunpack.c.l.b16 %v237
        %v377 = vunpack.c.l.b16 %v238
        %v378 = vunpack.c.l.b16 %v239
        %v379 = vunpack.c.l.b16 %v240
        %v380 = vunpack.c.l.b16 %v241
        %v381 = vunpack.c.l.b16 %v242
        %v382 = vunpack.c.l.b16 %v243
        %v383 = vunpack.c.l.b16 %v244
        %v384 = vunpack.c.l.b16 %v245
        %v385 = vunpack.c.l.b16 %v246
        %v386 = vunpack.c.l.b16 %v247
        %v387 = vunpack.c.l.b16 %v248
        %v388 = vunpack.c.l.b16 %v249
        %v389 = vunpack.c.l.b16 %v250
        %v390 = vunpack.c.l.b16 %v251
        %v391 = vunpack.c.l.b16 %v252
        %v392 = vpack.c.b16 %v357, %v356
        %v393 = vpack.c.b16 %v359, %v358
        %v394 = vpack.c.b16 %v361, %v360
        %v395 = vpack.c.b16 %v363, %v362
        %v396 = vpack.c.b16 %v365, %v364
        %v397 = vpack.c.b16 %v367, %v366
        %v398 = vpack.c.b16 %v369, %v368
        %v399 = vpack.c.b16 %v371, %v370
        %v400 = vpack.c.b16 %v373, %v372
        %v401 = vpack.c.b16 %v375, %v374
        %v402 = vpack.c.b16 %v377, %v376
        %v403 = vpack.c.b16 %v379, %v378
        %v404 = vpack.c.b16 %v381, %v380
        %v405 = vpack.c.b16 %v383, %v382
        %v406 = vpack.c.b16 %v385, %v384
        %v407 = vpack.c.b16 %v387, %v386
        %v408 = vpack.c.b16 %v389, %v388
        %v409 = vpack.c.b16 %v391, %v390
        %vm428 = vcmask 261120
        %v430 = vsel %vm428, %v302, 0
        %v433 = vsel %vm428, %v305, 0
        %v436 = vsel %vm428, %v308, 0
        %v439 = vsel %vm428, %v311, 0
        %441 = vmatprep.subr.bf16.mxu0 0
        %442 = vmatpush1.bf16.msra.mxu0 %v392
        %443 = vmatprep.subr.bf16.mxu0 0
        %444 = vmatpush1.bf16.msra.mxu0 %v393
        %445 = vmatprep.subr.bf16.mxu0 0
        %446 = vmatpush1.bf16.msra.mxu0 %v394
        %447 = vmatprep.subr.bf16.mxu0 0
        %448 = vmatpush1.bf16.msra.mxu0 %v395
        %449 = vmatprep.subr.bf16.mxu0 0
        %450 = vmatpush1.bf16.msra.mxu0 %v396
        %451 = vmatprep.subr.bf16.mxu0 0
        %452 = vmatpush1.bf16.msra.mxu0 %v397
        %453 = vmatprep.subr.bf16.mxu0 0
        %454 = vmatpush1.bf16.msra.mxu0 %v398
        %455 = vmatprep.subr.bf16.mxu0 0
        %456 = vmatpush1.bf16.msra.mxu0 %v399
        %457 = vmatprep.subr.bf16.mxu0 0
        %458 = vmatpush1.bf16.msra.mxu0 %v400
        %459 = vmatprep.subr.bf16.mxu0 0
        %460 = vmatpush1.bf16.msra.mxu0 %v401
        %461 = vmatprep.subr.bf16.mxu0 0
        %462 = vmatpush1.bf16.msra.mxu0 %v402
        %463 = vmatprep.subr.bf16.mxu0 0
        %464 = vmatpush1.bf16.msra.mxu0 %v403
        %465 = vmatprep.subr.bf16.mxu0 0
        %466 = vmatpush1.bf16.msra.mxu0 %v404
        %467 = vmatprep.subr.bf16.mxu0 0
        %468 = vmatpush1.bf16.msra.mxu0 %v405
        %469 = vmatprep.subr.bf16.mxu0 0
        %470 = vmatpush1.bf16.msra.mxu0 %v406
        %471 = vmatprep.subr.bf16.mxu0 0
        %472 = vmatpush1.bf16.msra.mxu0 %v407
        %473 = vmatprep.mubr.bf16.mxu0 %v301
        %474 = vmatmul.mubr.bf16.gmra.mrb[0].mxu0 %v300
        %v475 = vpop.f32.mrb[0].mxu0
        %v476 = vadd.f32 %v258, %v475
        %v477 = vpop.f32.mrb[0].mxu0
        %v478 = vpop.f32.mrb[0].mxu0
        %v479 = vadd.f32 %v258, %v478
        %v480 = vpop.f32.mrb[0].mxu0
        %481 = vmatprep.mubr.bf16.mxu0 %v304
        %482 = vmatmul.mubr.bf16.gmra.mrb[0].mxu0 %v303
        %v483 = vpop.f32.mrb[0].mxu0
        %v484 = vadd.f32 %v258, %v483
        %v485 = vpop.f32.mrb[0].mxu0
        %v486 = vpop.f32.mrb[0].mxu0
        %v487 = vadd.f32 %v258, %v486
        %v488 = vpop.f32.mrb[0].mxu0
        %489 = vmatprep.mubr.bf16.mxu0 %v307
        %490 = vmatmul.mubr.bf16.gmra.mrb[0].mxu0 %v306
        %v491 = vpop.f32.mrb[0].mxu0
        %v492 = vadd.f32 %v258, %v491
        %v493 = vpop.f32.mrb[0].mxu0
        %v494 = vpop.f32.mrb[0].mxu0
        %v495 = vadd.f32 %v258, %v494
        %v496 = vpop.f32.mrb[0].mxu0
        %497 = vmatprep.mubr.bf16.mxu0 %v310
        %498 = vmatmul.mubr.bf16.gmra.mrb[0].mxu0 %v309
        %v499 = vpop.f32.mrb[0].mxu0
        %v500 = vadd.f32 %v258, %v499
        %v501 = vpop.f32.mrb[0].mxu0
        %v502 = vpop.f32.mrb[0].mxu0
        %v503 = vadd.f32 %v258, %v502
        %v504 = vpop.f32.mrb[0].mxu0
        %505 = vdwg.mxu0
        %506 = vmatprep.subr.bf16.mxu0 0
        %507 = vmatpush1.bf16.msra.mxu0 %v408
        %508 = vmatprep.subr.bf16.mxu0 0
        %509 = vmatpush1.bf16.msra.mxu0 %v409
        %510 = vmatprep.subr.bf16.mxu0 0
        %511 = vmatpush1.bf16.msra.mxu0 0
        %512 = vmatprep.subr.bf16.mxu0 0
        %513 = vmatpush1.bf16.msra.mxu0 0
        %514 = vmatprep.subr.bf16.mxu0 0
        %515 = vmatpush1.bf16.msra.mxu0 0
        %516 = vmatprep.subr.bf16.mxu0 0
        %517 = vmatpush1.bf16.msra.mxu0 0
        %518 = vmatprep.subr.bf16.mxu0 0
        %519 = vmatpush1.bf16.msra.mxu0 0
        %520 = vmatprep.subr.bf16.mxu0 0
        %521 = vmatpush1.bf16.msra.mxu0 0
        %522 = vmatprep.subr.bf16.mxu0 0
        %523 = vmatpush1.bf16.msra.mxu0 0
        %524 = vmatprep.subr.bf16.mxu0 0
        %525 = vmatpush1.bf16.msra.mxu0 0
        %526 = vmatprep.subr.bf16.mxu0 0
        %527 = vmatpush1.bf16.msra.mxu0 0
        %528 = vmatprep.subr.bf16.mxu0 0
        %529 = vmatpush1.bf16.msra.mxu0 0
        %530 = vmatprep.subr.bf16.mxu0 0
        %531 = vmatpush1.bf16.msra.mxu0 0
        %532 = vmatprep.subr.bf16.mxu0 0
        %533 = vmatpush1.bf16.msra.mxu0 0
        %534 = vmatprep.subr.bf16.mxu0 0
        %535 = vmatpush1.bf16.msra.mxu0 0
        %536 = vmatprep.subr.bf16.mxu0 0
        %537 = vmatpush1.bf16.msra.mxu0 0
        %538 = vmatprep.mubr.bf16.mxu0 0
        %539 = vmatmul.mubr.bf16.gmra.mrb[0].mxu0 %v430
        %v540 = vpop.f32.mrb[0].mxu0
        %v541 = vadd.f32 %v476, %v540
        %v542 = vpop.f32.mrb[0].mxu0
        %v543 = vpop.f32.mrb[0].mxu0
        %v544 = vadd.f32 %v479, %v543
        %v545 = vpop.f32.mrb[0].mxu0
        %546 = vmatprep.mubr.bf16.mxu0 0
        %547 = vmatmul.mubr.bf16.gmra.mrb[0].mxu0 %v433
        %v548 = vpop.f32.mrb[0].mxu0
        %v549 = vadd.f32 %v484, %v548
        %v550 = vpop.f32.mrb[0].mxu0
        %v551 = vpop.f32.mrb[0].mxu0
        %v552 = vadd.f32 %v487, %v551
        %v553 = vpop.f32.mrb[0].mxu0
        %554 = vmatprep.mubr.bf16.mxu0 0
        %555 = vmatmul.mubr.bf16.gmra.mrb[0].mxu0 %v436
        %v556 = vpop.f32.mrb[0].mxu0
        %v557 = vadd.f32 %v492, %v556
        %v558 = vpop.f32.mrb[0].mxu0
        %v559 = vpop.f32.mrb[0].mxu0
        %v560 = vadd.f32 %v495, %v559
        %v561 = vpop.f32.mrb[0].mxu0
        %562 = vmatprep.mubr.bf16.mxu0 0
        %563 = vmatmul.mubr.bf16.gmra.mrb[0].mxu0 %v439
        %v564 = vpop.f32.mrb[0].mxu0
        %v565 = vadd.f32 %v500, %v564
        %v566 = vpop.f32.mrb[0].mxu0
        %v567 = vpop.f32.mrb[0].mxu0
        %v568 = vadd.f32 %v503, %v567
        %v569 = vpop.f32.mrb[0].mxu0
        %570 = vdwg.mxu0
        %v571 = vmax.f32 %v541, 0.0
        %v572 = vmax.f32 %v544, 0.0
        %v573 = vmax.f32 %v549, 0.0
        %v574 = vmax.f32 %v552, 0.0
        %v575 = vmax.f32 %v557, 0.0
        %v576 = vmax.f32 %v560, 0.0
        %v577 = vmax.f32 %v565, 0.0
        %v578 = vmax.f32 %v568, 0.0
        %v579 = vpack.c.bf16 %v572, %v571
        %v580 = vpack.c.bf16 %v574, %v573
        %v581 = vpack.c.bf16 %v576, %v575
        %v582 = vpack.c.bf16 %v578, %v577
        %v587 = vunpack.c.l.b16 %v579
        %v588 = vunpack.c.h.b16 %v579
        %v589 = vunpack.c.l.b16 %v580
        %v590 = vunpack.c.h.b16 %v580
        %v591 = vunpack.c.l.b16 %v581
        %v592 = vunpack.c.h.b16 %v581
        %v593 = vunpack.c.l.b16 %v582
        %v594 = vunpack.c.h.b16 %v582
        %v595 = vpack.c.b16 %v587, %v587
        %v596 = vpack.c.b16 %v588, %v588
        %v597 = vpack.c.b16 %v589, %v589
        %v598 = vpack.c.b16 %v590, %v590
        %v599 = vpack.c.b16 %v591, %v591
        %v600 = vpack.c.b16 %v592, %v592
        %v601 = vpack.c.b16 %v593, %v593
        %v602 = vpack.c.b16 %v594, %v594
        %vm611 = vcmask 519168
        %612 = vst.msk [vmem:[%s177] sm:$0xf] %vm611, %v595
        %613 = vst.msk [vmem:[%s177 + $0x4] sm:$0xf] %vm611, %v596
        %614 = vst.msk [vmem:[%s177 + $0x8] sm:$0xf] %vm611, %v597
        %615 = vst.msk [vmem:[%s177 + $0xc] sm:$0xf] %vm611, %v598
        %616 = vst.msk [vmem:[%s177 + $0x10] sm:$0xf] %vm611, %v599
        %617 = vst.msk [vmem:[%s177 + $0x14] sm:$0xf] %vm611, %v600
        %618 = vst.msk [vmem:[%s177 + $0x18] sm:$0xf] %vm611, %v601
        %619 = vst.msk [vmem:[%s177 + $0x1c] sm:$0xf] %vm611, %v602
        %s620 = sand.u32 %s90, 1
        %s621 = sand.u32 %s90, 1
        %s622 = smul.addr %s621, 32
        %s623 = scalar_lea.vmem [#allocation2], %s622
        // Predicated region
        $region33: #{inception_d_forward.7} parent=31 // pred_check
          %p624 = pneg %p100
        $region34: #{inception_d_forward.7} parent=31 // pred_check_branch
          %626 = sbr.rel (%p624) target = $region36
        $region35: #{inception_d_forward.7} parent=31 // pred_region
          %s627 = smul.u32 8, %s14
          %s628 = ssub.s32 13, %s627
          %p629 = scmp.lt.s32.totalorder %s628, 8
          %s630 = scalar_select %p629, %s628, 8
          %s631 = smul.u32 64, %s630
          %p632 = scmp.ne.s32.totalorder 0, %s631
          %s633 = smul.addr %s627, 4
          %s634 = scalar_lea.vmem %s3, %s633
          // Predicated region
          $region37: #{inception_d_forward.7} parent=35 // pred_check
            %p635 = pneg %p632
          $region38: #{inception_d_forward.7} parent=35 // pred_check_branch
            %637 = sbr.rel (%p635) target = $region40
          $region39: #{inception_d_forward.7} parent=35 // pred_region
            // Predicated region
            $region41: #{inception_d_forward.7} parent=39 // pred_check
              _
            $region42: #{inception_d_forward.7} parent=39 // pred_check_branch
              %639 = sbr.rel target = $region44
            $region43: #{inception_d_forward.7} parent=39 // pred_region
              // Predicated region
              $region63: #{inception_d_forward.7} parent=43 // pred_check
                _
              $region64: #{inception_d_forward.7} parent=43 // pred_check_branch
                %702 = sbr.rel (0) target = $region66
              $region65: #{inception_d_forward.7} parent=43 // pred_region
                %s704 = sshrl.u32 %s630, 3
                // While loop
                $region67: #{inception_d_forward.7} parent=65 // loop_pre_header
                  _
                $region68: #{inception_d_forward.7} parent=65 // loop_header
                  %s706 = sphi 0, %s708
                  %p707 = scmp.ge.s32.totalorder %s706, %s704
                  %s711 = sphi 0, %s732
                  %s712 = sphi %s623, %s735
                  %s713 = sphi %s634, %s736
                $region69: #{inception_d_forward.7} parent=65 // loop_header_branch
                  %710 = sbr.rel (%p707) target = $region73
                $region70: #{inception_d_forward.7} parent=65 // loop_body
                  %v714 = vld [vmem:[%s712] sm:$0xf]
                  %715 = vst [vmem:[%s713] sm:$0xf] %v714
                  %v716 = vld [vmem:[%s712 + $0x4] sm:$0xf]
                  %717 = vst [vmem:[%s713 + $0x4] sm:$0xf] %v716
                  %v718 = vld [vmem:[%s712 + $0x8] sm:$0xf]
                  %719 = vst [vmem:[%s713 + $0x8] sm:$0xf] %v718
                  %v720 = vld [vmem:[%s712 + $0xc] sm:$0xf]
                  %721 = vst [vmem:[%s713 + $0xc] sm:$0xf] %v720
                  %v722 = vld [vmem:[%s712 + $0x10] sm:$0xf]
                  %723 = vst [vmem:[%s713 + $0x10] sm:$0xf] %v722
                  %v724 = vld [vmem:[%s712 + $0x14] sm:$0xf]
                  %725 = vst [vmem:[%s713 + $0x14] sm:$0xf] %v724
                  %v726 = vld [vmem:[%s712 + $0x18] sm:$0xf]
                  %727 = vst [vmem:[%s713 + $0x18] sm:$0xf] %v726
                  %v728 = vld [vmem:[%s712 + $0x1c] sm:$0xf]
                  %729 = vst [vmem:[%s713 + $0x1c] sm:$0xf] %v728
                  %s730 = sadd.s32 1, %s711
                  %p731 = scmp.ge.s32.totalorder %s730, %s704
                  %s732 = scalar_select %p731, 0, %s730
                  %s733 = smul.u32 %s732, 32
                  %s734 = smul.u32 %s732, 32
                  %s735 = scalar_lea.vmem %s623, %s733 [#allocation2]
                  %s736 = scalar_lea.vmem %s634, %s734
                $region71: #{inception_d_forward.7} parent=65 // loop_footer
                  %s708 = sadd.s32 %s706, 1
                $region72: #{inception_d_forward.7} parent=65 // loop_footer_branch
                  %705 = sbr.rel target = $region68
                $region73: #{inception_d_forward.7} parent=65 // loop_exit
                  _
                %s737 = sshrl.u32 %s630, 3
                %s738 = sand.u32 %s630, 7
                %s739 = smul.u32 %s737, 8
                %s740 = smul.u32 4, %s739
                %s741 = scalar_lea.vmem %s623, %s740 [#allocation2]
                %s742 = smul.u32 4, %s739
                %s743 = scalar_lea.vmem %s634, %s742
                // While loop
                $region74: #{inception_d_forward.7} parent=65 // loop_pre_header
                  _
                $region75: #{inception_d_forward.7} parent=65 // loop_header
                  %s745 = sphi 0, %s747
                  %p746 = scmp.ge.s32.totalorder %s745, %s738
                  %s750 = sphi 0, %s757
                  %s751 = sphi %s741, %s760
                  %s752 = sphi %s743, %s761
                $region76: #{inception_d_forward.7} parent=65 // loop_header_branch
                  %749 = sbr.rel (%p746) target = $region80
                $region77: #{inception_d_forward.7} parent=65 // loop_body
                  %v753 = vld [vmem:[%s751] sm:$0xf]
                  %754 = vst [vmem:[%s752] sm:$0xf] %v753
                  %s755 = sadd.s32 1, %s750
                  %p756 = scmp.ge.s32.totalorder %s755, %s738
                  %s757 = scalar_select %p756, 0, %s755
                  %s758 = smul.u32 %s757, 4
                  %s759 = smul.u32 %s757, 4
                  %s760 = scalar_lea.vmem %s741, %s758 [#allocation2]
                  %s761 = scalar_lea.vmem %s743, %s759
                $region78: #{inception_d_forward.7} parent=65 // loop_footer
                  %s747 = sadd.s32 %s745, 1
                $region79: #{inception_d_forward.7} parent=65 // loop_footer_branch
                  %744 = sbr.rel target = $region75
                $region80: #{inception_d_forward.7} parent=65 // loop_exit
                  _
              $region66: #{inception_d_forward.7} parent=43 // pred_fallthru
                _
            $region44: #{inception_d_forward.7} parent=39 // pred_fallthru
              _
            // Predicated region
            $region45: #{inception_d_forward.7} parent=39 // pred_check
              _
            $region46: #{inception_d_forward.7} parent=39 // pred_check_branch
              %641 = sbr.rel (0) target = $region48
            $region47: #{inception_d_forward.7} parent=39 // pred_region
              %s643 = sshrl.u32 %s630, 3
              // While loop
              $region49: #{inception_d_forward.7} parent=47 // loop_pre_header
                _
              $region50: #{inception_d_forward.7} parent=47 // loop_header
                %s645 = sphi 0, %s647
                %p646 = scmp.ge.s32.totalorder %s645, %s643
                %s650 = sphi 0, %s671
                %s651 = sphi %s623, %s674
                %s652 = sphi %s634, %s675
              $region51: #{inception_d_forward.7} parent=47 // loop_header_branch
                %649 = sbr.rel (%p646) target = $region55
              $region52: #{inception_d_forward.7} parent=47 // loop_body
                %v653 = vld [vmem:[%s651] sm:$0xf]
                %654 = vst [vmem:[%s652] sm:$0xf] %v653
                %v655 = vld [vmem:[%s651 + $0x4] sm:$0xf]
                %656 = vst [vmem:[%s652 + $0x4] sm:$0xf] %v655
                %v657 = vld [vmem:[%s651 + $0x8] sm:$0xf]
                %658 = vst [vmem:[%s652 + $0x8] sm:$0xf] %v657
                %v659 = vld [vmem:[%s651 + $0xc] sm:$0xf]
                %660 = vst [vmem:[%s652 + $0xc] sm:$0xf] %v659
                %v661 = vld [vmem:[%s651 + $0x10] sm:$0xf]
                %662 = vst [vmem:[%s652 + $0x10] sm:$0xf] %v661
                %v663 = vld [vmem:[%s651 + $0x14] sm:$0xf]
                %664 = vst [vmem:[%s652 + $0x14] sm:$0xf] %v663
                %v665 = vld [vmem:[%s651 + $0x18] sm:$0xf]
                %666 = vst [vmem:[%s652 + $0x18] sm:$0xf] %v665
                %v667 = vld [vmem:[%s651 + $0x1c] sm:$0xf]
                %668 = vst [vmem:[%s652 + $0x1c] sm:$0xf] %v667
                %s669 = sadd.s32 1, %s650
                %p670 = scmp.ge.s32.totalorder %s669, %s643
                %s671 = scalar_select %p670, 0, %s669
                %s672 = smul.u32 %s671, 32
                %s673 = smul.u32 %s671, 32
                %s674 = scalar_lea.vmem %s623, %s672 [#allocation2]
                %s675 = scalar_lea.vmem %s634, %s673
              $region53: #{inception_d_forward.7} parent=47 // loop_footer
                %s647 = sadd.s32 %s645, 1
              $region54: #{inception_d_forward.7} parent=47 // loop_footer_branch
                %644 = sbr.rel target = $region50
              $region55: #{inception_d_forward.7} parent=47 // loop_exit
                _
              %s676 = sshrl.u32 %s630, 3
              %s677 = sand.u32 %s630, 7
              %s678 = smul.u32 %s676, 8
              %s679 = smul.u32 4, %s678
              %s680 = scalar_lea.vmem %s623, %s679 [#allocation2]
              %s681 = smul.u32 4, %s678
              %s682 = scalar_lea.vmem %s634, %s681
              // While loop
              $region56: #{inception_d_forward.7} parent=47 // loop_pre_header
                _
              $region57: #{inception_d_forward.7} parent=47 // loop_header
                %s684 = sphi 0, %s686
                %p685 = scmp.ge.s32.totalorder %s684, %s677
                %s689 = sphi 0, %s696
                %s690 = sphi %s680, %s699
                %s691 = sphi %s682, %s700
              $region58: #{inception_d_forward.7} parent=47 // loop_header_branch
                %688 = sbr.rel (%p685) target = $region62
              $region59: #{inception_d_forward.7} parent=47 // loop_body
                %v692 = vld [vmem:[%s690] sm:$0xf]
                %693 = vst [vmem:[%s691] sm:$0xf] %v692
                %s694 = sadd.s32 1, %s689
                %p695 = scmp.ge.s32.totalorder %s694, %s677
                %s696 = scalar_select %p695, 0, %s694
                %s697 = smul.u32 %s696, 4
                %s698 = smul.u32 %s696, 4
                %s699 = scalar_lea.vmem %s680, %s697 [#allocation2]
                %s700 = scalar_lea.vmem %s682, %s698
              $region60: #{inception_d_forward.7} parent=47 // loop_footer
                %s686 = sadd.s32 %s684, 1
              $region61: #{inception_d_forward.7} parent=47 // loop_footer_branch
                %683 = sbr.rel target = $region57
              $region62: #{inception_d_forward.7} parent=47 // loop_exit
                _
            $region48: #{inception_d_forward.7} parent=39 // pred_fallthru
              _
          $region40: #{inception_d_forward.7} parent=35 // pred_fallthru
            _
          %762 = vnop
        $region36: #{inception_d_forward.7} parent=31 // pred_fallthru
          _
      $region32: #{inception_d_forward.7} parent=5 // pred_fallthru
        _
      %p763 = scmp.le.s32.totalorder 2, %s9
      // Predicated region
      $region81: #{inception_d_forward.7} parent=5 // pred_check
        %p764 = pneg %p763
      $region82: #{inception_d_forward.7} parent=5 // pred_check_branch
        %766 = sbr.rel (%p764) target = $region84
      $region83: #{inception_d_forward.7} parent=5 // pred_region
        %s767 = ssub.s32 %s9, 2
        // Predicated region
        $region85: #{inception_d_forward.7} parent=83 // pred_check
          %p768 = pneg %p106
        $region86: #{inception_d_forward.7} parent=83 // pred_check_branch
          %770 = sbr.rel (%p768) target = $region88
        $region87: #{inception_d_forward.7} parent=83 // pred_region
          %s771 = sand.u32 %s91, 1
          %s772 = sand.u32 %s91, 1
          %s773 = smul.addr %s772, 32
          %s774 = scalar_lea.vmem [#allocation2], %s773
        $region88: #{inception_d_forward.7} parent=83 // pred_fallthru
          _
      $region84: #{inception_d_forward.7} parent=5 // pred_fallthru
        _
    $region6: #{inception_d_forward.7} parent=1 // loop_footer
      %s13 = sadd.s32 1, %s9
    $region7: #{inception_d_forward.7} parent=1 // loop_footer_branch
      %8 = sbr.rel target = $region3
    $region8: #{inception_d_forward.7} parent=1 // loop_exit
      _

</llo_original>
